<compile_context>
chip_gen: v7x
topology: tpu7x:2x2x1
jax: 0.10.0
libtpu: 0.0.40
codegen_flags: <defaults>
</compile_context>

<pallas_src>
import functools

import jax
import jax.numpy as jnp
from jax.experimental import pallas as pl
from jax.experimental.pallas import tpu as pltpu


# ----------------------------- in-kernel helpers -----------------------------
def _layernorm(x, g, b, eps=1e-5):
    # One-pass statistics (var = E[x^2] - mu^2): one fewer XLU reduction and one fewer
    # (N, D) VALU pass; rsqrt goes to the EUP.  Clamp var at 0 to guard the rare
    # catastrophic-cancellation case (|mean| >> std).
    mu = jnp.mean(x, axis=-1, keepdims=True)
    ms = jnp.mean(x * x, axis=-1, keepdims=True)
    var = jnp.maximum(ms - mu * mu, 0.0)
    return (x - mu) * jax.lax.rsqrt(var + eps) * g + b


def _mha(q, k, v, num_heads, head_dim):
    # q: (Nq, D), k/v: (Nk, D) -- f32 accumulator outputs of the projections.
    # q already carries the sqrt(head_dim) softmax scale (folded into its weight).
    nq = q.shape[0]
    nk = k.shape[0]
    d_model = num_heads * head_dim

    # Head-batched (H, N, hd) layout: a single batched bf16 MXU contraction for all
    # heads.  Relayouts are done in f32 then cast (proven lowering path).
    # TODO(synk): remove the head relayouts entirely (dot_general batch dim in place /
    # head-major scratch slab, or pltpu.einshape) once that batched-dot layout path is
    # verified on Mosaic; they are a secondary cost vs. the projections/FFN.
    qh = q.reshape(nq, num_heads, head_dim).transpose(1, 0, 2).astype(jnp.bfloat16)
    kh = k.reshape(nk, num_heads, head_dim).transpose(1, 0, 2).astype(jnp.bfloat16)
    vh = v.reshape(nk, num_heads, head_dim).transpose(1, 0, 2).astype(jnp.bfloat16)

    s = jnp.einsum("hqd,hkd->hqk", qh, kh,
                   preferred_element_type=jnp.float32)          # (H, Nq, Nk) f32
    s = s - jnp.max(s, axis=-1, keepdims=True)
    p = jnp.exp(s)                                              # f32 exp on the EUP
    denom = jnp.sum(p, axis=-1, keepdims=True)                  # (H, Nq, 1)
    # EUP approximate reciprocal + one Newton refinement on the tiny (H, Nq, 1) tensor.
    r = pl.reciprocal(denom, approx=True)
    r = r * (2.0 - denom * r)
    # bf16 probs into the MXU; apply the softmax normalisation to the small
    # (H, Nq, hd) output instead of the big (H, Nq, Nk) probability matrix.
    out = jnp.einsum("hqk,hkd->hqd", p.astype(jnp.bfloat16), vh,
                     preferred_element_type=jnp.float32)        # (H, Nq, hd) f32
    out = out * r
    return out.transpose(1, 0, 2).reshape(nq, d_model)


# --------------------------------- kernel ------------------------------------
def decoder_layer_kernel(num_heads,
                         tgt_ref, mem_ref, pos_ref, qe_ref,
                         wqk_s_ref, wv_s_ref,
                         wq_c_ref, wk_c_ref, wv_c_ref,
                         g1_ref, be1_ref, g2_ref, be2_ref, g3_ref, be3_ref,
                         w1_ref, b1_ref, w2_ref, b2_ref,
                         out_ref):
    d_model = tgt_ref.shape[-1]
    head_dim = d_model // num_heads

    tgt = tgt_ref[0]   # (Nq, D) f32
    mem = mem_ref[0]   # (Nk, D) f32
    pos = pos_ref[0]   # (Nk, D) f32
    qe = qe_ref[0]     # (Nq, D) f32

    def lin(x, w_ref):
        # Weights pre-transposed to (in, out) and bf16; f32 accumulation on the MXU.
        return jnp.dot(x.astype(jnp.bfloat16), w_ref[...],
                       preferred_element_type=jnp.float32)

    # ----- self attention (dropout p=0.0 -> identity) -----
    tq = tgt + qe                               # hoisted: shared by q and k
    qk = lin(tq, wqk_s_ref)                     # fused q/k projection -> (Nq, 2D)
    q = qk[:, :d_model]
    k = qk[:, d_model:]
    v = lin(tgt, wv_s_ref)
    attn_out = _mha(q, k, v, num_heads, head_dim)
    tgt1 = _layernorm(tgt + attn_out, g1_ref[...], be1_ref[...])

    # ----- cross attention -----
    # TODO(synk): for very large Nk (H*Nq*Nk*4 B scores + Nk*D K/V beyond ~20-30 MiB,
    # v7x-risky), block this over Nk with an online softmax (inner pltpu.emit_pipeline
    # over memory/pos tiles, or an extra grid axis + accumulator + pl.when finalize).
    q = lin(tgt1 + qe, wq_c_ref)
    k = lin(mem + pos, wk_c_ref)
    v = lin(mem, wv_c_ref)
    attn_out = _mha(q, k, v, num_heads, head_dim)
    tgt2 = _layernorm(tgt1 + attn_out, g2_ref[...], be2_ref[...])

    # ----- feed-forward -----
    h = jnp.maximum(lin(tgt2, w1_ref) + b1_ref[...], 0.0)
    ff = lin(h, w2_ref) + b2_ref[...]
    tgt3 = _layernorm(tgt2 + ff, g3_ref[...], be3_ref[...])

    out_ref[0] = tgt3.astype(out_ref.dtype)


# -------------------------------- wrapper -------------------------------------
def transformer_decoder_layer(tgt, memory, pos_embed, query_embed, params, num_heads):
    B, Nq, D = tgt.shape
    _, Nk, _ = memory.shape
    FF = params["w1"].shape[0]
    head_dim = D // num_heads
    scale = head_dim ** 0.5            # == `/ head_dim ** (-0.5)` in the module
    bf16 = jnp.bfloat16

    # Host-side (one-time) weight prep:
    #  * transpose all weights to (in, out)          -> no in-kernel transposes,
    #  * cast matmul weights to bf16                 -> bf16-native MXU, half the bytes,
    #  * fold the softmax scale into q projections   -> no (Nq, Nk) scaling pass,
    #  * fuse self-attn q/k weights into (D, 2D)     -> one projection matmul.
    wq_s = (params["wq_self"] * scale).T.astype(bf16)
    wk_s = params["wk_self"].T.astype(bf16)
    wqk_self = jnp.concatenate([wq_s, wk_s], axis=1)              # (D, 2D)
    wv_self = params["wv_self"].T.astype(bf16)                    # (D, D)
    wq_cross = (params["wq_cross"] * scale).T.astype(bf16)
    wk_cross = params["wk_cross"].T.astype(bf16)
    wv_cross = params["wv_cross"].T.astype(bf16)
    w1 = params["w1"].T.astype(bf16)                              # (D, FF)
    w2 = params["w2"].T.astype(bf16)                              # (FF, D)

    def vec(p):  # 1-D f32 params -> (1, D)/(1, FF) so they live happily in VMEM
        return p.reshape(1, -1)

    def const(shape):
        # Constant across the batch grid: single-buffer instead of the default
        # double-buffer (halves the weight-side VMEM footprint; key on v7x 64 MiB).
        return pl.BlockSpec(shape, lambda b: (0, 0), pipeline_mode=pl.Buffered(1))

    def batched(n):
        return pl.BlockSpec((1, n, D), lambda b: (b, 0, 0))

    in_specs = [
        batched(Nq), batched(Nk), batched(Nk), batched(Nq),
        const((D, 2 * D)), const((D, D)),
        const((D, D)), const((D, D)), const((D, D)),
        const((1, D)), const((1, D)), const((1, D)),
        const((1, D)), const((1, D)), const((1, D)),
        const((D, FF)), const((1, FF)), const((FF, D)), const((1, D)),
    ]

    # VMEM budget: single-buffered bf16 weights + double-buffered f32 per-batch I/O
    # + in-kernel f32 intermediates, capped generation-aware via the queried VMEM
    # capacity (128 MiB on v5e/v6e, 64 MiB on v7x) minus headroom for Mosaic scratch.
    weight_bytes = 2 * (6 * D * D + 2 * D * FF) + 4 * (7 * D + FF)
    io_bytes = 4 * (2 * Nq * D + 2 * Nk * D + Nq * D)
    act_bytes = 4 * (6 * Nq * D + 2 * Nk * D
                     + 2 * num_heads * Nq * max(Nq, Nk) + Nq * FF)
    try:
        vmem_cap = int(pltpu.get_tpu_info().vmem_capacity_bytes)
    except Exception:
        vmem_cap = 64 * 2 ** 20                    # v7x-safe fallback
    vmem_ceiling = max(16 * 2 ** 20, (3 * vmem_cap) // 4)
    vmem_limit = int(min(vmem_ceiling,
                         max(16 * 2 ** 20,
                             weight_bytes + 2 * io_bytes + act_bytes + 4 * 2 ** 20)))

    flops = int(2 * B * (
        3 * Nq * D * D                  # self q/k (fused) + v projections
        + Nq * D * D + 2 * Nk * D * D   # cross projections
        + 2 * num_heads * Nq * Nq * head_dim   # self attn qk^T + attn@v
        + 2 * num_heads * Nq * Nk * head_dim   # cross attn
        + 2 * Nq * D * FF               # feed-forward
    ))
    transcendentals = int(B * (num_heads * Nq * (Nq + Nk) + 3 * Nq
                               + 2 * num_heads * Nq))
    bytes_accessed = int(4 * B * (2 * Nq * D + 2 * Nk * D + Nq * D) + weight_bytes)

    # NOTE(v7x): grid=(B,) is sharded across the two TensorCores via "parallel";
    # if B == 1 on v7x, split Nq into two query tiles to keep both cores busy.
    return pl.pallas_call(
        functools.partial(decoder_layer_kernel, num_heads),
        out_shape=jax.ShapeDtypeStruct((B, Nq, D), tgt.dtype),
        grid=(B,),
        in_specs=in_specs,
        out_specs=batched(Nq),
        compiler_params=pltpu.CompilerParams(
            dimension_semantics=("parallel",),
            vmem_limit_bytes=vmem_limit),
        cost_estimate=pl.CostEstimate(
            flops=flops, transcendentals=transcendentals,
            bytes_accessed=bytes_accessed),
    )(tgt, memory, pos_embed, query_embed,
      wqk_self, wv_self,
      wq_cross, wk_cross, wv_cross,
      vec(params["ln1_g"]), vec(params["ln1_b"]),
      vec(params["ln2_g"]), vec(params["ln2_b"]),
      vec(params["ln3_g"]), vec(params["ln3_b"]),
      w1, vec(params["b1"]), w2, vec(params["b2"]))


# ----------------------- pure-JAX reference (for checking) --------------------
def _reference(tgt, memory, pos_embed, query_embed, p, num_heads):
    D = tgt.shape[-1]
    hd = D // num_heads

    def lin(x, w):
        return jnp.einsum("bnd,od->bno", x, w)

    def ln(x, g, b, eps=1e-5):
        mu = x.mean(-1, keepdims=True)
        var = ((x - mu) ** 2).mean(-1, keepdims=True)
        return (x - mu) / jnp.sqrt(var + eps) * g + b

    def mha(q, k, v):
        B, Nq, _ = q.shape
        Nk = k.shape[1]
        qh = q.reshape(B, Nq, num_heads, hd).transpose(0, 2, 1, 3)
        kh = k.reshape(B, Nk, num_heads, hd).transpose(0, 2, 1, 3)
        vh = v.reshape(B, Nk, num_heads, hd).transpose(0, 2, 1, 3)
        attn = jnp.einsum("bhqd,bhkd->bhqk", qh, kh) / (hd ** (-0.5))
        attn = jax.nn.softmax(attn, axis=-1)
        o = jnp.einsum("bhqk,bhkd->bhqd", attn, vh)
        return o.transpose(0, 2, 1, 3).reshape(B, Nq, D)

    out = mha(lin(tgt + query_embed, p["wq_self"]),
              lin(tgt + query_embed, p["wk_self"]),
              lin(tgt, p["wv_self"]))
    tgt1 = ln(tgt + out, p["ln1_g"], p["ln1_b"])
    out = mha(lin(tgt1 + query_embed, p["wq_cross"]),
              lin(memory + pos_embed, p["wk_cross"]),
              lin(memory, p["wv_cross"]))
    tgt2 = ln(tgt1 + out, p["ln2_g"], p["ln2_b"])
    h = jax.nn.relu(jnp.einsum("bnd,fd->bnf", tgt2, p["w1"]) + p["b1"])
    ff = jnp.einsum("bnf,df->bnd", h, p["w2"]) + p["b2"]
    return ln(tgt2 + ff, p["ln3_g"], p["ln3_b"])


# ---------------------------------- main --------------------------------------
if __name__ == "__main__":
    # Lane/sublane-aligned small shapes: D, FF multiples of 128; Nq, Nk multiples of 8
    # (so the fused qk split lands on a vreg boundary and the output store is lane-dense).
    B, Nq, Nk, D, H, FF = 2, 16, 32, 128, 4, 256

    key = jax.random.PRNGKey(0)
    keys = jax.random.split(key, 20)

    tgt = jax.random.normal(keys[0], (B, Nq, D), jnp.float32)
    memory = jax.random.normal(keys[1], (B, Nk, D), jnp.float32)
    pos_embed = jax.random.normal(keys[2], (B, Nk, D), jnp.float32) * 0.1
    query_embed = jax.random.normal(keys[3], (B, Nq, D), jnp.float32) * 0.1

    def w(i, shape, scale=0.02):
        return jax.random.normal(keys[i], shape, jnp.float32) * scale

    params = {
        "wq_self": w(4, (D, D)), "wk_self": w(5, (D, D)), "wv_self": w(6, (D, D)),
        "wq_cross": w(7, (D, D)), "wk_cross": w(8, (D, D)), "wv_cross": w(9, (D, D)),
        "ln1_g": 1.0 + w(10, (D,), 0.05), "ln1_b": w(11, (D,), 0.05),
        "ln2_g": 1.0 + w(12, (D,), 0.05), "ln2_b": w(13, (D,), 0.05),
        "ln3_g": 1.0 + w(14, (D,), 0.05), "ln3_b": w(15, (D,), 0.05),
        "w1": w(16, (FF, D)), "b1": w(17, (FF,), 0.05),
        "w2": w(18, (D, FF)), "b2": w(19, (D,), 0.05),
    }

    out = transformer_decoder_layer(tgt, memory, pos_embed, query_embed, params, H)
    out = jax.block_until_ready(out)

    ref = _reference(tgt, memory, pos_embed, query_embed, params, H)
    assert out.shape == (B, Nq, D)
    # Tolerance relaxed vs the pure-f32 reference because the kernel now runs every
    # matmul with bf16 operands (f32 accumulation), plus the Newton-refined EUP
    # reciprocal and one-pass LayerNorm statistics.
    assert jnp.allclose(out, ref, atol=5e-2, rtol=5e-2), "mismatch vs reference"

    print("KERNEL_OK")
</pallas_src>

<mosaic_0001>
module attributes {stable_mosaic.version = 11 : i64} {
  func.func @decoder_layer_kernel(%arg0: i32, %arg1: memref<1x16x128xf32, #tpu.memory_space<vmem>>, %arg2: memref<1x32x128xf32, #tpu.memory_space<vmem>>, %arg3: memref<1x32x128xf32, #tpu.memory_space<vmem>>, %arg4: memref<1x16x128xf32, #tpu.memory_space<vmem>>, %arg5: memref<128x256xbf16, #tpu.memory_space<vmem>>, %arg6: memref<128x128xbf16, #tpu.memory_space<vmem>>, %arg7: memref<128x128xbf16, #tpu.memory_space<vmem>>, %arg8: memref<128x128xbf16, #tpu.memory_space<vmem>>, %arg9: memref<128x128xbf16, #tpu.memory_space<vmem>>, %arg10: memref<1x128xf32, #tpu.memory_space<vmem>>, %arg11: memref<1x128xf32, #tpu.memory_space<vmem>>, %arg12: memref<1x128xf32, #tpu.memory_space<vmem>>, %arg13: memref<1x128xf32, #tpu.memory_space<vmem>>, %arg14: memref<1x128xf32, #tpu.memory_space<vmem>>, %arg15: memref<1x128xf32, #tpu.memory_space<vmem>>, %arg16: memref<128x256xbf16, #tpu.memory_space<vmem>>, %arg17: memref<1x256xf32, #tpu.memory_space<vmem>>, %arg18: memref<256x128xbf16, #tpu.memory_space<vmem>>, %arg19: memref<1x128xf32, #tpu.memory_space<vmem>>, %arg20: memref<1x16x128xf32, #tpu.memory_space<vmem>>) attributes {dimension_semantics = [#tpu.dimension_semantics<parallel>], iteration_bounds = array<i64: 2>, scalar_prefetch = 0 : i64, scratch_operands = 0 : i64, tpu.core_type = #tpu.core_type<tc>, window_params = [{transform_indices = @transform_0, window_bounds = array<i64: 1, 16, 128>}, {transform_indices = @transform_1, window_bounds = array<i64: 1, 32, 128>}, {transform_indices = @transform_2, window_bounds = array<i64: 1, 32, 128>}, {transform_indices = @transform_3, window_bounds = array<i64: 1, 16, 128>}, {pipeline_mode = #tpu.pipeline_mode<synchronous>, transform_indices = @transform_4, window_bounds = array<i64: 128, 256>}, {pipeline_mode = #tpu.pipeline_mode<synchronous>, transform_indices = @transform_5, window_bounds = array<i64: 128, 128>}, {pipeline_mode = #tpu.pipeline_mode<synchronous>, transform_indices = @transform_6, window_bounds = array<i64: 128, 128>}, {pipeline_mode = #tpu.pipeline_mode<synchronous>, transform_indices = @transform_7, window_bounds = array<i64: 128, 128>}, {pipeline_mode = #tpu.pipeline_mode<synchronous>, transform_indices = @transform_8, window_bounds = array<i64: 128, 128>}, {pipeline_mode = #tpu.pipeline_mode<synchronous>, transform_indices = @transform_9, window_bounds = array<i64: 1, 128>}, {pipeline_mode = #tpu.pipeline_mode<synchronous>, transform_indices = @transform_10, window_bounds = array<i64: 1, 128>}, {pipeline_mode = #tpu.pipeline_mode<synchronous>, transform_indices = @transform_11, window_bounds = array<i64: 1, 128>}, {pipeline_mode = #tpu.pipeline_mode<synchronous>, transform_indices = @transform_12, window_bounds = array<i64: 1, 128>}, {pipeline_mode = #tpu.pipeline_mode<synchronous>, transform_indices = @transform_13, window_bounds = array<i64: 1, 128>}, {pipeline_mode = #tpu.pipeline_mode<synchronous>, transform_indices = @transform_14, window_bounds = array<i64: 1, 128>}, {pipeline_mode = #tpu.pipeline_mode<synchronous>, transform_indices = @transform_15, window_bounds = array<i64: 128, 256>}, {pipeline_mode = #tpu.pipeline_mode<synchronous>, transform_indices = @transform_16, window_bounds = array<i64: 1, 256>}, {pipeline_mode = #tpu.pipeline_mode<synchronous>, transform_indices = @transform_17, window_bounds = array<i64: 256, 128>}, {pipeline_mode = #tpu.pipeline_mode<synchronous>, transform_indices = @transform_18, window_bounds = array<i64: 1, 128>}, {transform_indices = @transform_19, window_bounds = array<i64: 1, 16, 128>}]} {
    %c0 = arith.constant 0 : index
    %c0_0 = arith.constant 0 : index
    %c0_1 = arith.constant 0 : index
    %0 = vector.load %arg1[%c0, %c0_0, %c0_1] : memref<1x16x128xf32, #tpu.memory_space<vmem>>, vector<1x16x128xf32>
    %1 = vector.shape_cast %0 : vector<1x16x128xf32> to vector<16x128xf32>
    %c0_2 = arith.constant 0 : index
    %c0_3 = arith.constant 0 : index
    %c0_4 = arith.constant 0 : index
    %2 = vector.load %arg2[%c0_2, %c0_3, %c0_4] : memref<1x32x128xf32, #tpu.memory_space<vmem>>, vector<1x32x128xf32>
    %3 = vector.shape_cast %2 : vector<1x32x128xf32> to vector<32x128xf32>
    %c0_5 = arith.constant 0 : index
    %c0_6 = arith.constant 0 : index
    %c0_7 = arith.constant 0 : index
    %4 = vector.load %arg3[%c0_5, %c0_6, %c0_7] : memref<1x32x128xf32, #tpu.memory_space<vmem>>, vector<1x32x128xf32>
    %5 = vector.shape_cast %4 : vector<1x32x128xf32> to vector<32x128xf32>
    %c0_8 = arith.constant 0 : index
    %c0_9 = arith.constant 0 : index
    %c0_10 = arith.constant 0 : index
    %6 = vector.load %arg4[%c0_8, %c0_9, %c0_10] : memref<1x16x128xf32, #tpu.memory_space<vmem>>, vector<1x16x128xf32>
    %7 = vector.shape_cast %6 : vector<1x16x128xf32> to vector<16x128xf32>
    %8 = arith.addf %1, %7 : vector<16x128xf32>
    %9 = arith.truncf %8 : vector<16x128xf32> to vector<16x128xbf16>
    %c0_11 = arith.constant 0 : index
    %c0_12 = arith.constant 0 : index
    %10 = vector.load %arg5[%c0_11, %c0_12] : memref<128x256xbf16, #tpu.memory_space<vmem>>, vector<128x256xbf16>
    %cst = arith.constant dense<0.000000e+00> : vector<16x256xf32>
    %11 = tpu.matmul %9, %10, %cst {dimension_numbers = #tpu.dot_dimension_numbers<[1], [0], [0], [1], [0, 0, 1, 1], [], []>} : vector<16x128xbf16>, vector<128x256xbf16>, vector<16x256xf32> -> vector<16x256xf32>
    %12 = vector.extract_strided_slice %11 {offsets = [0, 0], sizes = [16, 128], strides = [1, 1]} : vector<16x256xf32> to vector<16x128xf32>
    %13 = vector.extract_strided_slice %11 {offsets = [0, 128], sizes = [16, 128], strides = [1, 1]} : vector<16x256xf32> to vector<16x128xf32>
    %14 = arith.truncf %1 : vector<16x128xf32> to vector<16x128xbf16>
    %c0_13 = arith.constant 0 : index
    %c0_14 = arith.constant 0 : index
    %15 = vector.load %arg6[%c0_13, %c0_14] : memref<128x128xbf16, #tpu.memory_space<vmem>>, vector<128x128xbf16>
    %cst_15 = arith.constant dense<0.000000e+00> : vector<16x128xf32>
    %16 = tpu.matmul %14, %15, %cst_15 {dimension_numbers = #tpu.dot_dimension_numbers<[1], [0], [0], [1], [0, 0, 1, 1], [], []>} : vector<16x128xbf16>, vector<128x128xbf16>, vector<16x128xf32> -> vector<16x128xf32>
    %17 = vector.shape_cast %12 : vector<16x128xf32> to vector<16x4x32xf32>
    %18 = tpu.transpose %17, [1, 0, 2] : vector<16x4x32xf32> -> vector<4x16x32xf32>
    %19 = arith.truncf %18 : vector<4x16x32xf32> to vector<4x16x32xbf16>
    %20 = vector.shape_cast %13 : vector<16x128xf32> to vector<16x4x32xf32>
    %21 = tpu.transpose %20, [1, 0, 2] : vector<16x4x32xf32> -> vector<4x16x32xf32>
    %22 = arith.truncf %21 : vector<4x16x32xf32> to vector<4x16x32xbf16>
    %23 = vector.shape_cast %16 : vector<16x128xf32> to vector<16x4x32xf32>
    %24 = tpu.transpose %23, [1, 0, 2] : vector<16x4x32xf32> -> vector<4x16x32xf32>
    %25 = arith.truncf %24 : vector<4x16x32xf32> to vector<4x16x32xbf16>
    "tpu.trace_start"() <{level = 10 : i32, message = "hqd,hkd->hqk"}> : () -> ()
    %cst_16 = arith.constant dense<0.000000e+00> : vector<4x16x16xf32>
    %26 = tpu.matmul %19, %22, %cst_16 {dimension_numbers = #tpu.dot_dimension_numbers<[2], [2], [1], [1], [0, 0, 0, 1, 1, 1], [0], [0]>} : vector<4x16x32xbf16>, vector<4x16x32xbf16>, vector<4x16x16xf32> -> vector<4x16x16xf32>
    "tpu.trace_stop"() : () -> ()
    %cst_17 = arith.constant dense<0xFF800000> : vector<4x16xf32>
    %27 = vector.multi_reduction <maximumf>, %26, %cst_17 [2] : vector<4x16x16xf32> to vector<4x16xf32>
    %28 = vector.shape_cast %27 : vector<4x16xf32> to vector<4x16x1xf32>
    %29 = vector.broadcast %28 : vector<4x16x1xf32> to vector<4x16x16xf32>
    %30 = arith.subf %26, %29 : vector<4x16x16xf32>
    %31 = math.exp %30 : vector<4x16x16xf32>
    %cst_18 = arith.constant dense<0.000000e+00> : vector<4x16xf32>
    %32 = vector.multi_reduction <add>, %31, %cst_18 [2] : vector<4x16x16xf32> to vector<4x16xf32>
    %33 = vector.shape_cast %32 : vector<4x16xf32> to vector<4x16x1xf32>
    %34 = tpu.reciprocal %33 {approx = true} : vector<4x16x1xf32> -> vector<4x16x1xf32>
    %35 = arith.mulf %33, %34 : vector<4x16x1xf32>
    %cst_19 = arith.constant 2.000000e+00 : f32
    %36 = vector.broadcast %cst_19 : f32 to vector<4x16x1xf32>
    %37 = arith.subf %36, %35 : vector<4x16x1xf32>
    %38 = arith.mulf %34, %37 : vector<4x16x1xf32>
    %39 = arith.truncf %31 : vector<4x16x16xf32> to vector<4x16x16xbf16>
    "tpu.trace_start"() <{level = 10 : i32, message = "hqk,hkd->hqd"}> : () -> ()
    %cst_20 = arith.constant dense<0.000000e+00> : vector<4x16x32xf32>
    %40 = tpu.matmul %39, %25, %cst_20 {dimension_numbers = #tpu.dot_dimension_numbers<[2], [1], [1], [2], [0, 0, 0, 1, 1, 2], [0], [0]>} : vector<4x16x16xbf16>, vector<4x16x32xbf16>, vector<4x16x32xf32> -> vector<4x16x32xf32>
    "tpu.trace_stop"() : () -> ()
    %41 = vector.broadcast %38 : vector<4x16x1xf32> to vector<4x16x32xf32>
    %42 = arith.mulf %40, %41 : vector<4x16x32xf32>
    %43 = tpu.transpose %42, [1, 0, 2] : vector<4x16x32xf32> -> vector<16x4x32xf32>
    %44 = vector.shape_cast %43 : vector<16x4x32xf32> to vector<16x128xf32>
    %45 = arith.addf %1, %44 : vector<16x128xf32>
    %c0_21 = arith.constant 0 : index
    %c0_22 = arith.constant 0 : index
    %46 = vector.load %arg10[%c0_21, %c0_22] : memref<1x128xf32, #tpu.memory_space<vmem>>, vector<1x128xf32>
    %c0_23 = arith.constant 0 : index
    %c0_24 = arith.constant 0 : index
    %47 = vector.load %arg11[%c0_23, %c0_24] : memref<1x128xf32, #tpu.memory_space<vmem>>, vector<1x128xf32>
    %cst_25 = arith.constant dense<0.000000e+00> : vector<16xf32>
    %48 = vector.multi_reduction <add>, %45, %cst_25 [1] : vector<16x128xf32> to vector<16xf32>
    %49 = vector.shape_cast %48 : vector<16xf32> to vector<16x1xf32>
    %cst_26 = arith.constant 1.280000e+02 : f32
    %50 = vector.broadcast %cst_26 : f32 to vector<16x1xf32>
    %51 = arith.divf %49, %50 : vector<16x1xf32>
    %52 = arith.mulf %45, %45 : vector<16x128xf32>
    %cst_27 = arith.constant dense<0.000000e+00> : vector<16xf32>
    %53 = vector.multi_reduction <add>, %52, %cst_27 [1] : vector<16x128xf32> to vector<16xf32>
    %54 = vector.shape_cast %53 : vector<16xf32> to vector<16x1xf32>
    %cst_28 = arith.constant 1.280000e+02 : f32
    %55 = vector.broadcast %cst_28 : f32 to vector<16x1xf32>
    %56 = arith.divf %54, %55 : vector<16x1xf32>
    %57 = arith.mulf %51, %51 : vector<16x1xf32>
    %58 = arith.subf %56, %57 : vector<16x1xf32>
    %cst_29 = arith.constant 0.000000e+00 : f32
    %59 = vector.broadcast %cst_29 : f32 to vector<16x1xf32>
    %60 = arith.maximumf %58, %59 : vector<16x1xf32>
    %61 = vector.broadcast %51 : vector<16x1xf32> to vector<16x128xf32>
    %62 = arith.subf %45, %61 : vector<16x128xf32>
    %cst_30 = arith.constant 9.99999974E-6 : f32
    %63 = vector.broadcast %cst_30 : f32 to vector<16x1xf32>
    %64 = arith.addf %60, %63 : vector<16x1xf32>
    %65 = math.rsqrt %64 : vector<16x1xf32>
    %66 = vector.broadcast %65 : vector<16x1xf32> to vector<16x128xf32>
    %67 = arith.mulf %62, %66 : vector<16x128xf32>
    %68 = vector.broadcast %46 : vector<1x128xf32> to vector<16x128xf32>
    %69 = arith.mulf %67, %68 : vector<16x128xf32>
    %70 = vector.broadcast %47 : vector<1x128xf32> to vector<16x128xf32>
    %71 = arith.addf %69, %70 : vector<16x128xf32>
    %72 = arith.addf %71, %7 : vector<16x128xf32>
    %73 = arith.truncf %72 : vector<16x128xf32> to vector<16x128xbf16>
    %c0_31 = arith.constant 0 : index
    %c0_32 = arith.constant 0 : index
    %74 = vector.load %arg7[%c0_31, %c0_32] : memref<128x128xbf16, #tpu.memory_space<vmem>>, vector<128x128xbf16>
    %cst_33 = arith.constant dense<0.000000e+00> : vector<16x128xf32>
    %75 = tpu.matmul %73, %74, %cst_33 {dimension_numbers = #tpu.dot_dimension_numbers<[1], [0], [0], [1], [0, 0, 1, 1], [], []>} : vector<16x128xbf16>, vector<128x128xbf16>, vector<16x128xf32> -> vector<16x128xf32>
    %76 = arith.addf %3, %5 : vector<32x128xf32>
    %77 = arith.truncf %76 : vector<32x128xf32> to vector<32x128xbf16>
    %c0_34 = arith.constant 0 : index
    %c0_35 = arith.constant 0 : index
    %78 = vector.load %arg8[%c0_34, %c0_35] : memref<128x128xbf16, #tpu.memory_space<vmem>>, vector<128x128xbf16>
    %cst_36 = arith.constant dense<0.000000e+00> : vector<32x128xf32>
    %79 = tpu.matmul %77, %78, %cst_36 {dimension_numbers = #tpu.dot_dimension_numbers<[1], [0], [0], [1], [0, 0, 1, 1], [], []>} : vector<32x128xbf16>, vector<128x128xbf16>, vector<32x128xf32> -> vector<32x128xf32>
    %80 = arith.truncf %3 : vector<32x128xf32> to vector<32x128xbf16>
    %c0_37 = arith.constant 0 : index
    %c0_38 = arith.constant 0 : index
    %81 = vector.load %arg9[%c0_37, %c0_38] : memref<128x128xbf16, #tpu.memory_space<vmem>>, vector<128x128xbf16>
    %cst_39 = arith.constant dense<0.000000e+00> : vector<32x128xf32>
    %82 = tpu.matmul %80, %81, %cst_39 {dimension_numbers = #tpu.dot_dimension_numbers<[1], [0], [0], [1], [0, 0, 1, 1], [], []>} : vector<32x128xbf16>, vector<128x128xbf16>, vector<32x128xf32> -> vector<32x128xf32>
    %83 = vector.shape_cast %75 : vector<16x128xf32> to vector<16x4x32xf32>
    %84 = tpu.transpose %83, [1, 0, 2] : vector<16x4x32xf32> -> vector<4x16x32xf32>
    %85 = arith.truncf %84 : vector<4x16x32xf32> to vector<4x16x32xbf16>
    %86 = vector.shape_cast %79 : vector<32x128xf32> to vector<32x4x32xf32>
    %87 = tpu.transpose %86, [1, 0, 2] : vector<32x4x32xf32> -> vector<4x32x32xf32>
    %88 = arith.truncf %87 : vector<4x32x32xf32> to vector<4x32x32xbf16>
    %89 = vector.shape_cast %82 : vector<32x128xf32> to vector<32x4x32xf32>
    %90 = tpu.transpose %89, [1, 0, 2] : vector<32x4x32xf32> -> vector<4x32x32xf32>
    %91 = arith.truncf %90 : vector<4x32x32xf32> to vector<4x32x32xbf16>
    "tpu.trace_start"() <{level = 10 : i32, message = "hqd,hkd->hqk"}> : () -> ()
    %cst_40 = arith.constant dense<0.000000e+00> : vector<4x16x32xf32>
    %92 = tpu.matmul %85, %88, %cst_40 {dimension_numbers = #tpu.dot_dimension_numbers<[2], [2], [1], [1], [0, 0, 0, 1, 1, 1], [0], [0]>} : vector<4x16x32xbf16>, vector<4x32x32xbf16>, vector<4x16x32xf32> -> vector<4x16x32xf32>
    "tpu.trace_stop"() : () -> ()
    %cst_41 = arith.constant dense<0xFF800000> : vector<4x16xf32>
    %93 = vector.multi_reduction <maximumf>, %92, %cst_41 [2] : vector<4x16x32xf32> to vector<4x16xf32>
    %94 = vector.shape_cast %93 : vector<4x16xf32> to vector<4x16x1xf32>
    %95 = vector.broadcast %94 : vector<4x16x1xf32> to vector<4x16x32xf32>
    %96 = arith.subf %92, %95 : vector<4x16x32xf32>
    %97 = math.exp %96 : vector<4x16x32xf32>
    %cst_42 = arith.constant dense<0.000000e+00> : vector<4x16xf32>
    %98 = vector.multi_reduction <add>, %97, %cst_42 [2] : vector<4x16x32xf32> to vector<4x16xf32>
    %99 = vector.shape_cast %98 : vector<4x16xf32> to vector<4x16x1xf32>
    %100 = tpu.reciprocal %99 {approx = true} : vector<4x16x1xf32> -> vector<4x16x1xf32>
    %101 = arith.mulf %99, %100 : vector<4x16x1xf32>
    %cst_43 = arith.constant 2.000000e+00 : f32
    %102 = vector.broadcast %cst_43 : f32 to vector<4x16x1xf32>
    %103 = arith.subf %102, %101 : vector<4x16x1xf32>
    %104 = arith.mulf %100, %103 : vector<4x16x1xf32>
    %105 = arith.truncf %97 : vector<4x16x32xf32> to vector<4x16x32xbf16>
    "tpu.trace_start"() <{level = 10 : i32, message = "hqk,hkd->hqd"}> : () -> ()
    %cst_44 = arith.constant dense<0.000000e+00> : vector<4x16x32xf32>
    %106 = tpu.matmul %105, %91, %cst_44 {dimension_numbers = #tpu.dot_dimension_numbers<[2], [1], [1], [2], [0, 0, 0, 1, 1, 2], [0], [0]>} : vector<4x16x32xbf16>, vector<4x32x32xbf16>, vector<4x16x32xf32> -> vector<4x16x32xf32>
    "tpu.trace_stop"() : () -> ()
    %107 = vector.broadcast %104 : vector<4x16x1xf32> to vector<4x16x32xf32>
    %108 = arith.mulf %106, %107 : vector<4x16x32xf32>
    %109 = tpu.transpose %108, [1, 0, 2] : vector<4x16x32xf32> -> vector<16x4x32xf32>
    %110 = vector.shape_cast %109 : vector<16x4x32xf32> to vector<16x128xf32>
    %111 = arith.addf %71, %110 : vector<16x128xf32>
    %c0_45 = arith.constant 0 : index
    %c0_46 = arith.constant 0 : index
    %112 = vector.load %arg12[%c0_45, %c0_46] : memref<1x128xf32, #tpu.memory_space<vmem>>, vector<1x128xf32>
    %c0_47 = arith.constant 0 : index
    %c0_48 = arith.constant 0 : index
    %113 = vector.load %arg13[%c0_47, %c0_48] : memref<1x128xf32, #tpu.memory_space<vmem>>, vector<1x128xf32>
    %cst_49 = arith.constant dense<0.000000e+00> : vector<16xf32>
    %114 = vector.multi_reduction <add>, %111, %cst_49 [1] : vector<16x128xf32> to vector<16xf32>
    %115 = vector.shape_cast %114 : vector<16xf32> to vector<16x1xf32>
    %cst_50 = arith.constant 1.280000e+02 : f32
    %116 = vector.broadcast %cst_50 : f32 to vector<16x1xf32>
    %117 = arith.divf %115, %116 : vector<16x1xf32>
    %118 = arith.mulf %111, %111 : vector<16x128xf32>
    %cst_51 = arith.constant dense<0.000000e+00> : vector<16xf32>
    %119 = vector.multi_reduction <add>, %118, %cst_51 [1] : vector<16x128xf32> to vector<16xf32>
    %120 = vector.shape_cast %119 : vector<16xf32> to vector<16x1xf32>
    %cst_52 = arith.constant 1.280000e+02 : f32
    %121 = vector.broadcast %cst_52 : f32 to vector<16x1xf32>
    %122 = arith.divf %120, %121 : vector<16x1xf32>
    %123 = arith.mulf %117, %117 : vector<16x1xf32>
    %124 = arith.subf %122, %123 : vector<16x1xf32>
    %cst_53 = arith.constant 0.000000e+00 : f32
    %125 = vector.broadcast %cst_53 : f32 to vector<16x1xf32>
    %126 = arith.maximumf %124, %125 : vector<16x1xf32>
    %127 = vector.broadcast %117 : vector<16x1xf32> to vector<16x128xf32>
    %128 = arith.subf %111, %127 : vector<16x128xf32>
    %cst_54 = arith.constant 9.99999974E-6 : f32
    %129 = vector.broadcast %cst_54 : f32 to vector<16x1xf32>
    %130 = arith.addf %126, %129 : vector<16x1xf32>
    %131 = math.rsqrt %130 : vector<16x1xf32>
    %132 = vector.broadcast %131 : vector<16x1xf32> to vector<16x128xf32>
    %133 = arith.mulf %128, %132 : vector<16x128xf32>
    %134 = vector.broadcast %112 : vector<1x128xf32> to vector<16x128xf32>
    %135 = arith.mulf %133, %134 : vector<16x128xf32>
    %136 = vector.broadcast %113 : vector<1x128xf32> to vector<16x128xf32>
    %137 = arith.addf %135, %136 : vector<16x128xf32>
    %138 = arith.truncf %137 : vector<16x128xf32> to vector<16x128xbf16>
    %c0_55 = arith.constant 0 : index
    %c0_56 = arith.constant 0 : index
    %139 = vector.load %arg16[%c0_55, %c0_56] : memref<128x256xbf16, #tpu.memory_space<vmem>>, vector<128x256xbf16>
    %cst_57 = arith.constant dense<0.000000e+00> : vector<16x256xf32>
    %140 = tpu.matmul %138, %139, %cst_57 {dimension_numbers = #tpu.dot_dimension_numbers<[1], [0], [0], [1], [0, 0, 1, 1], [], []>} : vector<16x128xbf16>, vector<128x256xbf16>, vector<16x256xf32> -> vector<16x256xf32>
    %c0_58 = arith.constant 0 : index
    %c0_59 = arith.constant 0 : index
    %141 = vector.load %arg17[%c0_58, %c0_59] : memref<1x256xf32, #tpu.memory_space<vmem>>, vector<1x256xf32>
    %142 = vector.broadcast %141 : vector<1x256xf32> to vector<16x256xf32>
    %143 = arith.addf %140, %142 : vector<16x256xf32>
    %cst_60 = arith.constant 0.000000e+00 : f32
    %144 = vector.broadcast %cst_60 : f32 to vector<16x256xf32>
    %145 = arith.maximumf %143, %144 : vector<16x256xf32>
    %146 = arith.truncf %145 : vector<16x256xf32> to vector<16x256xbf16>
    %c0_61 = arith.constant 0 : index
    %c0_62 = arith.constant 0 : index
    %147 = vector.load %arg18[%c0_61, %c0_62] : memref<256x128xbf16, #tpu.memory_space<vmem>>, vector<256x128xbf16>
    %cst_63 = arith.constant dense<0.000000e+00> : vector<16x128xf32>
    %148 = tpu.matmul %146, %147, %cst_63 {dimension_numbers = #tpu.dot_dimension_numbers<[1], [0], [0], [1], [0, 0, 1, 1], [], []>} : vector<16x256xbf16>, vector<256x128xbf16>, vector<16x128xf32> -> vector<16x128xf32>
    %c0_64 = arith.constant 0 : index
    %c0_65 = arith.constant 0 : index
    %149 = vector.load %arg19[%c0_64, %c0_65] : memref<1x128xf32, #tpu.memory_space<vmem>>, vector<1x128xf32>
    %150 = vector.broadcast %149 : vector<1x128xf32> to vector<16x128xf32>
    %151 = arith.addf %148, %150 : vector<16x128xf32>
    %152 = arith.addf %137, %151 : vector<16x128xf32>
    %c0_66 = arith.constant 0 : index
    %c0_67 = arith.constant 0 : index
    %153 = vector.load %arg14[%c0_66, %c0_67] : memref<1x128xf32, #tpu.memory_space<vmem>>, vector<1x128xf32>
    %c0_68 = arith.constant 0 : index
    %c0_69 = arith.constant 0 : index
    %154 = vector.load %arg15[%c0_68, %c0_69] : memref<1x128xf32, #tpu.memory_space<vmem>>, vector<1x128xf32>
    %cst_70 = arith.constant dense<0.000000e+00> : vector<16xf32>
    %155 = vector.multi_reduction <add>, %152, %cst_70 [1] : vector<16x128xf32> to vector<16xf32>
    %156 = vector.shape_cast %155 : vector<16xf32> to vector<16x1xf32>
    %cst_71 = arith.constant 1.280000e+02 : f32
    %157 = vector.broadcast %cst_71 : f32 to vector<16x1xf32>
    %158 = arith.divf %156, %157 : vector<16x1xf32>
    %159 = arith.mulf %152, %152 : vector<16x128xf32>
    %cst_72 = arith.constant dense<0.000000e+00> : vector<16xf32>
    %160 = vector.multi_reduction <add>, %159, %cst_72 [1] : vector<16x128xf32> to vector<16xf32>
    %161 = vector.shape_cast %160 : vector<16xf32> to vector<16x1xf32>
    %cst_73 = arith.constant 1.280000e+02 : f32
    %162 = vector.broadcast %cst_73 : f32 to vector<16x1xf32>
    %163 = arith.divf %161, %162 : vector<16x1xf32>
    %164 = arith.mulf %158, %158 : vector<16x1xf32>
    %165 = arith.subf %163, %164 : vector<16x1xf32>
    %cst_74 = arith.constant 0.000000e+00 : f32
    %166 = vector.broadcast %cst_74 : f32 to vector<16x1xf32>
    %167 = arith.maximumf %165, %166 : vector<16x1xf32>
    %168 = vector.broadcast %158 : vector<16x1xf32> to vector<16x128xf32>
    %169 = arith.subf %152, %168 : vector<16x128xf32>
    %cst_75 = arith.constant 9.99999974E-6 : f32
    %170 = vector.broadcast %cst_75 : f32 to vector<16x1xf32>
    %171 = arith.addf %167, %170 : vector<16x1xf32>
    %172 = math.rsqrt %171 : vector<16x1xf32>
    %173 = vector.broadcast %172 : vector<16x1xf32> to vector<16x128xf32>
    %174 = arith.mulf %169, %173 : vector<16x128xf32>
    %175 = vector.broadcast %153 : vector<1x128xf32> to vector<16x128xf32>
    %176 = arith.mulf %174, %175 : vector<16x128xf32>
    %177 = vector.broadcast %154 : vector<1x128xf32> to vector<16x128xf32>
    %178 = arith.addf %176, %177 : vector<16x128xf32>
    %c0_76 = arith.constant 0 : index
    %c0_77 = arith.constant 0 : index
    %c0_78 = arith.constant 0 : index
    %179 = vector.load %arg20[%c0_76, %c0_77, %c0_78] : memref<1x16x128xf32, #tpu.memory_space<vmem>>, vector<1x16x128xf32>
    %180 = vector.shape_cast %179 : vector<1x16x128xf32> to vector<16x128xf32>
    %181 = vector.shape_cast %178 : vector<16x128xf32> to vector<1x16x128xf32>
    tpu.vector_store %arg20[%c0_76, %c0_77, %c0_78], %181 {strides = array<i32>} : memref<1x16x128xf32, #tpu.memory_space<vmem>>, vector<1x16x128xf32>,
    return
  }
  func.func @transform_0(%arg0: i32) -> (i32, i32, i32) {
    %c0_i32 = arith.constant 0 : i32
    %c0_i32_0 = arith.constant 0 : i32
    %c0_i32_1 = arith.constant 0 : i32
    return %arg0, %c0_i32, %c0_i32_0 : i32, i32, i32
  }
  func.func @transform_1(%arg0: i32) -> (i32, i32, i32) {
    %c0_i32 = arith.constant 0 : i32
    %c0_i32_0 = arith.constant 0 : i32
    %c0_i32_1 = arith.constant 0 : i32
    return %arg0, %c0_i32, %c0_i32_0 : i32, i32, i32
  }
  func.func @transform_2(%arg0: i32) -> (i32, i32, i32) {
    %c0_i32 = arith.constant 0 : i32
    %c0_i32_0 = arith.constant 0 : i32
    %c0_i32_1 = arith.constant 0 : i32
    return %arg0, %c0_i32, %c0_i32_0 : i32, i32, i32
  }
  func.func @transform_3(%arg0: i32) -> (i32, i32, i32) {
    %c0_i32 = arith.constant 0 : i32
    %c0_i32_0 = arith.constant 0 : i32
    %c0_i32_1 = arith.constant 0 : i32
    return %arg0, %c0_i32, %c0_i32_0 : i32, i32, i32
  }
  func.func @transform_4(%arg0: i32) -> (i32, i32) {
    %c0_i32 = arith.constant 0 : i32
    %c0_i32_0 = arith.constant 0 : i32
    %c0_i32_1 = arith.constant 0 : i32
    return %c0_i32, %c0_i32_0 : i32, i32
  }
  func.func @transform_5(%arg0: i32) -> (i32, i32) {
    %c0_i32 = arith.constant 0 : i32
    %c0_i32_0 = arith.constant 0 : i32
    %c0_i32_1 = arith.constant 0 : i32
    return %c0_i32, %c0_i32_0 : i32, i32
  }
  func.func @transform_6(%arg0: i32) -> (i32, i32) {
    %c0_i32 = arith.constant 0 : i32
    %c0_i32_0 = arith.constant 0 : i32
    %c0_i32_1 = arith.constant 0 : i32
    return %c0_i32, %c0_i32_0 : i32, i32
  }
  func.func @transform_7(%arg0: i32) -> (i32, i32) {
    %c0_i32 = arith.constant 0 : i32
    %c0_i32_0 = arith.constant 0 : i32
    %c0_i32_1 = arith.constant 0 : i32
    return %c0_i32, %c0_i32_0 : i32, i32
  }
  func.func @transform_8(%arg0: i32) -> (i32, i32) {
    %c0_i32 = arith.constant 0 : i32
    %c0_i32_0 = arith.constant 0 : i32
    %c0_i32_1 = arith.constant 0 : i32
    return %c0_i32, %c0_i32_0 : i32, i32
  }
  func.func @transform_9(%arg0: i32) -> (i32, i32) {
    %c0_i32 = arith.constant 0 : i32
    %c0_i32_0 = arith.constant 0 : i32
    %c0_i32_1 = arith.constant 0 : i32
    return %c0_i32, %c0_i32_0 : i32, i32
  }
  func.func @transform_10(%arg0: i32) -> (i32, i32) {
    %c0_i32 = arith.constant 0 : i32
    %c0_i32_0 = arith.constant 0 : i32
    %c0_i32_1 = arith.constant 0 : i32
    return %c0_i32, %c0_i32_0 : i32, i32
  }
  func.func @transform_11(%arg0: i32) -> (i32, i32) {
    %c0_i32 = arith.constant 0 : i32
    %c0_i32_0 = arith.constant 0 : i32
    %c0_i32_1 = arith.constant 0 : i32
    return %c0_i32, %c0_i32_0 : i32, i32
  }
  func.func @transform_12(%arg0: i32) -> (i32, i32) {
    %c0_i32 = arith.constant 0 : i32
    %c0_i32_0 = arith.constant 0 : i32
    %c0_i32_1 = arith.constant 0 : i32
    return %c0_i32, %c0_i32_0 : i32, i32
  }
  func.func @transform_13(%arg0: i32) -> (i32, i32) {
    %c0_i32 = arith.constant 0 : i32
    %c0_i32_0 = arith.constant 0 : i32
    %c0_i32_1 = arith.constant 0 : i32
    return %c0_i32, %c0_i32_0 : i32, i32
  }
  func.func @transform_14(%arg0: i32) -> (i32, i32) {
    %c0_i32 = arith.constant 0 : i32
    %c0_i32_0 = arith.constant 0 : i32
    %c0_i32_1 = arith.constant 0 : i32
    return %c0_i32, %c0_i32_0 : i32, i32
  }
  func.func @transform_15(%arg0: i32) -> (i32, i32) {
    %c0_i32 = arith.constant 0 : i32
    %c0_i32_0 = arith.constant 0 : i32
    %c0_i32_1 = arith.constant 0 : i32
    return %c0_i32, %c0_i32_0 : i32, i32
  }
  func.func @transform_16(%arg0: i32) -> (i32, i32) {
    %c0_i32 = arith.constant 0 : i32
    %c0_i32_0 = arith.constant 0 : i32
    %c0_i32_1 = arith.constant 0 : i32
    return %c0_i32, %c0_i32_0 : i32, i32
  }
  func.func @transform_17(%arg0: i32) -> (i32, i32) {
    %c0_i32 = arith.constant 0 : i32
    %c0_i32_0 = arith.constant 0 : i32
    %c0_i32_1 = arith.constant 0 : i32
    return %c0_i32, %c0_i32_0 : i32, i32
  }
  func.func @transform_18(%arg0: i32) -> (i32, i32) {
    %c0_i32 = arith.constant 0 : i32
    %c0_i32_0 = arith.constant 0 : i32
    %c0_i32_1 = arith.constant 0 : i32
    return %c0_i32, %c0_i32_0 : i32, i32
  }
  func.func @transform_19(%arg0: i32) -> (i32, i32, i32) {
    %c0_i32 = arith.constant 0 : i32
    %c0_i32_0 = arith.constant 0 : i32
    %c0_i32_1 = arith.constant 0 : i32
    return %arg0, %c0_i32, %c0_i32_0 : i32, i32, i32
  }
}

</mosaic_0001>

<llo_original>
// kernel: tpu_custom_call.1
$region0: #{tpu_custom_call.1}
  #allocation0 [shape = 'u32[]', space=smem, size = 0x4, offset = 0x4, fixed_abs, tag = 'smem constant byte address 0x4 - core index']
  #allocation1 [shape = 'u32[144,128]{1,0:T(1,128)}', space=vmem, size = 0x12000, scoped, tag = 'internal scratch']
  %s0 = inlined_call_operand.hbm [shape: f32[2,16,128], index: 0, kind: input, shape index: {}]
  %s1 = inlined_call_operand.hbm [shape: f32[2,32,128], index: 1, kind: input, shape index: {}]
  %s2 = inlined_call_operand.hbm [shape: f32[2,32,128], index: 2, kind: input, shape index: {}]
  %s3 = inlined_call_operand.hbm [shape: f32[2,16,128], index: 3, kind: input, shape index: {}]
  %s4 = inlined_call_operand.hbm [shape: bf16[128,256], index: 4, kind: input, shape index: {}]
  %s5 = inlined_call_operand.hbm [shape: bf16[128,128], index: 5, kind: input, shape index: {}]
  %s6 = inlined_call_operand.hbm [shape: bf16[128,128], index: 6, kind: input, shape index: {}]
  %s7 = inlined_call_operand.hbm [shape: bf16[128,128], index: 7, kind: input, shape index: {}]
  %s8 = inlined_call_operand.hbm [shape: bf16[128,128], index: 8, kind: input, shape index: {}]
  %s9 = inlined_call_operand.vmem [shape: f32[1,128], index: 9, kind: input, shape index: {}]
  %s10 = inlined_call_operand.vmem [shape: f32[1,128], index: 10, kind: input, shape index: {}]
  %s11 = inlined_call_operand.vmem [shape: f32[1,128], index: 11, kind: input, shape index: {}]
  %s12 = inlined_call_operand.vmem [shape: f32[1,128], index: 12, kind: input, shape index: {}]
  %s13 = inlined_call_operand.vmem [shape: f32[1,128], index: 13, kind: input, shape index: {}]
  %s14 = inlined_call_operand.vmem [shape: f32[1,128], index: 14, kind: input, shape index: {}]
  %s15 = inlined_call_operand.hbm [shape: bf16[128,256], index: 15, kind: input, shape index: {}]
  %s16 = inlined_call_operand.vmem [shape: f32[1,256], index: 16, kind: input, shape index: {}]
  %s17 = inlined_call_operand.hbm [shape: bf16[256,128], index: 17, kind: input, shape index: {}]
  %s18 = inlined_call_operand.vmem [shape: f32[1,128], index: 18, kind: input, shape index: {}]
  %s19 = inlined_call_operand.hbm [shape: f32[2,16,128], index: 19, kind: output, shape index: {}]
  %s20 = sld [smem:[#allocation0]]
  $region153: #{tpu_custom_call.1} parent=0
    _
  %s22 = ssub.s32 1, %s20
  %s23 = scalar_select 0, %s22, %s20
  $region1: #{tpu_custom_call.1} parent=0
    #allocation2 [shape = 'u8[16384]{0}', space=vmem, size = 0x4000, scoped, tag = 'input window, operand 0']
    #allocation3 [shape = 's32[2]{0}', space=sflag, size = 0x8, scoped, tag = 'scoped memory for tpu_custom_call.1']
    #allocation4 [shape = 's32[2]{0}', space=sflag, size = 0x8, scoped, tag = 'scoped memory for tpu_custom_call.1']
    #allocation5 [shape = 'u8[32768]{0}', space=vmem, size = 0x8000, scoped, tag = 'input window, operand 1']
    #allocation6 [shape = 's32[2]{0}', space=sflag, size = 0x8, scoped, tag = 'scoped memory for tpu_custom_call.1']
    #allocation7 [shape = 'u8[32768]{0}', space=vmem, size = 0x8000, scoped, tag = 'input window, operand 2']
    #allocation8 [shape = 'u8[16384]{0}', space=vmem, size = 0x4000, scoped, tag = 'input window, operand 3']
    #allocation9 [shape = 's32[2]{0}', space=sflag, size = 0x8, scoped, tag = 'scoped memory for tpu_custom_call.1']
    #allocation10 [shape = 'u8[65536]{0}', space=vmem, size = 0x10000, scoped, tag = 'input window, operand 4, single buffered']
    #allocation11 [shape = 'u8[32768]{0}', space=vmem, size = 0x8000, scoped, tag = 'input window, operand 5, single buffered']
    #allocation12 [shape = 's32[1]{0}', space=sflag, size = 0x4, scoped, tag = 'scoped memory for tpu_custom_call.1']
    #allocation13 [shape = 'u8[32768]{0}', space=vmem, size = 0x8000, scoped, tag = 'input window, operand 6, single buffered']
    #allocation14 [shape = 'u8[32768]{0}', space=vmem, size = 0x8000, scoped, tag = 'input window, operand 7, single buffered']
    #allocation15 [shape = 's32[1]{0}', space=sflag, size = 0x4, scoped, tag = 'scoped memory for tpu_custom_call.1']
    #allocation16 [shape = 'u8[32768]{0}', space=vmem, size = 0x8000, scoped, tag = 'input window, operand 8, single buffered']
    #allocation17 [shape = 'u8[65536]{0}', space=vmem, size = 0x10000, scoped, tag = 'input window, operand 15, single buffered']
    #allocation18 [shape = 's32[1]{0}', space=sflag, size = 0x4, scoped, tag = 'scoped memory for tpu_custom_call.1']
    #allocation19 [shape = 'u8[65536]{0}', space=vmem, size = 0x10000, scoped, tag = 'input window, operand 17, single buffered']
    #allocation20 [shape = 'u8[16384]{0}', space=vmem, size = 0x4000, scoped, tag = 'output window, operand 0']
    %24 = vsyncpa [#allocation3], 0
    %s25 = scalar_lea.sflag [#allocation3], 1
    %26 = vsyncpa %s25, 0
    %27 = vsyncpa [#allocation6], 0
    %s28 = scalar_lea.sflag [#allocation6], 1
    %29 = vsyncpa %s28, 0
    %30 = vsyncpa [#allocation9], 0
    %s31 = scalar_lea.sflag [#allocation9], 1
    %32 = vsyncpa %s31, 0
    %33 = vsyncpa [#allocation12], 0
    %34 = vsyncpa [#allocation15], 0
    %35 = vsyncpa [#allocation18], 0
    %36 = vsyncpa [#allocation4], 0
    %s37 = scalar_lea.sflag [#allocation4], 1
    %38 = vsyncpa %s37, 0
    loop: start=0, step=1, limit=4
    $region2: #{tpu_custom_call.1} parent=1 // loop_pre_header
      _
    $region3: #{tpu_custom_call.1} parent=1 // loop_header
      %s40 = sphi 0, %s44
      %p41 = scmp.ge.s32.totalorder %s40, 4
      %s50 = sphi 0, %s52
      %s53 = sphi 0, %s50
      %s54 = sphi 0, %s53
      %s70 = sphi 0, %s54
      %s76 = sphi 0, %s78
      %s79 = sphi 0, %s76
      %s80 = sphi 0, %s79
      %s96 = sphi 0, %s80
      %s102 = sphi 0, %s104
      %s105 = sphi 0, %s102
      %s106 = sphi 0, %s105
      %s122 = sphi 0, %s106
      %s128 = sphi 0, %s130
      %s131 = sphi 0, %s128
      %s132 = sphi 0, %s131
      %s148 = sphi 0, %s132
      %s152 = sphi 0, %s152
      %s154 = sphi 0, %s152
      %s155 = sphi 0, %s154
      %s169 = sphi 0, %s155
      %s173 = sphi 0, %s173
      %s175 = sphi 0, %s173
      %s176 = sphi 0, %s175
      %s190 = sphi 0, %s176
      %s194 = sphi 0, %s194
      %s196 = sphi 0, %s194
      %s197 = sphi 0, %s196
      %s211 = sphi 0, %s197
      %s215 = sphi 0, %s215
      %s217 = sphi 0, %s215
      %s218 = sphi 0, %s217
      %s232 = sphi 0, %s218
      %s236 = sphi 0, %s236
      %s238 = sphi 0, %s236
      %s239 = sphi 0, %s238
      %s253 = sphi 0, %s239
      %s257 = sphi 0, %s257
      %s259 = sphi 0, %s257
      %s260 = sphi 0, %s259
      %s274 = sphi 0, %s260
      %s278 = sphi 0, %s278
      %s280 = sphi 0, %s278
      %s281 = sphi 0, %s280
      %s295 = sphi 0, %s281
      %s299 = sphi 0, %s299
      %s301 = sphi 0, %s299
      %s302 = sphi 0, %s301
      %s316 = sphi 0, %s302
      %s320 = sphi 0, %s320
      %s322 = sphi 0, %s320
      %s323 = sphi 0, %s322
      %s337 = sphi 0, %s323
      %s341 = sphi 0, %s341
      %s343 = sphi 0, %s341
      %s344 = sphi 0, %s343
      %s358 = sphi 0, %s344
      %s362 = sphi 0, %s362
      %s364 = sphi 0, %s362
      %s365 = sphi 0, %s364
      %s379 = sphi 0, %s365
      %s383 = sphi 0, %s383
      %s385 = sphi 0, %s383
      %s386 = sphi 0, %s385
      %s400 = sphi 0, %s386
      %s404 = sphi 0, %s404
      %s406 = sphi 0, %s404
      %s407 = sphi 0, %s406
      %s421 = sphi 0, %s407
      %s425 = sphi 0, %s425
      %s427 = sphi 0, %s425
      %s428 = sphi 0, %s427
      %s442 = sphi 0, %s428
      %s446 = sphi 0, %s446
      %s448 = sphi 0, %s446
      %s449 = sphi 0, %s448
      %s463 = sphi 0, %s449
      %s469 = sphi 0, %s471
      %s472 = sphi 0, %s469
      %s473 = sphi 0, %s472
      %s489 = sphi 0, %s473
    $region4: #{tpu_custom_call.1} parent=1 // loop_header_branch
      %43 = sbr.rel (%p41) target = $region8
    $region5: #{tpu_custom_call.1} parent=1 // loop_body
      %s45 = ssub.s32 %s40, 1
      %s46 = ssub.s32 %s40, 2
      %s47 = sadd.s32 %s40, 1
      %s48 = ssub.s32 %s40, %s47
      %p49 = scmp.eq.s32.totalorder %s48, 0
      %s51 = sadd.s32 %s50, 1
      %s52 = scalar_select %p49, %s50, %s51
      %p55 = pneg %p49
      %p56 = scmp.eq.s32.totalorder %s40, 1
      %p57 = por %p55, %p56
      %p58 = scmp.ne.s32.totalorder %s50, %s53
      %p59 = scmp.eq.s32.totalorder %s40, 0
      %p60 = por %p58, %p59
      %p61 = scmp.ne.s32.totalorder %s50, %s53
      %p62 = scmp.eq.s32.totalorder %s45, 1
      %p63 = por %p61, %p62
      %p64 = scmp.ne.s32.totalorder %s53, %s54
      %p65 = scmp.eq.s32.totalorder %s45, 0
      %p66 = por %p64, %p65
      %p67 = scmp.ne.s32.totalorder %s53, %s54
      %p68 = scmp.eq.s32.totalorder %s46, 1
      %p69 = por %p67, %p68
      %p71 = scmp.ne.s32.totalorder %s54, %s70
      %p72 = scmp.eq.s32.totalorder %s46, 0
      %p73 = por %p71, %p72
      %s74 = ssub.s32 %s40, %s47
      %p75 = scmp.eq.s32.totalorder %s74, 0
      %s77 = sadd.s32 %s76, 1
      %s78 = scalar_select %p75, %s76, %s77
      %p81 = pneg %p75
      %p82 = scmp.eq.s32.totalorder %s40, 1
      %p83 = por %p81, %p82
      %p84 = scmp.ne.s32.totalorder %s76, %s79
      %p85 = scmp.eq.s32.totalorder %s40, 0
      %p86 = por %p84, %p85
      %p87 = scmp.ne.s32.totalorder %s76, %s79
      %p88 = scmp.eq.s32.totalorder %s45, 1
      %p89 = por %p87, %p88
      %p90 = scmp.ne.s32.totalorder %s79, %s80
      %p91 = scmp.eq.s32.totalorder %s45, 0
      %p92 = por %p90, %p91
      %p93 = scmp.ne.s32.totalorder %s79, %s80
      %p94 = scmp.eq.s32.totalorder %s46, 1
      %p95 = por %p93, %p94
      %p97 = scmp.ne.s32.totalorder %s80, %s96
      %p98 = scmp.eq.s32.totalorder %s46, 0
      %p99 = por %p97, %p98
      %s100 = ssub.s32 %s40, %s47
      %p101 = scmp.eq.s32.totalorder %s100, 0
      %s103 = sadd.s32 %s102, 1
      %s104 = scalar_select %p101, %s102, %s103
      %p107 = pneg %p101
      %p108 = scmp.eq.s32.totalorder %s40, 1
      %p109 = por %p107, %p108
      %p110 = scmp.ne.s32.totalorder %s102, %s105
      %p111 = scmp.eq.s32.totalorder %s40, 0
      %p112 = por %p110, %p111
      %p113 = scmp.ne.s32.totalorder %s102, %s105
      %p114 = scmp.eq.s32.totalorder %s45, 1
      %p115 = por %p113, %p114
      %p116 = scmp.ne.s32.totalorder %s105, %s106
      %p117 = scmp.eq.s32.totalorder %s45, 0
      %p118 = por %p116, %p117
      %p119 = scmp.ne.s32.totalorder %s105, %s106
      %p120 = scmp.eq.s32.totalorder %s46, 1
      %p121 = por %p119, %p120
      %p123 = scmp.ne.s32.totalorder %s106, %s122
      %p124 = scmp.eq.s32.totalorder %s46, 0
      %p125 = por %p123, %p124
      %s126 = ssub.s32 %s40, %s47
      %p127 = scmp.eq.s32.totalorder %s126, 0
      %s129 = sadd.s32 %s128, 1
      %s130 = scalar_select %p127, %s128, %s129
      %p133 = pneg %p127
      %p134 = scmp.eq.s32.totalorder %s40, 1
      %p135 = por %p133, %p134
      %p136 = scmp.ne.s32.totalorder %s128, %s131
      %p137 = scmp.eq.s32.totalorder %s40, 0
      %p138 = por %p136, %p137
      %p139 = scmp.ne.s32.totalorder %s128, %s131
      %p140 = scmp.eq.s32.totalorder %s45, 1
      %p141 = por %p139, %p140
      %p142 = scmp.ne.s32.totalorder %s131, %s132
      %p143 = scmp.eq.s32.totalorder %s45, 0
      %p144 = por %p142, %p143
      %p145 = scmp.ne.s32.totalorder %s131, %s132
      %p146 = scmp.eq.s32.totalorder %s46, 1
      %p147 = por %p145, %p146
      %p149 = scmp.ne.s32.totalorder %s132, %s148
      %p150 = scmp.eq.s32.totalorder %s46, 0
      %p151 = por %p149, %p150
      %s153 = sadd.s32 %s152, 1
      %p156 = scmp.eq.s32.totalorder %s40, 1
      %p157 = scmp.ne.s32.totalorder %s152, %s154
      %p158 = scmp.eq.s32.totalorder %s40, 0
      %p159 = por %p157, %p158
      %p160 = scmp.ne.s32.totalorder %s152, %s154
      %p161 = scmp.eq.s32.totalorder %s45, 1
      %p162 = por %p160, %p161
      %p163 = scmp.ne.s32.totalorder %s154, %s155
      %p164 = scmp.eq.s32.totalorder %s45, 0
      %p165 = por %p163, %p164
      %p166 = scmp.ne.s32.totalorder %s154, %s155
      %p167 = scmp.eq.s32.totalorder %s46, 1
      %p168 = por %p166, %p167
      %p170 = scmp.ne.s32.totalorder %s155, %s169
      %p171 = scmp.eq.s32.totalorder %s46, 0
      %p172 = por %p170, %p171
      %s174 = sadd.s32 %s173, 1
      %p177 = scmp.eq.s32.totalorder %s40, 1
      %p178 = scmp.ne.s32.totalorder %s173, %s175
      %p179 = scmp.eq.s32.totalorder %s40, 0
      %p180 = por %p178, %p179
      %p181 = scmp.ne.s32.totalorder %s173, %s175
      %p182 = scmp.eq.s32.totalorder %s45, 1
      %p183 = por %p181, %p182
      %p184 = scmp.ne.s32.totalorder %s175, %s176
      %p185 = scmp.eq.s32.totalorder %s45, 0
      %p186 = por %p184, %p185
      %p187 = scmp.ne.s32.totalorder %s175, %s176
      %p188 = scmp.eq.s32.totalorder %s46, 1
      %p189 = por %p187, %p188
      %p191 = scmp.ne.s32.totalorder %s176, %s190
      %p192 = scmp.eq.s32.totalorder %s46, 0
      %p193 = por %p191, %p192
      %s195 = sadd.s32 %s194, 1
      %p198 = scmp.eq.s32.totalorder %s40, 1
      %p199 = scmp.ne.s32.totalorder %s194, %s196
      %p200 = scmp.eq.s32.totalorder %s40, 0
      %p201 = por %p199, %p200
      %p202 = scmp.ne.s32.totalorder %s194, %s196
      %p203 = scmp.eq.s32.totalorder %s45, 1
      %p204 = por %p202, %p203
      %p205 = scmp.ne.s32.totalorder %s196, %s197
      %p206 = scmp.eq.s32.totalorder %s45, 0
      %p207 = por %p205, %p206
      %p208 = scmp.ne.s32.totalorder %s196, %s197
      %p209 = scmp.eq.s32.totalorder %s46, 1
      %p210 = por %p208, %p209
      %p212 = scmp.ne.s32.totalorder %s197, %s211
      %p213 = scmp.eq.s32.totalorder %s46, 0
      %p214 = por %p212, %p213
      %s216 = sadd.s32 %s215, 1
      %p219 = scmp.eq.s32.totalorder %s40, 1
      %p220 = scmp.ne.s32.totalorder %s215, %s217
      %p221 = scmp.eq.s32.totalorder %s40, 0
      %p222 = por %p220, %p221
      %p223 = scmp.ne.s32.totalorder %s215, %s217
      %p224 = scmp.eq.s32.totalorder %s45, 1
      %p225 = por %p223, %p224
      %p226 = scmp.ne.s32.totalorder %s217, %s218
      %p227 = scmp.eq.s32.totalorder %s45, 0
      %p228 = por %p226, %p227
      %p229 = scmp.ne.s32.totalorder %s217, %s218
      %p230 = scmp.eq.s32.totalorder %s46, 1
      %p231 = por %p229, %p230
      %p233 = scmp.ne.s32.totalorder %s218, %s232
      %p234 = scmp.eq.s32.totalorder %s46, 0
      %p235 = por %p233, %p234
      %s237 = sadd.s32 %s236, 1
      %p240 = scmp.eq.s32.totalorder %s40, 1
      %p241 = scmp.ne.s32.totalorder %s236, %s238
      %p242 = scmp.eq.s32.totalorder %s40, 0
      %p243 = por %p241, %p242
      %p244 = scmp.ne.s32.totalorder %s236, %s238
      %p245 = scmp.eq.s32.totalorder %s45, 1
      %p246 = por %p244, %p245
      %p247 = scmp.ne.s32.totalorder %s238, %s239
      %p248 = scmp.eq.s32.totalorder %s45, 0
      %p249 = por %p247, %p248
      %p250 = scmp.ne.s32.totalorder %s238, %s239
      %p251 = scmp.eq.s32.totalorder %s46, 1
      %p252 = por %p250, %p251
      %p254 = scmp.ne.s32.totalorder %s239, %s253
      %p255 = scmp.eq.s32.totalorder %s46, 0
      %p256 = por %p254, %p255
      %s258 = sadd.s32 %s257, 1
      %p261 = scmp.eq.s32.totalorder %s40, 1
      %p262 = scmp.ne.s32.totalorder %s257, %s259
      %p263 = scmp.eq.s32.totalorder %s40, 0
      %p264 = por %p262, %p263
      %p265 = scmp.ne.s32.totalorder %s257, %s259
      %p266 = scmp.eq.s32.totalorder %s45, 1
      %p267 = por %p265, %p266
      %p268 = scmp.ne.s32.totalorder %s259, %s260
      %p269 = scmp.eq.s32.totalorder %s45, 0
      %p270 = por %p268, %p269
      %p271 = scmp.ne.s32.totalorder %s259, %s260
      %p272 = scmp.eq.s32.totalorder %s46, 1
      %p273 = por %p271, %p272
      %p275 = scmp.ne.s32.totalorder %s260, %s274
      %p276 = scmp.eq.s32.totalorder %s46, 0
      %p277 = por %p275, %p276
      %s279 = sadd.s32 %s278, 1
      %p282 = scmp.eq.s32.totalorder %s40, 1
      %p283 = scmp.ne.s32.totalorder %s278, %s280
      %p284 = scmp.eq.s32.totalorder %s40, 0
      %p285 = por %p283, %p284
      %p286 = scmp.ne.s32.totalorder %s278, %s280
      %p287 = scmp.eq.s32.totalorder %s45, 1
      %p288 = por %p286, %p287
      %p289 = scmp.ne.s32.totalorder %s280, %s281
      %p290 = scmp.eq.s32.totalorder %s45, 0
      %p291 = por %p289, %p290
      %p292 = scmp.ne.s32.totalorder %s280, %s281
      %p293 = scmp.eq.s32.totalorder %s46, 1
      %p294 = por %p292, %p293
      %p296 = scmp.ne.s32.totalorder %s281, %s295
      %p297 = scmp.eq.s32.totalorder %s46, 0
      %p298 = por %p296, %p297
      %s300 = sadd.s32 %s299, 1
      %p303 = scmp.eq.s32.totalorder %s40, 1
      %p304 = scmp.ne.s32.totalorder %s299, %s301
      %p305 = scmp.eq.s32.totalorder %s40, 0
      %p306 = por %p304, %p305
      %p307 = scmp.ne.s32.totalorder %s299, %s301
      %p308 = scmp.eq.s32.totalorder %s45, 1
      %p309 = por %p307, %p308
      %p310 = scmp.ne.s32.totalorder %s301, %s302
      %p311 = scmp.eq.s32.totalorder %s45, 0
      %p312 = por %p310, %p311
      %p313 = scmp.ne.s32.totalorder %s301, %s302
      %p314 = scmp.eq.s32.totalorder %s46, 1
      %p315 = por %p313, %p314
      %p317 = scmp.ne.s32.totalorder %s302, %s316
      %p318 = scmp.eq.s32.totalorder %s46, 0
      %p319 = por %p317, %p318
      %s321 = sadd.s32 %s320, 1
      %p324 = scmp.eq.s32.totalorder %s40, 1
      %p325 = scmp.ne.s32.totalorder %s320, %s322
      %p326 = scmp.eq.s32.totalorder %s40, 0
      %p327 = por %p325, %p326
      %p328 = scmp.ne.s32.totalorder %s320, %s322
      %p329 = scmp.eq.s32.totalorder %s45, 1
      %p330 = por %p328, %p329
      %p331 = scmp.ne.s32.totalorder %s322, %s323
      %p332 = scmp.eq.s32.totalorder %s45, 0
      %p333 = por %p331, %p332
      %p334 = scmp.ne.s32.totalorder %s322, %s323
      %p335 = scmp.eq.s32.totalorder %s46, 1
      %p336 = por %p334, %p335
      %p338 = scmp.ne.s32.totalorder %s323, %s337
      %p339 = scmp.eq.s32.totalorder %s46, 0
      %p340 = por %p338, %p339
      %s342 = sadd.s32 %s341, 1
      %p345 = scmp.eq.s32.totalorder %s40, 1
      %p346 = scmp.ne.s32.totalorder %s341, %s343
      %p347 = scmp.eq.s32.totalorder %s40, 0
      %p348 = por %p346, %p347
      %p349 = scmp.ne.s32.totalorder %s341, %s343
      %p350 = scmp.eq.s32.totalorder %s45, 1
      %p351 = por %p349, %p350
      %p352 = scmp.ne.s32.totalorder %s343, %s344
      %p353 = scmp.eq.s32.totalorder %s45, 0
      %p354 = por %p352, %p353
      %p355 = scmp.ne.s32.totalorder %s343, %s344
      %p356 = scmp.eq.s32.totalorder %s46, 1
      %p357 = por %p355, %p356
      %p359 = scmp.ne.s32.totalorder %s344, %s358
      %p360 = scmp.eq.s32.totalorder %s46, 0
      %p361 = por %p359, %p360
      %s363 = sadd.s32 %s362, 1
      %p366 = scmp.eq.s32.totalorder %s40, 1
      %p367 = scmp.ne.s32.totalorder %s362, %s364
      %p368 = scmp.eq.s32.totalorder %s40, 0
      %p369 = por %p367, %p368
      %p370 = scmp.ne.s32.totalorder %s362, %s364
      %p371 = scmp.eq.s32.totalorder %s45, 1
      %p372 = por %p370, %p371
      %p373 = scmp.ne.s32.totalorder %s364, %s365
      %p374 = scmp.eq.s32.totalorder %s45, 0
      %p375 = por %p373, %p374
      %p376 = scmp.ne.s32.totalorder %s364, %s365
      %p377 = scmp.eq.s32.totalorder %s46, 1
      %p378 = por %p376, %p377
      %p380 = scmp.ne.s32.totalorder %s365, %s379
      %p381 = scmp.eq.s32.totalorder %s46, 0
      %p382 = por %p380, %p381
      %s384 = sadd.s32 %s383, 1
      %p387 = scmp.eq.s32.totalorder %s40, 1
      %p388 = scmp.ne.s32.totalorder %s383, %s385
      %p389 = scmp.eq.s32.totalorder %s40, 0
      %p390 = por %p388, %p389
      %p391 = scmp.ne.s32.totalorder %s383, %s385
      %p392 = scmp.eq.s32.totalorder %s45, 1
      %p393 = por %p391, %p392
      %p394 = scmp.ne.s32.totalorder %s385, %s386
      %p395 = scmp.eq.s32.totalorder %s45, 0
      %p396 = por %p394, %p395
      %p397 = scmp.ne.s32.totalorder %s385, %s386
      %p398 = scmp.eq.s32.totalorder %s46, 1
      %p399 = por %p397, %p398
      %p401 = scmp.ne.s32.totalorder %s386, %s400
      %p402 = scmp.eq.s32.totalorder %s46, 0
      %p403 = por %p401, %p402
      %s405 = sadd.s32 %s404, 1
      %p408 = scmp.eq.s32.totalorder %s40, 1
      %p409 = scmp.ne.s32.totalorder %s404, %s406
      %p410 = scmp.eq.s32.totalorder %s40, 0
      %p411 = por %p409, %p410
      %p412 = scmp.ne.s32.totalorder %s404, %s406
      %p413 = scmp.eq.s32.totalorder %s45, 1
      %p414 = por %p412, %p413
      %p415 = scmp.ne.s32.totalorder %s406, %s407
      %p416 = scmp.eq.s32.totalorder %s45, 0
      %p417 = por %p415, %p416
      %p418 = scmp.ne.s32.totalorder %s406, %s407
      %p419 = scmp.eq.s32.totalorder %s46, 1
      %p420 = por %p418, %p419
      %p422 = scmp.ne.s32.totalorder %s407, %s421
      %p423 = scmp.eq.s32.totalorder %s46, 0
      %p424 = por %p422, %p423
      %s426 = sadd.s32 %s425, 1
      %p429 = scmp.eq.s32.totalorder %s40, 1
      %p430 = scmp.ne.s32.totalorder %s425, %s427
      %p431 = scmp.eq.s32.totalorder %s40, 0
      %p432 = por %p430, %p431
      %p433 = scmp.ne.s32.totalorder %s425, %s427
      %p434 = scmp.eq.s32.totalorder %s45, 1
      %p435 = por %p433, %p434
      %p436 = scmp.ne.s32.totalorder %s427, %s428
      %p437 = scmp.eq.s32.totalorder %s45, 0
      %p438 = por %p436, %p437
      %p439 = scmp.ne.s32.totalorder %s427, %s428
      %p440 = scmp.eq.s32.totalorder %s46, 1
      %p441 = por %p439, %p440
      %p443 = scmp.ne.s32.totalorder %s428, %s442
      %p444 = scmp.eq.s32.totalorder %s46, 0
      %p445 = por %p443, %p444
      %s447 = sadd.s32 %s446, 1
      %p450 = scmp.eq.s32.totalorder %s40, 1
      %p451 = scmp.ne.s32.totalorder %s446, %s448
      %p452 = scmp.eq.s32.totalorder %s40, 0
      %p453 = por %p451, %p452
      %p454 = scmp.ne.s32.totalorder %s446, %s448
      %p455 = scmp.eq.s32.totalorder %s45, 1
      %p456 = por %p454, %p455
      %p457 = scmp.ne.s32.totalorder %s448, %s449
      %p458 = scmp.eq.s32.totalorder %s45, 0
      %p459 = por %p457, %p458
      %p460 = scmp.ne.s32.totalorder %s448, %s449
      %p461 = scmp.eq.s32.totalorder %s46, 1
      %p462 = por %p460, %p461
      %p464 = scmp.ne.s32.totalorder %s449, %s463
      %p465 = scmp.eq.s32.totalorder %s46, 0
      %p466 = por %p464, %p465
      %s467 = ssub.s32 %s40, %s47
      %p468 = scmp.eq.s32.totalorder %s467, 0
      %s470 = sadd.s32 %s469, 1
      %s471 = scalar_select %p468, %s469, %s470
      %p474 = pneg %p468
      %p475 = scmp.eq.s32.totalorder %s40, 1
      %p476 = por %p474, %p475
      %p477 = scmp.ne.s32.totalorder %s469, %s472
      %p478 = scmp.eq.s32.totalorder %s40, 0
      %p479 = por %p477, %p478
      %p480 = scmp.ne.s32.totalorder %s469, %s472
      %p481 = scmp.eq.s32.totalorder %s45, 1
      %p482 = por %p480, %p481
      %p483 = scmp.ne.s32.totalorder %s472, %s473
      %p484 = scmp.eq.s32.totalorder %s45, 0
      %p485 = por %p483, %p484
      %p486 = scmp.ne.s32.totalorder %s472, %s473
      %p487 = scmp.eq.s32.totalorder %s46, 1
      %p488 = por %p486, %p487
      %p490 = scmp.ne.s32.totalorder %s473, %s489
      %p491 = scmp.eq.s32.totalorder %s46, 0
      %p492 = por %p490, %p491
      %p493 = scmp.le.s32.totalorder 1, %s40
      %p494 = scmp.lt.s32.totalorder %s40, 3
      %p495 = pnand %p493, %p494
      %p496 = pneg %p495
      // Predicated region
      $region9: #{tpu_custom_call.1} parent=5 // pred_check
        _
      $region10: #{tpu_custom_call.1} parent=5 // pred_check_branch
        %498 = sbr.rel (%p495) target = $region12
      $region11: #{tpu_custom_call.1} parent=5 // pred_region
        %s499 = ssub.s32 %s40, 1
        // Predicated region
        $region13: #{tpu_custom_call.1} parent=11 // pred_check
          %p500 = pneg %p165
        $region14: #{tpu_custom_call.1} parent=11 // pred_check_branch
          %502 = sbr.rel (%p500) target = $region16
        $region15: #{tpu_custom_call.1} parent=11 // pred_region
          %s504 = ssub.s32 2048, 2048
          %505 = vsyncadd [#allocation9], %s504
          %s506 = sshll.u32 [#allocation10], 4
          %s507 = int_to_ptr.vmem [resolvable:$true] %s506
          %512 = dma.hbm_to_vmem [thread:$0]  %s4, 2048, %s507, [#allocation9], 128, 128, 8
        $region16: #{tpu_custom_call.1} parent=11 // pred_fallthru
          _
        // Predicated region
        $region17: #{tpu_custom_call.1} parent=11 // pred_check
          %p513 = pneg %p186
        $region18: #{tpu_custom_call.1} parent=11 // pred_check_branch
          %515 = sbr.rel (%p513) target = $region20
        $region19: #{tpu_custom_call.1} parent=11 // pred_region
          %s517 = ssub.s32 1024, 1024
          %518 = vsyncadd [#allocation12], %s517
          %s519 = sshll.u32 [#allocation11], 4
          %s520 = int_to_ptr.vmem [resolvable:$true] %s519
          %525 = dma.hbm_to_vmem [thread:$0]  %s5, 1024, %s520, [#allocation12], 64, 64, 4
        $region20: #{tpu_custom_call.1} parent=11 // pred_fallthru
          _
        // Predicated region
        $region21: #{tpu_custom_call.1} parent=11 // pred_check
          %p526 = pneg %p207
        $region22: #{tpu_custom_call.1} parent=11 // pred_check_branch
          %528 = sbr.rel (%p526) target = $region24
        $region23: #{tpu_custom_call.1} parent=11 // pred_region
          %s530 = ssub.s32 1024, 1024
          %531 = vsyncadd [#allocation12], %s530
          %s532 = sshll.u32 [#allocation13], 4
          %s533 = int_to_ptr.vmem [resolvable:$true] %s532
          %538 = dma.hbm_to_vmem [thread:$0]  %s6, 1024, %s533, [#allocation12], 64, 64, 4
        $region24: #{tpu_custom_call.1} parent=11 // pred_fallthru
          _
        // Predicated region
        $region25: #{tpu_custom_call.1} parent=11 // pred_check
          %p539 = pneg %p228
        $region26: #{tpu_custom_call.1} parent=11 // pred_check_branch
          %541 = sbr.rel (%p539) target = $region28
        $region27: #{tpu_custom_call.1} parent=11 // pred_region
          %s543 = ssub.s32 1024, 1024
          %544 = vsyncadd [#allocation15], %s543
          %s545 = sshll.u32 [#allocation14], 4
          %s546 = int_to_ptr.vmem [resolvable:$true] %s545
          %551 = dma.hbm_to_vmem [thread:$0]  %s7, 1024, %s546, [#allocation15], 64, 64, 4
        $region28: #{tpu_custom_call.1} parent=11 // pred_fallthru
          _
        // Predicated region
        $region29: #{tpu_custom_call.1} parent=11 // pred_check
          %p552 = pneg %p249
        $region30: #{tpu_custom_call.1} parent=11 // pred_check_branch
          %554 = sbr.rel (%p552) target = $region32
        $region31: #{tpu_custom_call.1} parent=11 // pred_region
          %s556 = ssub.s32 1024, 1024
          %557 = vsyncadd [#allocation15], %s556
          %s558 = sshll.u32 [#allocation16], 4
          %s559 = int_to_ptr.vmem [resolvable:$true] %s558
          %564 = dma.hbm_to_vmem [thread:$0]  %s8, 1024, %s559, [#allocation15], 64, 64, 4
        $region32: #{tpu_custom_call.1} parent=11 // pred_fallthru
          _
        // Predicated region
        $region33: #{tpu_custom_call.1} parent=11 // pred_check
          %p565 = pneg %p270
        $region34: #{tpu_custom_call.1} parent=11 // pred_check_branch
          %567 = sbr.rel (%p565) target = $region36
        $region35: #{tpu_custom_call.1} parent=11 // pred_region
          _
        $region36: #{tpu_custom_call.1} parent=11 // pred_fallthru
          _
        // Predicated region
        $region37: #{tpu_custom_call.1} parent=11 // pred_check
          %p568 = pneg %p291
        $region38: #{tpu_custom_call.1} parent=11 // pred_check_branch
          %570 = sbr.rel (%p568) target = $region40
        $region39: #{tpu_custom_call.1} parent=11 // pred_region
          _
        $region40: #{tpu_custom_call.1} parent=11 // pred_fallthru
          _
        // Predicated region
        $region41: #{tpu_custom_call.1} parent=11 // pred_check
          %p571 = pneg %p312
        $region42: #{tpu_custom_call.1} parent=11 // pred_check_branch
          %573 = sbr.rel (%p571) target = $region44
        $region43: #{tpu_custom_call.1} parent=11 // pred_region
          _
        $region44: #{tpu_custom_call.1} parent=11 // pred_fallthru
          _
        // Predicated region
        $region45: #{tpu_custom_call.1} parent=11 // pred_check
          %p574 = pneg %p333
        $region46: #{tpu_custom_call.1} parent=11 // pred_check_branch
          %576 = sbr.rel (%p574) target = $region48
        $region47: #{tpu_custom_call.1} parent=11 // pred_region
          _
        $region48: #{tpu_custom_call.1} parent=11 // pred_fallthru
          _
        // Predicated region
        $region49: #{tpu_custom_call.1} parent=11 // pred_check
          %p577 = pneg %p354
        $region50: #{tpu_custom_call.1} parent=11 // pred_check_branch
          %579 = sbr.rel (%p577) target = $region52
        $region51: #{tpu_custom_call.1} parent=11 // pred_region
          _
        $region52: #{tpu_custom_call.1} parent=11 // pred_fallthru
          _
        // Predicated region
        $region53: #{tpu_custom_call.1} parent=11 // pred_check
          %p580 = pneg %p375
        $region54: #{tpu_custom_call.1} parent=11 // pred_check_branch
          %582 = sbr.rel (%p580) target = $region56
        $region55: #{tpu_custom_call.1} parent=11 // pred_region
          _
        $region56: #{tpu_custom_call.1} parent=11 // pred_fallthru
          _
        // Predicated region
        $region57: #{tpu_custom_call.1} parent=11 // pred_check
          %p583 = pneg %p396
        $region58: #{tpu_custom_call.1} parent=11 // pred_check_branch
          %585 = sbr.rel (%p583) target = $region60
        $region59: #{tpu_custom_call.1} parent=11 // pred_region
          %s587 = ssub.s32 2048, 2048
          %588 = vsyncadd [#allocation18], %s587
          %s589 = sshll.u32 [#allocation17], 4
          %s590 = int_to_ptr.vmem [resolvable:$true] %s589
          %595 = dma.hbm_to_vmem [thread:$0]  %s15, 2048, %s590, [#allocation18], 128, 128, 8
        $region60: #{tpu_custom_call.1} parent=11 // pred_fallthru
          _
        // Predicated region
        $region61: #{tpu_custom_call.1} parent=11 // pred_check
          %p596 = pneg %p417
        $region62: #{tpu_custom_call.1} parent=11 // pred_check_branch
          %598 = sbr.rel (%p596) target = $region64
        $region63: #{tpu_custom_call.1} parent=11 // pred_region
          _
        $region64: #{tpu_custom_call.1} parent=11 // pred_fallthru
          _
        // Predicated region
        $region65: #{tpu_custom_call.1} parent=11 // pred_check
          %p599 = pneg %p438
        $region66: #{tpu_custom_call.1} parent=11 // pred_check_branch
          %601 = sbr.rel (%p599) target = $region68
        $region67: #{tpu_custom_call.1} parent=11 // pred_region
          %s603 = ssub.s32 2048, 2048
          %604 = vsyncadd [#allocation18], %s603
          %s605 = sshll.u32 [#allocation19], 4
          %s606 = int_to_ptr.vmem [resolvable:$true] %s605
          %611 = dma.hbm_to_vmem [thread:$0]  %s17, 2048, %s606, [#allocation18], 64, 64, 4
        $region68: #{tpu_custom_call.1} parent=11 // pred_fallthru
          _
        // Predicated region
        $region69: #{tpu_custom_call.1} parent=11 // pred_check
          %p612 = pneg %p459
        $region70: #{tpu_custom_call.1} parent=11 // pred_check_branch
          %614 = sbr.rel (%p612) target = $region72
        $region71: #{tpu_custom_call.1} parent=11 // pred_region
          _
        $region72: #{tpu_custom_call.1} parent=11 // pred_fallthru
          _
      $region12: #{tpu_custom_call.1} parent=5 // pred_fallthru
        _
      %p615 = scmp.lt.s32.totalorder %s40, 2
      // Predicated region
      $region73: #{tpu_custom_call.1} parent=5 // pred_check
        %p616 = pneg %p615
      $region74: #{tpu_custom_call.1} parent=5 // pred_check_branch
        %618 = sbr.rel (%p616) target = $region76
      $region75: #{tpu_custom_call.1} parent=5 // pred_region
        // Predicated region
        $region77: #{tpu_custom_call.1} parent=75 // pred_check
          %p619 = pneg %p60
        $region78: #{tpu_custom_call.1} parent=75 // pred_check_branch
          %621 = sbr.rel (%p619) target = $region80
        $region79: #{tpu_custom_call.1} parent=75 // pred_region
          %s622 = sand.u32 %s50, 1
          %s623 = scalar_lea.sflag [#allocation3], %s622
          %s624 = sand.u32 %s50, 1
          %s625 = smul.addr %s624, 16
          %s626 = scalar_lea.vmem [#allocation2], %s625
          %s628 = ssub.s32 256, 256
          %629 = vsyncadd %s623, %s628
          %s630 = smul.addr %s40, 2
          %s631 = smul.addr %s630, 128
          %s632 = scalar_lea.hbm %s0, %s631
          %s633 = sshll.u32 %s626, 4
          %s634 = int_to_ptr.vmem [resolvable:$true] %s633
          %639 = dma.hbm_to_vmem [thread:$0]  %s632, 256, %s634, %s623, 128, 128, 8
        $region80: #{tpu_custom_call.1} parent=75 // pred_fallthru
          _
        // Predicated region
        $region81: #{tpu_custom_call.1} parent=75 // pred_check
          %p640 = pneg %p86
        $region82: #{tpu_custom_call.1} parent=75 // pred_check_branch
          %642 = sbr.rel (%p640) target = $region84
        $region83: #{tpu_custom_call.1} parent=75 // pred_region
          %s643 = sand.u32 %s40, 1
          %s644 = scalar_lea.sflag [#allocation6], %s643
          %s645 = sand.u32 %s76, 1
          %s646 = smul.addr %s645, 32
          %s647 = scalar_lea.vmem [#allocation5], %s646
          %s649 = ssub.s32 512, 512
          %650 = vsyncadd %s644, %s649
          %s651 = smul.addr %s40, 4
          %s652 = smul.addr %s651, 128
          %s653 = scalar_lea.hbm %s1, %s652
          %s654 = sshll.u32 %s647, 4
          %s655 = int_to_ptr.vmem [resolvable:$true] %s654
          %660 = dma.hbm_to_vmem [thread:$0]  %s653, 512, %s655, %s644, 128, 128, 8
        $region84: #{tpu_custom_call.1} parent=75 // pred_fallthru
          _
        // Predicated region
        $region85: #{tpu_custom_call.1} parent=75 // pred_check
          %p661 = pneg %p112
        $region86: #{tpu_custom_call.1} parent=75 // pred_check_branch
          %663 = sbr.rel (%p661) target = $region88
        $region87: #{tpu_custom_call.1} parent=75 // pred_region
          %s664 = sand.u32 %s40, 1
          %s665 = scalar_lea.sflag [#allocation6], %s664
          %s666 = sand.u32 %s102, 1
          %s667 = smul.addr %s666, 32
          %s668 = scalar_lea.vmem [#allocation7], %s667
          %s670 = ssub.s32 512, 512
          %671 = vsyncadd %s665, %s670
          %s672 = smul.addr %s40, 4
          %s673 = smul.addr %s672, 128
          %s674 = scalar_lea.hbm %s2, %s673
          %s675 = sshll.u32 %s668, 4
          %s676 = int_to_ptr.vmem [resolvable:$true] %s675
          %681 = dma.hbm_to_vmem [thread:$0]  %s674, 512, %s676, %s665, 128, 128, 8
        $region88: #{tpu_custom_call.1} parent=75 // pred_fallthru
          _
        // Predicated region
        $region89: #{tpu_custom_call.1} parent=75 // pred_check
          %p682 = pneg %p138
        $region90: #{tpu_custom_call.1} parent=75 // pred_check_branch
          %684 = sbr.rel (%p682) target = $region92
        $region91: #{tpu_custom_call.1} parent=75 // pred_region
          %s685 = sand.u32 %s40, 1
          %s686 = scalar_lea.sflag [#allocation9], %s685
          %s687 = sand.u32 %s128, 1
          %s688 = smul.addr %s687, 16
          %s689 = scalar_lea.vmem [#allocation8], %s688
          %s691 = ssub.s32 256, 256
          %692 = vsyncadd %s686, %s691
          %s693 = smul.addr %s40, 2
          %s694 = smul.addr %s693, 128
          %s695 = scalar_lea.hbm %s3, %s694
          %s696 = sshll.u32 %s689, 4
          %s697 = int_to_ptr.vmem [resolvable:$true] %s696
          %702 = dma.hbm_to_vmem [thread:$0]  %s695, 256, %s697, %s686, 128, 128, 8
        $region92: #{tpu_custom_call.1} parent=75 // pred_fallthru
          _
      $region76: #{tpu_custom_call.1} parent=5 // pred_fallthru
        _
      %p703 = scmp.le.s32.totalorder 1, %s40
      %p704 = scmp.lt.s32.totalorder %s40, 3
      %p705 = pnand %p703, %p704
      %p706 = pneg %p705
      // Predicated region
      $region93: #{tpu_custom_call.1} parent=5 // pred_check
        _
      $region94: #{tpu_custom_call.1} parent=5 // pred_check_branch
        %708 = sbr.rel (%p705) target = $region96
      $region95: #{tpu_custom_call.1} parent=5 // pred_region
        %s709 = ssub.s32 %s40, 1
        %s710 = sand.u32 %s53, 1
        %s711 = scalar_lea.sflag [#allocation3], %s710
        %s712 = sand.u32 %s53, 1
        %s713 = smul.addr %s712, 16
        %s714 = scalar_lea.vmem [#allocation2], %s713
        // Predicated region
        $region97: #{tpu_custom_call.1} parent=95 // pred_check
          %p715 = pneg %p66
        $region98: #{tpu_custom_call.1} parent=95 // pred_check_branch
          %717 = sbr.rel (%p715) target = $region100
        $region99: #{tpu_custom_call.1} parent=95 // pred_region
          %718 = dma.done %s711, 256
        $region100: #{tpu_custom_call.1} parent=95 // pred_fallthru
          _
        %s719 = sand.u32 %s45, 1
        %s720 = scalar_lea.sflag [#allocation6], %s719
        %s721 = sand.u32 %s79, 1
        %s722 = smul.addr %s721, 32
        %s723 = scalar_lea.vmem [#allocation5], %s722
        // Predicated region
        $region101: #{tpu_custom_call.1} parent=95 // pred_check
          %p724 = pneg %p92
        $region102: #{tpu_custom_call.1} parent=95 // pred_check_branch
          %726 = sbr.rel (%p724) target = $region104
        $region103: #{tpu_custom_call.1} parent=95 // pred_region
          %727 = dma.done %s720, 512
        $region104: #{tpu_custom_call.1} parent=95 // pred_fallthru
          _
        %s728 = sand.u32 %s45, 1
        %s729 = scalar_lea.sflag [#allocation6], %s728
        %s730 = sand.u32 %s105, 1
        %s731 = smul.addr %s730, 32
        %s732 = scalar_lea.vmem [#allocation7], %s731
        // Predicated region
        $region105: #{tpu_custom_call.1} parent=95 // pred_check
          %p733 = pneg %p118
        $region106: #{tpu_custom_call.1} parent=95 // pred_check_branch
          %735 = sbr.rel (%p733) target = $region108
        $region107: #{tpu_custom_call.1} parent=95 // pred_region
          %736 = dma.done %s729, 512
        $region108: #{tpu_custom_call.1} parent=95 // pred_fallthru
          _
        %s737 = sand.u32 %s45, 1
        %s738 = scalar_lea.sflag [#allocation9], %s737
        %s739 = sand.u32 %s131, 1
        %s740 = smul.addr %s739, 16
        %s741 = scalar_lea.vmem [#allocation8], %s740
        // Predicated region
        $region109: #{tpu_custom_call.1} parent=95 // pred_check
          %p742 = pneg %p144
        $region110: #{tpu_custom_call.1} parent=95 // pred_check_branch
          %744 = sbr.rel (%p742) target = $region112
        $region111: #{tpu_custom_call.1} parent=95 // pred_region
          %745 = dma.done %s738, 256
        $region112: #{tpu_custom_call.1} parent=95 // pred_fallthru
          _
        // Predicated region
        $region113: #{tpu_custom_call.1} parent=95 // pred_check
          %p746 = pneg %p165
        $region114: #{tpu_custom_call.1} parent=95 // pred_check_branch
          %748 = sbr.rel (%p746) target = $region116
        $region115: #{tpu_custom_call.1} parent=95 // pred_region
          %749 = dma.done [#allocation9], 2048
        $region116: #{tpu_custom_call.1} parent=95 // pred_fallthru
          _
        // Predicated region
        $region117: #{tpu_custom_call.1} parent=95 // pred_check
          %p750 = pneg %p186
        $region118: #{tpu_custom_call.1} parent=95 // pred_check_branch
          %752 = sbr.rel (%p750) target = $region120
        $region119: #{tpu_custom_call.1} parent=95 // pred_region
          %753 = dma.done [#allocation12], 1024
        $region120: #{tpu_custom_call.1} parent=95 // pred_fallthru
          _
        // Predicated region
        $region121: #{tpu_custom_call.1} parent=95 // pred_check
          %p754 = pneg %p207
        $region122: #{tpu_custom_call.1} parent=95 // pred_check_branch
          %756 = sbr.rel (%p754) target = $region124
        $region123: #{tpu_custom_call.1} parent=95 // pred_region
          %757 = dma.done [#allocation12], 1024
        $region124: #{tpu_custom_call.1} parent=95 // pred_fallthru
          _
        // Predicated region
        $region125: #{tpu_custom_call.1} parent=95 // pred_check
          %p758 = pneg %p228
        $region126: #{tpu_custom_call.1} parent=95 // pred_check_branch
          %760 = sbr.rel (%p758) target = $region128
        $region127: #{tpu_custom_call.1} parent=95 // pred_region
          %761 = dma.done [#allocation15], 1024
        $region128: #{tpu_custom_call.1} parent=95 // pred_fallthru
          _
        // Predicated region
        $region129: #{tpu_custom_call.1} parent=95 // pred_check
          %p762 = pneg %p249
        $region130: #{tpu_custom_call.1} parent=95 // pred_check_branch
          %764 = sbr.rel (%p762) target = $region132
        $region131: #{tpu_custom_call.1} parent=95 // pred_region
          %765 = dma.done [#allocation15], 1024
        $region132: #{tpu_custom_call.1} parent=95 // pred_fallthru
          _
        // Predicated region
        $region133: #{tpu_custom_call.1} parent=95 // pred_check
          %p766 = pneg %p396
        $region134: #{tpu_custom_call.1} parent=95 // pred_check_branch
          %768 = sbr.rel (%p766) target = $region136
        $region135: #{tpu_custom_call.1} parent=95 // pred_region
          %769 = dma.done [#allocation18], 2048
        $region136: #{tpu_custom_call.1} parent=95 // pred_fallthru
          _
        // Predicated region
        $region137: #{tpu_custom_call.1} parent=95 // pred_check
          %p770 = pneg %p438
        $region138: #{tpu_custom_call.1} parent=95 // pred_check_branch
          %772 = sbr.rel (%p770) target = $region140
        $region139: #{tpu_custom_call.1} parent=95 // pred_region
          %773 = dma.done [#allocation18], 2048
        $region140: #{tpu_custom_call.1} parent=95 // pred_fallthru
          _
        %s774 = sand.u32 %s53, 1
        %s775 = scalar_lea.sflag [#allocation3], %s774
        %s776 = sand.u32 %s53, 1
        %s777 = smul.addr %s776, 16
        %s778 = scalar_lea.vmem [#allocation2], %s777
        %p779 = pneg %p66
        %p780 = pneg %p63
        %s781 = sand.u32 %s45, 1
        %s782 = scalar_lea.sflag [#allocation6], %s781
        %s783 = sand.u32 %s79, 1
        %s784 = smul.addr %s783, 32
        %s785 = scalar_lea.vmem [#allocation5], %s784
        %p786 = pneg %p92
        %p787 = pneg %p89
        %s788 = sand.u32 %s45, 1
        %s789 = scalar_lea.sflag [#allocation6], %s788
        %s790 = sand.u32 %s105, 1
        %s791 = smul.addr %s790, 32
        %s792 = scalar_lea.vmem [#allocation7], %s791
        %p793 = pneg %p118
        %p794 = pneg %p115
        %s795 = sand.u32 %s45, 1
        %s796 = scalar_lea.sflag [#allocation9], %s795
        %s797 = sand.u32 %s131, 1
        %s798 = smul.addr %s797, 16
        %s799 = scalar_lea.vmem [#allocation8], %s798
        %p800 = pneg %p144
        %p801 = pneg %p141
        %p802 = pneg %p165
        %p803 = pneg %p162
        %p804 = pneg %p186
        %p805 = pneg %p183
        %p806 = pneg %p207
        %p807 = pneg %p204
        %p808 = pneg %p228
        %p809 = pneg %p225
        %p810 = pneg %p249
        %p811 = pneg %p246
        %p812 = pneg %p270
        %p813 = pneg %p267
        %p814 = pneg %p291
        %p815 = pneg %p288
        %p816 = pneg %p312
        %p817 = pneg %p309
        %p818 = pneg %p333
        %p819 = pneg %p330
        %p820 = pneg %p354
        %p821 = pneg %p351
        %p822 = pneg %p375
        %p823 = pneg %p372
        %p824 = pneg %p396
        %p825 = pneg %p393
        %p826 = pneg %p417
        %p827 = pneg %p414
        %p828 = pneg %p438
        %p829 = pneg %p435
        %p830 = pneg %p459
        %p831 = pneg %p456
        %p832 = pneg %p485
        %p833 = pneg %p482
        %s834 = sand.u32 %s472, 1
        %s835 = scalar_lea.sflag [#allocation4], %s834
        %s836 = sand.u32 %s472, 1
        %s837 = smul.addr %s836, 16
        %s838 = scalar_lea.vmem [#allocation20], %s837
        %v840 = vld [vmem:[%s714] sm:$0xff]
        %v841 = vld [vmem:[%s714 + $0x8] sm:$0xff]
        %v842 = vld [vmem:[%s723] sm:$0xff]
        %v843 = vld [vmem:[%s723 + $0x8] sm:$0xff]
        %v844 = vld [vmem:[%s723 + $0x10] sm:$0xff]
        %v845 = vld [vmem:[%s723 + $0x18] sm:$0xff]
        %v846 = vld [vmem:[%s732] sm:$0xff]
        %v847 = vld [vmem:[%s732 + $0x8] sm:$0xff]
        %v848 = vld [vmem:[%s732 + $0x10] sm:$0xff]
        %v849 = vld [vmem:[%s732 + $0x18] sm:$0xff]
        %v850 = vld [vmem:[%s741] sm:$0xff]
        %v851 = vld [vmem:[%s741 + $0x8] sm:$0xff]
        %v852 = vadd.f32 %v840, %v850
        %v853 = vadd.f32 %v841, %v851
        %v854 = vpack.c.bf16 %v853, %v852
        %v855 = vld [vmem:[#allocation10] sm:$0xff]
        %v856 = vld [vmem:[#allocation10 + $0x8] sm:$0xff]
        %v857 = vld [vmem:[#allocation10 + $0x10] sm:$0xff]
        %v858 = vld [vmem:[#allocation10 + $0x18] sm:$0xff]
        %v859 = vld [vmem:[#allocation10 + $0x20] sm:$0xff]
        %v860 = vld [vmem:[#allocation10 + $0x28] sm:$0xff]
        %v861 = vld [vmem:[#allocation10 + $0x30] sm:$0xff]
        %v862 = vld [vmem:[#allocation10 + $0x38] sm:$0xff]
        %v863 = vld [vmem:[#allocation10 + $0x40] sm:$0xff]
        %v864 = vld [vmem:[#allocation10 + $0x48] sm:$0xff]
        %v865 = vld [vmem:[#allocation10 + $0x50] sm:$0xff]
        %v866 = vld [vmem:[#allocation10 + $0x58] sm:$0xff]
        %v867 = vld [vmem:[#allocation10 + $0x60] sm:$0xff]
        %v868 = vld [vmem:[#allocation10 + $0x68] sm:$0xff]
        %v869 = vld [vmem:[#allocation10 + $0x70] sm:$0xff]
        %v870 = vld [vmem:[#allocation10 + $0x78] sm:$0xff]
        %v887 = vunpack.c.l.b16 %v855
        %v888 = vunpack.c.h.b16 %v855
        %v889 = vunpack.c.l.b16 %v856
        %v890 = vunpack.c.h.b16 %v856
        %v891 = vunpack.c.l.b16 %v857
        %v892 = vunpack.c.h.b16 %v857
        %v893 = vunpack.c.l.b16 %v858
        %v894 = vunpack.c.h.b16 %v858
        %v895 = vunpack.c.l.b16 %v859
        %v896 = vunpack.c.h.b16 %v859
        %v897 = vunpack.c.l.b16 %v860
        %v898 = vunpack.c.h.b16 %v860
        %v899 = vunpack.c.l.b16 %v861
        %v900 = vunpack.c.h.b16 %v861
        %v901 = vunpack.c.l.b16 %v862
        %v902 = vunpack.c.h.b16 %v862
        %v903 = vunpack.c.l.b16 %v863
        %v904 = vunpack.c.h.b16 %v863
        %v905 = vunpack.c.l.b16 %v864
        %v906 = vunpack.c.h.b16 %v864
        %v907 = vunpack.c.l.b16 %v865
        %v908 = vunpack.c.h.b16 %v865
        %v909 = vunpack.c.l.b16 %v866
        %v910 = vunpack.c.h.b16 %v866
        %v911 = vunpack.c.l.b16 %v867
        %v912 = vunpack.c.h.b16 %v867
        %v913 = vunpack.c.l.b16 %v868
        %v914 = vunpack.c.h.b16 %v868
        %v915 = vunpack.c.l.b16 %v869
        %v916 = vunpack.c.h.b16 %v869
        %v917 = vunpack.c.l.b16 %v870
        %v918 = vunpack.c.h.b16 %v870
        %v919 = vpack.c.b16 %v889, %v887
        %v920 = vpack.c.b16 %v890, %v888
        %v921 = vpack.c.b16 %v893, %v891
        %v922 = vpack.c.b16 %v894, %v892
        %v923 = vpack.c.b16 %v897, %v895
        %v924 = vpack.c.b16 %v898, %v896
        %v925 = vpack.c.b16 %v901, %v899
        %v926 = vpack.c.b16 %v902, %v900
        %v927 = vpack.c.b16 %v905, %v903
        %v928 = vpack.c.b16 %v906, %v904
        %v929 = vpack.c.b16 %v909, %v907
        %v930 = vpack.c.b16 %v910, %v908
        %v931 = vpack.c.b16 %v913, %v911
        %v932 = vpack.c.b16 %v914, %v912
        %v933 = vpack.c.b16 %v917, %v915
        %v934 = vpack.c.b16 %v918, %v916
        %951 = vmatprep.subr.bf16.mxu0 %v920
        %952 = vmatpush1.bf16.msra.mxu0 %v919
        %953 = vmatprep.subr.bf16.mxu0 %v922
        %954 = vmatpush1.bf16.msra.mxu0 %v921
        %955 = vmatprep.subr.bf16.mxu0 %v924
        %956 = vmatpush1.bf16.msra.mxu0 %v923
        %957 = vmatprep.subr.bf16.mxu0 %v926
        %958 = vmatpush1.bf16.msra.mxu0 %v925
        %959 = vmatprep.subr.bf16.mxu0 %v928
        %960 = vmatpush1.bf16.msra.mxu0 %v927
        %961 = vmatprep.subr.bf16.mxu0 %v930
        %962 = vmatpush1.bf16.msra.mxu0 %v929
        %963 = vmatprep.subr.bf16.mxu0 %v932
        %964 = vmatpush1.bf16.msra.mxu0 %v931
        %965 = vmatprep.subr.bf16.mxu0 %v934
        %966 = vmatpush1.bf16.msra.mxu0 %v933
        %967 = vmatprep.subr.bf16.mxu0 0
        %968 = vmatpush1.bf16.msra.mxu0 0
        %969 = vmatprep.subr.bf16.mxu0 0
        %970 = vmatpush1.bf16.msra.mxu0 0
        %971 = vmatprep.subr.bf16.mxu0 0
        %972 = vmatpush1.bf16.msra.mxu0 0
        %973 = vmatprep.subr.bf16.mxu0 0
        %974 = vmatpush1.bf16.msra.mxu0 0
        %975 = vmatprep.subr.bf16.mxu0 0
        %976 = vmatpush1.bf16.msra.mxu0 0
        %977 = vmatprep.subr.bf16.mxu0 0
        %978 = vmatpush1.bf16.msra.mxu0 0
        %979 = vmatprep.subr.bf16.mxu0 0
        %980 = vmatpush1.bf16.msra.mxu0 0
        %981 = vmatprep.subr.bf16.mxu0 0
        %982 = vmatpush1.bf16.msra.mxu0 0
        %983 = vmatprep.mubr.bf16.mxu0 0
        %984 = vmatmul.mubr.bf16.gmra.mrb[0].mxu0 %v854
        %v985 = vpop.f32.mrb[0].mxu0
        %v986 = vadd.f32 0.0, %v985
        %v987 = vpop.f32.mrb[0].mxu0
        %v988 = vadd.f32 0.0, %v987
        %v989 = vpop.f32.mrb[0].mxu0
        %v990 = vadd.f32 0.0, %v989
        %v991 = vpop.f32.mrb[0].mxu0
        %v992 = vadd.f32 0.0, %v991
        %993 = vdwg.mxu0
        %v994 = vpack.c.bf16 %v841, %v840
        %v995 = vld [vmem:[#allocation11] sm:$0xf]
        %v996 = vld [vmem:[#allocation11 + $0x4] sm:$0xf]
        %v997 = vld [vmem:[#allocation11 + $0x8] sm:$0xf]
        %v998 = vld [vmem:[#allocation11 + $0xc] sm:$0xf]
        %v999 = vld [vmem:[#allocation11 + $0x10] sm:$0xf]
        %v1000 = vld [vmem:[#allocation11 + $0x14] sm:$0xf]
        %v1001 = vld [vmem:[#allocation11 + $0x18] sm:$0xf]
        %v1002 = vld [vmem:[#allocation11 + $0x1c] sm:$0xf]
        %v1003 = vld [vmem:[#allocation11 + $0x20] sm:$0xf]
        %v1004 = vld [vmem:[#allocation11 + $0x24] sm:$0xf]
        %v1005 = vld [vmem:[#allocation11 + $0x28] sm:$0xf]
        %v1006 = vld [vmem:[#allocation11 + $0x2c] sm:$0xf]
        %v1007 = vld [vmem:[#allocation11 + $0x30] sm:$0xf]
        %v1008 = vld [vmem:[#allocation11 + $0x34] sm:$0xf]
        %v1009 = vld [vmem:[#allocation11 + $0x38] sm:$0xf]
        %v1010 = vld [vmem:[#allocation11 + $0x3c] sm:$0xf]
        %v1027 = vunpack.c.l.b16 %v995
        %v1028 = vunpack.c.l.b16 %v996
        %v1029 = vunpack.c.l.b16 %v997
        %v1030 = vunpack.c.l.b16 %v998
        %v1031 = vunpack.c.l.b16 %v999
        %v1032 = vunpack.c.l.b16 %v1000
        %v1033 = vunpack.c.l.b16 %v1001
        %v1034 = vunpack.c.l.b16 %v1002
        %v1035 = vunpack.c.l.b16 %v1003
        %v1036 = vunpack.c.l.b16 %v1004
        %v1037 = vunpack.c.l.b16 %v1005
        %v1038 = vunpack.c.l.b16 %v1006
        %v1039 = vunpack.c.l.b16 %v1007
        %v1040 = vunpack.c.l.b16 %v1008
        %v1041 = vunpack.c.l.b16 %v1009
        %v1042 = vunpack.c.l.b16 %v1010
        %v1043 = vpack.c.b16 %v1028, %v1027
        %v1044 = vpack.c.b16 %v1030, %v1029
        %v1045 = vpack.c.b16 %v1032, %v1031
        %v1046 = vpack.c.b16 %v1034, %v1033
        %v1047 = vpack.c.b16 %v1036, %v1035
        %v1048 = vpack.c.b16 %v1038, %v1037
        %v1049 = vpack.c.b16 %v1040, %v1039
        %v1050 = vpack.c.b16 %v1042, %v1041
        %1059 = vmatprep.subr.bf16.mxu0 0
        %1060 = vmatpush1.bf16.msra.mxu0 %v1043
        %1061 = vmatprep.subr.bf16.mxu0 0
        %1062 = vmatpush1.bf16.msra.mxu0 %v1044
        %1063 = vmatprep.subr.bf16.mxu0 0
        %1064 = vmatpush1.bf16.msra.mxu0 %v1045
        %1065 = vmatprep.subr.bf16.mxu0 0
        %1066 = vmatpush1.bf16.msra.mxu0 %v1046
        %1067 = vmatprep.subr.bf16.mxu0 0
        %1068 = vmatpush1.bf16.msra.mxu0 %v1047
        %1069 = vmatprep.subr.bf16.mxu0 0
        %1070 = vmatpush1.bf16.msra.mxu0 %v1048
        %1071 = vmatprep.subr.bf16.mxu0 0
        %1072 = vmatpush1.bf16.msra.mxu0 %v1049
        %1073 = vmatprep.subr.bf16.mxu0 0
        %1074 = vmatpush1.bf16.msra.mxu0 %v1050
        %1075 = vmatprep.subr.bf16.mxu0 0
        %1076 = vmatpush1.bf16.msra.mxu0 0
        %1077 = vmatprep.subr.bf16.mxu0 0
        %1078 = vmatpush1.bf16.msra.mxu0 0
        %1079 = vmatprep.subr.bf16.mxu0 0
        %1080 = vmatpush1.bf16.msra.mxu0 0
        %1081 = vmatprep.subr.bf16.mxu0 0
        %1082 = vmatpush1.bf16.msra.mxu0 0
        %1083 = vmatprep.subr.bf16.mxu0 0
        %1084 = vmatpush1.bf16.msra.mxu0 0
        %1085 = vmatprep.subr.bf16.mxu0 0
        %1086 = vmatpush1.bf16.msra.mxu0 0
        %1087 = vmatprep.subr.bf16.mxu0 0
        %1088 = vmatpush1.bf16.msra.mxu0 0
        %1089 = vmatprep.subr.bf16.mxu0 0
        %1090 = vmatpush1.bf16.msra.mxu0 0
        %1091 = vmatprep.mubr.bf16.mxu0 0
        %1092 = vmatmul.mubr.bf16.gmra.mrb[0].mxu0 %v994
        %v1093 = vpop.f32.mrb[0].mxu0
        %v1094 = vadd.f32 0.0, %v1093
        %v1095 = vpop.f32.mrb[0].mxu0
        %v1096 = vpop.f32.mrb[0].mxu0
        %v1097 = vadd.f32 0.0, %v1096
        %v1098 = vpop.f32.mrb[0].mxu0
        %1099 = vdwg.mxu0
        %1102 = vrot.lane.b32.xlu0 %v986, 96
        %v1103 = vpop.permute.xlu0 %1102
        %1104 = vrot.lane.b32.xlu0 %v990, 96
        %v1105 = vpop.permute.xlu0 %1104
        %1108 = vrot.lane.b32.xlu0 %v986, 64
        %v1109 = vpop.permute.xlu0 %1108
        %1110 = vrot.lane.b32.xlu0 %v990, 64
        %v1111 = vpop.permute.xlu0 %1110
        %1114 = vrot.lane.b32.xlu0 %v986, 32
        %v1115 = vpop.permute.xlu0 %1114
        %1116 = vrot.lane.b32.xlu0 %v990, 32
        %v1117 = vpop.permute.xlu0 %1116
        %v1120 = vcombine.low %v986, %v1109
        %v1121 = vcombine.high %v986, %v1109
        %v1123 = vunpack.c.l.s4 1983009808
        %v1124 = vunpack.c.0.s8 %v1123
        %v1125 = vlaneseq
        %v1126 = vshrl.u32 %v1125, 7
        %v1127 = vsub.s32 %v1124, %v1126
        %v1128 = vrot.slane %v1120, %v1127
        %v1130 = vunpack.c.l.s4 1983009808
        %v1131 = vunpack.c.0.s8 %v1130
        %v1132 = vlaneseq
        %v1133 = vshrl.u32 %v1132, 7
        %v1134 = vsub.s32 %v1131, %v1133
        %v1135 = vrot.slane %v1121, %v1134
        %v1136 = vcombine.low %v1103, %v1115
        %v1137 = vcombine.high %v1103, %v1115
        %v1139 = vunpack.c.l.s4 1983009808
        %v1140 = vunpack.c.0.s8 %v1139
        %v1141 = vlaneseq
        %v1142 = vshrl.u32 %v1141, 7
        %v1143 = vsub.s32 %v1140, %v1142
        %v1144 = vrot.slane %v1136, %v1143
        %v1146 = vunpack.c.l.s4 1983009808
        %v1147 = vunpack.c.0.s8 %v1146
        %v1148 = vlaneseq
        %v1149 = vshrl.u32 %v1148, 7
        %v1150 = vsub.s32 %v1147, %v1149
        %v1151 = vrot.slane %v1137, %v1150
        %v1152 = vcombine.low %v1128, %v1144
        %v1153 = vcombine.high %v1128, %v1144
        %v1155 = vunpack.c.l.s4 1934713408
        %v1156 = vunpack.c.0.s8 %v1155
        %v1157 = vlaneseq
        %v1158 = vshrl.u32 %v1157, 7
        %v1159 = vsub.s32 %v1156, %v1158
        %v1160 = vrot.slane %v1152, %v1159
        %v1162 = vunpack.c.l.s4 1934713408
        %v1163 = vunpack.c.0.s8 %v1162
        %v1164 = vlaneseq
        %v1165 = vshrl.u32 %v1164, 7
        %v1166 = vsub.s32 %v1163, %v1165
        %v1167 = vrot.slane %v1153, %v1166
        %v1168 = vcombine.low %v1135, %v1151
        %v1169 = vcombine.high %v1135, %v1151
        %v1171 = vunpack.c.l.s4 1934713408
        %v1172 = vunpack.c.0.s8 %v1171
        %v1173 = vlaneseq
        %v1174 = vshrl.u32 %v1173, 7
        %v1175 = vsub.s32 %v1172, %v1174
        %v1176 = vrot.slane %v1168, %v1175
        %v1178 = vunpack.c.l.s4 1934713408
        %v1179 = vunpack.c.0.s8 %v1178
        %v1180 = vlaneseq
        %v1181 = vshrl.u32 %v1180, 7
        %v1182 = vsub.s32 %v1179, %v1181
        %v1183 = vrot.slane %v1169, %v1182
        %v1184 = vcombine.high %v1160, 0.0
        %v1185 = vcombine.high %v1167, 0.0
        %v1186 = vcombine.high %v1176, 0.0
        %v1187 = vcombine.high %v1183, 0.0
        %v1188 = vcombine.low %v990, %v1111
        %v1189 = vcombine.high %v990, %v1111
        %v1191 = vunpack.c.l.s4 1983009808
        %v1192 = vunpack.c.0.s8 %v1191
        %v1193 = vlaneseq
        %v1194 = vshrl.u32 %v1193, 7
        %v1195 = vsub.s32 %v1192, %v1194
        %v1196 = vrot.slane %v1188, %v1195
        %v1198 = vunpack.c.l.s4 1983009808
        %v1199 = vunpack.c.0.s8 %v1198
        %v1200 = vlaneseq
        %v1201 = vshrl.u32 %v1200, 7
        %v1202 = vsub.s32 %v1199, %v1201
        %v1203 = vrot.slane %v1189, %v1202
        %v1204 = vcombine.low %v1105, %v1117
        %v1205 = vcombine.high %v1105, %v1117
        %v1207 = vunpack.c.l.s4 1983009808
        %v1208 = vunpack.c.0.s8 %v1207
        %v1209 = vlaneseq
        %v1210 = vshrl.u32 %v1209, 7
        %v1211 = vsub.s32 %v1208, %v1210
        %v1212 = vrot.slane %v1204, %v1211
        %v1214 = vunpack.c.l.s4 1983009808
        %v1215 = vunpack.c.0.s8 %v1214
        %v1216 = vlaneseq
        %v1217 = vshrl.u32 %v1216, 7
        %v1218 = vsub.s32 %v1215, %v1217
        %v1219 = vrot.slane %v1205, %v1218
        %v1220 = vcombine.low %v1196, %v1212
        %v1221 = vcombine.high %v1196, %v1212
        %v1223 = vunpack.c.l.s4 1934713408
        %v1224 = vunpack.c.0.s8 %v1223
        %v1225 = vlaneseq
        %v1226 = vshrl.u32 %v1225, 7
        %v1227 = vsub.s32 %v1224, %v1226
        %v1228 = vrot.slane %v1220, %v1227
        %v1230 = vunpack.c.l.s4 1934713408
        %v1231 = vunpack.c.0.s8 %v1230
        %v1232 = vlaneseq
        %v1233 = vshrl.u32 %v1232, 7
        %v1234 = vsub.s32 %v1231, %v1233
        %v1235 = vrot.slane %v1221, %v1234
        %v1236 = vcombine.low %v1203, %v1219
        %v1237 = vcombine.high %v1203, %v1219
        %v1239 = vunpack.c.l.s4 1934713408
        %v1240 = vunpack.c.0.s8 %v1239
        %v1241 = vlaneseq
        %v1242 = vshrl.u32 %v1241, 7
        %v1243 = vsub.s32 %v1240, %v1242
        %v1244 = vrot.slane %v1236, %v1243
        %v1246 = vunpack.c.l.s4 1934713408
        %v1247 = vunpack.c.0.s8 %v1246
        %v1248 = vlaneseq
        %v1249 = vshrl.u32 %v1248, 7
        %v1250 = vsub.s32 %v1247, %v1249
        %v1251 = vrot.slane %v1237, %v1250
        %v1252 = vcombine.high %v1228, 0.0
        %v1253 = vcombine.high %v1235, 0.0
        %v1254 = vcombine.high %v1244, 0.0
        %v1255 = vcombine.high %v1251, 0.0
        %v1256 = vcombine.low %v1160, %v1167
        %v1258 = vunpack.c.l.s4 1983009808
        %v1259 = vunpack.c.0.s8 %v1258
        %v1260 = vlaneseq
        %v1261 = vshrl.u32 %v1260, 7
        %v1262 = vsub.s32 %v1259, %v1261
        %v1263 = vrot.slane %v1256, %v1262
        %v1264 = vcombine.low %v1184, %v1185
        %v1266 = vunpack.c.l.s4 1983009808
        %v1267 = vunpack.c.0.s8 %v1266
        %v1268 = vlaneseq
        %v1269 = vshrl.u32 %v1268, 7
        %v1270 = vsub.s32 %v1267, %v1269
        %v1271 = vrot.slane %v1264, %v1270
        %v1272 = vcombine.low %v1176, %v1183
        %v1274 = vunpack.c.l.s4 1983009808
        %v1275 = vunpack.c.0.s8 %v1274
        %v1276 = vlaneseq
        %v1277 = vshrl.u32 %v1276, 7
        %v1278 = vsub.s32 %v1275, %v1277
        %v1279 = vrot.slane %v1272, %v1278
        %v1280 = vcombine.low %v1186, %v1187
        %v1282 = vunpack.c.l.s4 1983009808
        %v1283 = vunpack.c.0.s8 %v1282
        %v1284 = vlaneseq
        %v1285 = vshrl.u32 %v1284, 7
        %v1286 = vsub.s32 %v1283, %v1285
        %v1287 = vrot.slane %v1280, %v1286
        %v1288 = vcombine.low %v1263, %v1271
        %v1289 = vcombine.high %v1263, %v1271
        %v1291 = vunpack.c.l.s4 1934713408
        %v1292 = vunpack.c.0.s8 %v1291
        %v1293 = vlaneseq
        %v1294 = vshrl.u32 %v1293, 7
        %v1295 = vsub.s32 %v1292, %v1294
        %v1296 = vrot.slane %v1288, %v1295
        %v1298 = vunpack.c.l.s4 1934713408
        %v1299 = vunpack.c.0.s8 %v1298
        %v1300 = vlaneseq
        %v1301 = vshrl.u32 %v1300, 7
        %v1302 = vsub.s32 %v1299, %v1301
        %v1303 = vrot.slane %v1289, %v1302
        %v1304 = vcombine.low %v1279, %v1287
        %v1305 = vcombine.high %v1279, %v1287
        %v1307 = vunpack.c.l.s4 1934713408
        %v1308 = vunpack.c.0.s8 %v1307
        %v1309 = vlaneseq
        %v1310 = vshrl.u32 %v1309, 7
        %v1311 = vsub.s32 %v1308, %v1310
        %v1312 = vrot.slane %v1304, %v1311
        %v1314 = vunpack.c.l.s4 1934713408
        %v1315 = vunpack.c.0.s8 %v1314
        %v1316 = vlaneseq
        %v1317 = vshrl.u32 %v1316, 7
        %v1318 = vsub.s32 %v1315, %v1317
        %v1319 = vrot.slane %v1305, %v1318
        %v1320 = vcombine.low %v1296, %v1312
        %v1321 = vcombine.high %v1296, %v1312
        %v1322 = vcombine.low %v1303, %v1319
        %v1323 = vcombine.high %v1303, %v1319
        %v1324 = vcombine.low %v1228, %v1235
        %v1326 = vunpack.c.l.s4 1983009808
        %v1327 = vunpack.c.0.s8 %v1326
        %v1328 = vlaneseq
        %v1329 = vshrl.u32 %v1328, 7
        %v1330 = vsub.s32 %v1327, %v1329
        %v1331 = vrot.slane %v1324, %v1330
        %v1332 = vcombine.low %v1252, %v1253
        %v1334 = vunpack.c.l.s4 1983009808
        %v1335 = vunpack.c.0.s8 %v1334
        %v1336 = vlaneseq
        %v1337 = vshrl.u32 %v1336, 7
        %v1338 = vsub.s32 %v1335, %v1337
        %v1339 = vrot.slane %v1332, %v1338
        %v1340 = vcombine.low %v1244, %v1251
        %v1342 = vunpack.c.l.s4 1983009808
        %v1343 = vunpack.c.0.s8 %v1342
        %v1344 = vlaneseq
        %v1345 = vshrl.u32 %v1344, 7
        %v1346 = vsub.s32 %v1343, %v1345
        %v1347 = vrot.slane %v1340, %v1346
        %v1348 = vcombine.low %v1254, %v1255
        %v1350 = vunpack.c.l.s4 1983009808
        %v1351 = vunpack.c.0.s8 %v1350
        %v1352 = vlaneseq
        %v1353 = vshrl.u32 %v1352, 7
        %v1354 = vsub.s32 %v1351, %v1353
        %v1355 = vrot.slane %v1348, %v1354
        %v1356 = vcombine.low %v1331, %v1339
        %v1357 = vcombine.high %v1331, %v1339
        %v1359 = vunpack.c.l.s4 1934713408
        %v1360 = vunpack.c.0.s8 %v1359
        %v1361 = vlaneseq
        %v1362 = vshrl.u32 %v1361, 7
        %v1363 = vsub.s32 %v1360, %v1362
        %v1364 = vrot.slane %v1356, %v1363
        %v1366 = vunpack.c.l.s4 1934713408
        %v1367 = vunpack.c.0.s8 %v1366
        %v1368 = vlaneseq
        %v1369 = vshrl.u32 %v1368, 7
        %v1370 = vsub.s32 %v1367, %v1369
        %v1371 = vrot.slane %v1357, %v1370
        %v1372 = vcombine.low %v1347, %v1355
        %v1373 = vcombine.high %v1347, %v1355
        %v1375 = vunpack.c.l.s4 1934713408
        %v1376 = vunpack.c.0.s8 %v1375
        %v1377 = vlaneseq
        %v1378 = vshrl.u32 %v1377, 7
        %v1379 = vsub.s32 %v1376, %v1378
        %v1380 = vrot.slane %v1372, %v1379
        %v1382 = vunpack.c.l.s4 1934713408
        %v1383 = vunpack.c.0.s8 %v1382
        %v1384 = vlaneseq
        %v1385 = vshrl.u32 %v1384, 7
        %v1386 = vsub.s32 %v1383, %v1385
        %v1387 = vrot.slane %v1373, %v1386
        %v1388 = vcombine.low %v1364, %v1380
        %v1389 = vcombine.high %v1364, %v1380
        %v1390 = vcombine.low %v1371, %v1387
        %v1391 = vcombine.high %v1371, %v1387
        %v1392 = vpack.c.bf16 %v1388, %v1320
        %v1393 = vpack.c.bf16 %v1389, %v1321
        %v1394 = vpack.c.bf16 %v1390, %v1322
        %v1395 = vpack.c.bf16 %v1391, %v1323
        %1398 = vrot.lane.b32.xlu0 %v988, 96
        %v1399 = vpop.permute.xlu0 %1398
        %1400 = vrot.lane.b32.xlu0 %v992, 96
        %v1401 = vpop.permute.xlu0 %1400
        %1404 = vrot.lane.b32.xlu0 %v988, 64
        %v1405 = vpop.permute.xlu0 %1404
        %1406 = vrot.lane.b32.xlu0 %v992, 64
        %v1407 = vpop.permute.xlu0 %1406
        %1410 = vrot.lane.b32.xlu0 %v988, 32
        %v1411 = vpop.permute.xlu0 %1410
        %1412 = vrot.lane.b32.xlu0 %v992, 32
        %v1413 = vpop.permute.xlu0 %1412
        %v1416 = vcombine.low %v988, %v1405
        %v1417 = vcombine.high %v988, %v1405
        %v1419 = vunpack.c.l.s4 1983009808
        %v1420 = vunpack.c.0.s8 %v1419
        %v1421 = vlaneseq
        %v1422 = vshrl.u32 %v1421, 7
        %v1423 = vsub.s32 %v1420, %v1422
        %v1424 = vrot.slane %v1416, %v1423
        %v1426 = vunpack.c.l.s4 1983009808
        %v1427 = vunpack.c.0.s8 %v1426
        %v1428 = vlaneseq
        %v1429 = vshrl.u32 %v1428, 7
        %v1430 = vsub.s32 %v1427, %v1429
        %v1431 = vrot.slane %v1417, %v1430
        %v1432 = vcombine.low %v1399, %v1411
        %v1433 = vcombine.high %v1399, %v1411
        %v1435 = vunpack.c.l.s4 1983009808
        %v1436 = vunpack.c.0.s8 %v1435
        %v1437 = vlaneseq
        %v1438 = vshrl.u32 %v1437, 7
        %v1439 = vsub.s32 %v1436, %v1438
        %v1440 = vrot.slane %v1432, %v1439
        %v1442 = vunpack.c.l.s4 1983009808
        %v1443 = vunpack.c.0.s8 %v1442
        %v1444 = vlaneseq
        %v1445 = vshrl.u32 %v1444, 7
        %v1446 = vsub.s32 %v1443, %v1445
        %v1447 = vrot.slane %v1433, %v1446
        %v1448 = vcombine.low %v1424, %v1440
        %v1449 = vcombine.high %v1424, %v1440
        %v1451 = vunpack.c.l.s4 1934713408
        %v1452 = vunpack.c.0.s8 %v1451
        %v1453 = vlaneseq
        %v1454 = vshrl.u32 %v1453, 7
        %v1455 = vsub.s32 %v1452, %v1454
        %v1456 = vrot.slane %v1448, %v1455
        %v1458 = vunpack.c.l.s4 1934713408
        %v1459 = vunpack.c.0.s8 %v1458
        %v1460 = vlaneseq
        %v1461 = vshrl.u32 %v1460, 7
        %v1462 = vsub.s32 %v1459, %v1461
        %v1463 = vrot.slane %v1449, %v1462
        %v1464 = vcombine.low %v1431, %v1447
        %v1465 = vcombine.high %v1431, %v1447
        %v1467 = vunpack.c.l.s4 1934713408
        %v1468 = vunpack.c.0.s8 %v1467
        %v1469 = vlaneseq
        %v1470 = vshrl.u32 %v1469, 7
        %v1471 = vsub.s32 %v1468, %v1470
        %v1472 = vrot.slane %v1464, %v1471
        %v1474 = vunpack.c.l.s4 1934713408
        %v1475 = vunpack.c.0.s8 %v1474
        %v1476 = vlaneseq
        %v1477 = vshrl.u32 %v1476, 7
        %v1478 = vsub.s32 %v1475, %v1477
        %v1479 = vrot.slane %v1465, %v1478
        %v1480 = vcombine.high %v1456, 0.0
        %v1481 = vcombine.high %v1463, 0.0
        %v1482 = vcombine.high %v1472, 0.0
        %v1483 = vcombine.high %v1479, 0.0
        %v1484 = vcombine.low %v992, %v1407
        %v1485 = vcombine.high %v992, %v1407
        %v1487 = vunpack.c.l.s4 1983009808
        %v1488 = vunpack.c.0.s8 %v1487
        %v1489 = vlaneseq
        %v1490 = vshrl.u32 %v1489, 7
        %v1491 = vsub.s32 %v1488, %v1490
        %v1492 = vrot.slane %v1484, %v1491
        %v1494 = vunpack.c.l.s4 1983009808
        %v1495 = vunpack.c.0.s8 %v1494
        %v1496 = vlaneseq
        %v1497 = vshrl.u32 %v1496, 7
        %v1498 = vsub.s32 %v1495, %v1497
        %v1499 = vrot.slane %v1485, %v1498
        %v1500 = vcombine.low %v1401, %v1413
        %v1501 = vcombine.high %v1401, %v1413
        %v1503 = vunpack.c.l.s4 1983009808
        %v1504 = vunpack.c.0.s8 %v1503
        %v1505 = vlaneseq
        %v1506 = vshrl.u32 %v1505, 7
        %v1507 = vsub.s32 %v1504, %v1506
        %v1508 = vrot.slane %v1500, %v1507
        %v1510 = vunpack.c.l.s4 1983009808
        %v1511 = vunpack.c.0.s8 %v1510
        %v1512 = vlaneseq
        %v1513 = vshrl.u32 %v1512, 7
        %v1514 = vsub.s32 %v1511, %v1513
        %v1515 = vrot.slane %v1501, %v1514
        %v1516 = vcombine.low %v1492, %v1508
        %v1517 = vcombine.high %v1492, %v1508
        %v1519 = vunpack.c.l.s4 1934713408
        %v1520 = vunpack.c.0.s8 %v1519
        %v1521 = vlaneseq
        %v1522 = vshrl.u32 %v1521, 7
        %v1523 = vsub.s32 %v1520, %v1522
        %v1524 = vrot.slane %v1516, %v1523
        %v1526 = vunpack.c.l.s4 1934713408
        %v1527 = vunpack.c.0.s8 %v1526
        %v1528 = vlaneseq
        %v1529 = vshrl.u32 %v1528, 7
        %v1530 = vsub.s32 %v1527, %v1529
        %v1531 = vrot.slane %v1517, %v1530
        %v1532 = vcombine.low %v1499, %v1515
        %v1533 = vcombine.high %v1499, %v1515
        %v1535 = vunpack.c.l.s4 1934713408
        %v1536 = vunpack.c.0.s8 %v1535
        %v1537 = vlaneseq
        %v1538 = vshrl.u32 %v1537, 7
        %v1539 = vsub.s32 %v1536, %v1538
        %v1540 = vrot.slane %v1532, %v1539
        %v1542 = vunpack.c.l.s4 1934713408
        %v1543 = vunpack.c.0.s8 %v1542
        %v1544 = vlaneseq
        %v1545 = vshrl.u32 %v1544, 7
        %v1546 = vsub.s32 %v1543, %v1545
        %v1547 = vrot.slane %v1533, %v1546
        %v1548 = vcombine.high %v1524, 0.0
        %v1549 = vcombine.high %v1531, 0.0
        %v1550 = vcombine.high %v1540, 0.0
        %v1551 = vcombine.high %v1547, 0.0
        %v1552 = vcombine.low %v1456, %v1463
        %v1554 = vunpack.c.l.s4 1983009808
        %v1555 = vunpack.c.0.s8 %v1554
        %v1556 = vlaneseq
        %v1557 = vshrl.u32 %v1556, 7
        %v1558 = vsub.s32 %v1555, %v1557
        %v1559 = vrot.slane %v1552, %v1558
        %v1560 = vcombine.low %v1480, %v1481
        %v1562 = vunpack.c.l.s4 1983009808
        %v1563 = vunpack.c.0.s8 %v1562
        %v1564 = vlaneseq
        %v1565 = vshrl.u32 %v1564, 7
        %v1566 = vsub.s32 %v1563, %v1565
        %v1567 = vrot.slane %v1560, %v1566
        %v1568 = vcombine.low %v1472, %v1479
        %v1570 = vunpack.c.l.s4 1983009808
        %v1571 = vunpack.c.0.s8 %v1570
        %v1572 = vlaneseq
        %v1573 = vshrl.u32 %v1572, 7
        %v1574 = vsub.s32 %v1571, %v1573
        %v1575 = vrot.slane %v1568, %v1574
        %v1576 = vcombine.low %v1482, %v1483
        %v1578 = vunpack.c.l.s4 1983009808
        %v1579 = vunpack.c.0.s8 %v1578
        %v1580 = vlaneseq
        %v1581 = vshrl.u32 %v1580, 7
        %v1582 = vsub.s32 %v1579, %v1581
        %v1583 = vrot.slane %v1576, %v1582
        %v1584 = vcombine.low %v1559, %v1567
        %v1585 = vcombine.high %v1559, %v1567
        %v1587 = vunpack.c.l.s4 1934713408
        %v1588 = vunpack.c.0.s8 %v1587
        %v1589 = vlaneseq
        %v1590 = vshrl.u32 %v1589, 7
        %v1591 = vsub.s32 %v1588, %v1590
        %v1592 = vrot.slane %v1584, %v1591
        %v1594 = vunpack.c.l.s4 1934713408
        %v1595 = vunpack.c.0.s8 %v1594
        %v1596 = vlaneseq
        %v1597 = vshrl.u32 %v1596, 7
        %v1598 = vsub.s32 %v1595, %v1597
        %v1599 = vrot.slane %v1585, %v1598
        %v1600 = vcombine.low %v1575, %v1583
        %v1601 = vcombine.high %v1575, %v1583
        %v1603 = vunpack.c.l.s4 1934713408
        %v1604 = vunpack.c.0.s8 %v1603
        %v1605 = vlaneseq
        %v1606 = vshrl.u32 %v1605, 7
        %v1607 = vsub.s32 %v1604, %v1606
        %v1608 = vrot.slane %v1600, %v1607
        %v1610 = vunpack.c.l.s4 1934713408
        %v1611 = vunpack.c.0.s8 %v1610
        %v1612 = vlaneseq
        %v1613 = vshrl.u32 %v1612, 7
        %v1614 = vsub.s32 %v1611, %v1613
        %v1615 = vrot.slane %v1601, %v1614
        %v1616 = vcombine.low %v1592, %v1608
        %v1617 = vcombine.high %v1592, %v1608
        %v1618 = vcombine.low %v1599, %v1615
        %v1619 = vcombine.high %v1599, %v1615
        %v1620 = vcombine.low %v1524, %v1531
        %v1622 = vunpack.c.l.s4 1983009808
        %v1623 = vunpack.c.0.s8 %v1622
        %v1624 = vlaneseq
        %v1625 = vshrl.u32 %v1624, 7
        %v1626 = vsub.s32 %v1623, %v1625
        %v1627 = vrot.slane %v1620, %v1626
        %v1628 = vcombine.low %v1548, %v1549
        %v1630 = vunpack.c.l.s4 1983009808
        %v1631 = vunpack.c.0.s8 %v1630
        %v1632 = vlaneseq
        %v1633 = vshrl.u32 %v1632, 7
        %v1634 = vsub.s32 %v1631, %v1633
        %v1635 = vrot.slane %v1628, %v1634
        %v1636 = vcombine.low %v1540, %v1547
        %v1638 = vunpack.c.l.s4 1983009808
        %v1639 = vunpack.c.0.s8 %v1638
        %v1640 = vlaneseq
        %v1641 = vshrl.u32 %v1640, 7
        %v1642 = vsub.s32 %v1639, %v1641
        %v1643 = vrot.slane %v1636, %v1642
        %v1644 = vcombine.low %v1550, %v1551
        %v1646 = vunpack.c.l.s4 1983009808
        %v1647 = vunpack.c.0.s8 %v1646
        %v1648 = vlaneseq
        %v1649 = vshrl.u32 %v1648, 7
        %v1650 = vsub.s32 %v1647, %v1649
        %v1651 = vrot.slane %v1644, %v1650
        %v1652 = vcombine.low %v1627, %v1635
        %v1653 = vcombine.high %v1627, %v1635
        %v1655 = vunpack.c.l.s4 1934713408
        %v1656 = vunpack.c.0.s8 %v1655
        %v1657 = vlaneseq
        %v1658 = vshrl.u32 %v1657, 7
        %v1659 = vsub.s32 %v1656, %v1658
        %v1660 = vrot.slane %v1652, %v1659
        %v1662 = vunpack.c.l.s4 1934713408
        %v1663 = vunpack.c.0.s8 %v1662
        %v1664 = vlaneseq
        %v1665 = vshrl.u32 %v1664, 7
        %v1666 = vsub.s32 %v1663, %v1665
        %v1667 = vrot.slane %v1653, %v1666
        %v1668 = vcombine.low %v1643, %v1651
        %v1669 = vcombine.high %v1643, %v1651
        %v1671 = vunpack.c.l.s4 1934713408
        %v1672 = vunpack.c.0.s8 %v1671
        %v1673 = vlaneseq
        %v1674 = vshrl.u32 %v1673, 7
        %v1675 = vsub.s32 %v1672, %v1674
        %v1676 = vrot.slane %v1668, %v1675
        %v1678 = vunpack.c.l.s4 1934713408
        %v1679 = vunpack.c.0.s8 %v1678
        %v1680 = vlaneseq
        %v1681 = vshrl.u32 %v1680, 7
        %v1682 = vsub.s32 %v1679, %v1681
        %v1683 = vrot.slane %v1669, %v1682
        %v1684 = vcombine.low %v1660, %v1676
        %v1685 = vcombine.high %v1660, %v1676
        %v1686 = vcombine.low %v1667, %v1683
        %v1687 = vcombine.high %v1667, %v1683
        %v1688 = vpack.c.bf16 %v1684, %v1616
        %v1689 = vpack.c.bf16 %v1685, %v1617
        %v1690 = vpack.c.bf16 %v1686, %v1618
        %v1691 = vpack.c.bf16 %v1687, %v1619
        %1694 = vrot.lane.b32.xlu0 %v1094, 96
        %v1695 = vpop.permute.xlu0 %1694
        %1696 = vrot.lane.b32.xlu0 %v1097, 96
        %v1697 = vpop.permute.xlu0 %1696
        %1700 = vrot.lane.b32.xlu0 %v1094, 64
        %v1701 = vpop.permute.xlu0 %1700
        %1702 = vrot.lane.b32.xlu0 %v1097, 64
        %v1703 = vpop.permute.xlu0 %1702
        %1706 = vrot.lane.b32.xlu0 %v1094, 32
        %v1707 = vpop.permute.xlu0 %1706
        %1708 = vrot.lane.b32.xlu0 %v1097, 32
        %v1709 = vpop.permute.xlu0 %1708
        %v1712 = vcombine.low %v1094, %v1701
        %v1713 = vcombine.high %v1094, %v1701
        %v1715 = vunpack.c.l.s4 1983009808
        %v1716 = vunpack.c.0.s8 %v1715
        %v1717 = vlaneseq
        %v1718 = vshrl.u32 %v1717, 7
        %v1719 = vsub.s32 %v1716, %v1718
        %v1720 = vrot.slane %v1712, %v1719
        %v1722 = vunpack.c.l.s4 1983009808
        %v1723 = vunpack.c.0.s8 %v1722
        %v1724 = vlaneseq
        %v1725 = vshrl.u32 %v1724, 7
        %v1726 = vsub.s32 %v1723, %v1725
        %v1727 = vrot.slane %v1713, %v1726
        %v1728 = vcombine.low %v1695, %v1707
        %v1729 = vcombine.high %v1695, %v1707
        %v1731 = vunpack.c.l.s4 1983009808
        %v1732 = vunpack.c.0.s8 %v1731
        %v1733 = vlaneseq
        %v1734 = vshrl.u32 %v1733, 7
        %v1735 = vsub.s32 %v1732, %v1734
        %v1736 = vrot.slane %v1728, %v1735
        %v1738 = vunpack.c.l.s4 1983009808
        %v1739 = vunpack.c.0.s8 %v1738
        %v1740 = vlaneseq
        %v1741 = vshrl.u32 %v1740, 7
        %v1742 = vsub.s32 %v1739, %v1741
        %v1743 = vrot.slane %v1729, %v1742
        %v1744 = vcombine.low %v1720, %v1736
        %v1745 = vcombine.high %v1720, %v1736
        %v1747 = vunpack.c.l.s4 1934713408
        %v1748 = vunpack.c.0.s8 %v1747
        %v1749 = vlaneseq
        %v1750 = vshrl.u32 %v1749, 7
        %v1751 = vsub.s32 %v1748, %v1750
        %v1752 = vrot.slane %v1744, %v1751
        %v1754 = vunpack.c.l.s4 1934713408
        %v1755 = vunpack.c.0.s8 %v1754
        %v1756 = vlaneseq
        %v1757 = vshrl.u32 %v1756, 7
        %v1758 = vsub.s32 %v1755, %v1757
        %v1759 = vrot.slane %v1745, %v1758
        %v1760 = vcombine.low %v1727, %v1743
        %v1761 = vcombine.high %v1727, %v1743
        %v1763 = vunpack.c.l.s4 1934713408
        %v1764 = vunpack.c.0.s8 %v1763
        %v1765 = vlaneseq
        %v1766 = vshrl.u32 %v1765, 7
        %v1767 = vsub.s32 %v1764, %v1766
        %v1768 = vrot.slane %v1760, %v1767
        %v1770 = vunpack.c.l.s4 1934713408
        %v1771 = vunpack.c.0.s8 %v1770
        %v1772 = vlaneseq
        %v1773 = vshrl.u32 %v1772, 7
        %v1774 = vsub.s32 %v1771, %v1773
        %v1775 = vrot.slane %v1761, %v1774
        %v1776 = vcombine.high %v1752, 0.0
        %v1777 = vcombine.high %v1759, 0.0
        %v1778 = vcombine.high %v1768, 0.0
        %v1779 = vcombine.high %v1775, 0.0
        %v1780 = vcombine.low %v1097, %v1703
        %v1781 = vcombine.high %v1097, %v1703
        %v1783 = vunpack.c.l.s4 1983009808
        %v1784 = vunpack.c.0.s8 %v1783
        %v1785 = vlaneseq
        %v1786 = vshrl.u32 %v1785, 7
        %v1787 = vsub.s32 %v1784, %v1786
        %v1788 = vrot.slane %v1780, %v1787
        %v1790 = vunpack.c.l.s4 1983009808
        %v1791 = vunpack.c.0.s8 %v1790
        %v1792 = vlaneseq
        %v1793 = vshrl.u32 %v1792, 7
        %v1794 = vsub.s32 %v1791, %v1793
        %v1795 = vrot.slane %v1781, %v1794
        %v1796 = vcombine.low %v1697, %v1709
        %v1797 = vcombine.high %v1697, %v1709
        %v1799 = vunpack.c.l.s4 1983009808
        %v1800 = vunpack.c.0.s8 %v1799
        %v1801 = vlaneseq
        %v1802 = vshrl.u32 %v1801, 7
        %v1803 = vsub.s32 %v1800, %v1802
        %v1804 = vrot.slane %v1796, %v1803
        %v1806 = vunpack.c.l.s4 1983009808
        %v1807 = vunpack.c.0.s8 %v1806
        %v1808 = vlaneseq
        %v1809 = vshrl.u32 %v1808, 7
        %v1810 = vsub.s32 %v1807, %v1809
        %v1811 = vrot.slane %v1797, %v1810
        %v1812 = vcombine.low %v1788, %v1804
        %v1813 = vcombine.high %v1788, %v1804
        %v1815 = vunpack.c.l.s4 1934713408
        %v1816 = vunpack.c.0.s8 %v1815
        %v1817 = vlaneseq
        %v1818 = vshrl.u32 %v1817, 7
        %v1819 = vsub.s32 %v1816, %v1818
        %v1820 = vrot.slane %v1812, %v1819
        %v1822 = vunpack.c.l.s4 1934713408
        %v1823 = vunpack.c.0.s8 %v1822
        %v1824 = vlaneseq
        %v1825 = vshrl.u32 %v1824, 7
        %v1826 = vsub.s32 %v1823, %v1825
        %v1827 = vrot.slane %v1813, %v1826
        %v1828 = vcombine.low %v1795, %v1811
        %v1829 = vcombine.high %v1795, %v1811
        %v1831 = vunpack.c.l.s4 1934713408
        %v1832 = vunpack.c.0.s8 %v1831
        %v1833 = vlaneseq
        %v1834 = vshrl.u32 %v1833, 7
        %v1835 = vsub.s32 %v1832, %v1834
        %v1836 = vrot.slane %v1828, %v1835
        %v1838 = vunpack.c.l.s4 1934713408
        %v1839 = vunpack.c.0.s8 %v1838
        %v1840 = vlaneseq
        %v1841 = vshrl.u32 %v1840, 7
        %v1842 = vsub.s32 %v1839, %v1841
        %v1843 = vrot.slane %v1829, %v1842
        %v1844 = vcombine.high %v1820, 0.0
        %v1845 = vcombine.high %v1827, 0.0
        %v1846 = vcombine.high %v1836, 0.0
        %v1847 = vcombine.high %v1843, 0.0
        %v1848 = vcombine.low %v1752, %v1759
        %v1850 = vunpack.c.l.s4 1983009808
        %v1851 = vunpack.c.0.s8 %v1850
        %v1852 = vlaneseq
        %v1853 = vshrl.u32 %v1852, 7
        %v1854 = vsub.s32 %v1851, %v1853
        %v1855 = vrot.slane %v1848, %v1854
        %v1856 = vcombine.low %v1776, %v1777
        %v1858 = vunpack.c.l.s4 1983009808
        %v1859 = vunpack.c.0.s8 %v1858
        %v1860 = vlaneseq
        %v1861 = vshrl.u32 %v1860, 7
        %v1862 = vsub.s32 %v1859, %v1861
        %v1863 = vrot.slane %v1856, %v1862
        %v1864 = vcombine.low %v1768, %v1775
        %v1866 = vunpack.c.l.s4 1983009808
        %v1867 = vunpack.c.0.s8 %v1866
        %v1868 = vlaneseq
        %v1869 = vshrl.u32 %v1868, 7
        %v1870 = vsub.s32 %v1867, %v1869
        %v1871 = vrot.slane %v1864, %v1870
        %v1872 = vcombine.low %v1778, %v1779
        %v1874 = vunpack.c.l.s4 1983009808
        %v1875 = vunpack.c.0.s8 %v1874
        %v1876 = vlaneseq
        %v1877 = vshrl.u32 %v1876, 7
        %v1878 = vsub.s32 %v1875, %v1877
        %v1879 = vrot.slane %v1872, %v1878
        %v1880 = vcombine.low %v1855, %v1863
        %v1881 = vcombine.high %v1855, %v1863
        %v1883 = vunpack.c.l.s4 1934713408
        %v1884 = vunpack.c.0.s8 %v1883
        %v1885 = vlaneseq
        %v1886 = vshrl.u32 %v1885, 7
        %v1887 = vsub.s32 %v1884, %v1886
        %v1888 = vrot.slane %v1880, %v1887
        %v1890 = vunpack.c.l.s4 1934713408
        %v1891 = vunpack.c.0.s8 %v1890
        %v1892 = vlaneseq
        %v1893 = vshrl.u32 %v1892, 7
        %v1894 = vsub.s32 %v1891, %v1893
        %v1895 = vrot.slane %v1881, %v1894
        %v1896 = vcombine.low %v1871, %v1879
        %v1897 = vcombine.high %v1871, %v1879
        %v1899 = vunpack.c.l.s4 1934713408
        %v1900 = vunpack.c.0.s8 %v1899
        %v1901 = vlaneseq
        %v1902 = vshrl.u32 %v1901, 7
        %v1903 = vsub.s32 %v1900, %v1902
        %v1904 = vrot.slane %v1896, %v1903
        %v1906 = vunpack.c.l.s4 1934713408
        %v1907 = vunpack.c.0.s8 %v1906
        %v1908 = vlaneseq
        %v1909 = vshrl.u32 %v1908, 7
        %v1910 = vsub.s32 %v1907, %v1909
        %v1911 = vrot.slane %v1897, %v1910
        %v1912 = vcombine.low %v1888, %v1904
        %v1913 = vcombine.high %v1888, %v1904
        %v1914 = vcombine.low %v1895, %v1911
        %v1915 = vcombine.high %v1895, %v1911
        %v1916 = vcombine.low %v1820, %v1827
        %v1918 = vunpack.c.l.s4 1983009808
        %v1919 = vunpack.c.0.s8 %v1918
        %v1920 = vlaneseq
        %v1921 = vshrl.u32 %v1920, 7
        %v1922 = vsub.s32 %v1919, %v1921
        %v1923 = vrot.slane %v1916, %v1922
        %v1924 = vcombine.low %v1844, %v1845
        %v1926 = vunpack.c.l.s4 1983009808
        %v1927 = vunpack.c.0.s8 %v1926
        %v1928 = vlaneseq
        %v1929 = vshrl.u32 %v1928, 7
        %v1930 = vsub.s32 %v1927, %v1929
        %v1931 = vrot.slane %v1924, %v1930
        %v1932 = vcombine.low %v1836, %v1843
        %v1934 = vunpack.c.l.s4 1983009808
        %v1935 = vunpack.c.0.s8 %v1934
        %v1936 = vlaneseq
        %v1937 = vshrl.u32 %v1936, 7
        %v1938 = vsub.s32 %v1935, %v1937
        %v1939 = vrot.slane %v1932, %v1938
        %v1940 = vcombine.low %v1846, %v1847
        %v1942 = vunpack.c.l.s4 1983009808
        %v1943 = vunpack.c.0.s8 %v1942
        %v1944 = vlaneseq
        %v1945 = vshrl.u32 %v1944, 7
        %v1946 = vsub.s32 %v1943, %v1945
        %v1947 = vrot.slane %v1940, %v1946
        %v1948 = vcombine.low %v1923, %v1931
        %v1949 = vcombine.high %v1923, %v1931
        %v1951 = vunpack.c.l.s4 1934713408
        %v1952 = vunpack.c.0.s8 %v1951
        %v1953 = vlaneseq
        %v1954 = vshrl.u32 %v1953, 7
        %v1955 = vsub.s32 %v1952, %v1954
        %v1956 = vrot.slane %v1948, %v1955
        %v1958 = vunpack.c.l.s4 1934713408
        %v1959 = vunpack.c.0.s8 %v1958
        %v1960 = vlaneseq
        %v1961 = vshrl.u32 %v1960, 7
        %v1962 = vsub.s32 %v1959, %v1961
        %v1963 = vrot.slane %v1949, %v1962
        %v1964 = vcombine.low %v1939, %v1947
        %v1965 = vcombine.high %v1939, %v1947
        %v1967 = vunpack.c.l.s4 1934713408
        %v1968 = vunpack.c.0.s8 %v1967
        %v1969 = vlaneseq
        %v1970 = vshrl.u32 %v1969, 7
        %v1971 = vsub.s32 %v1968, %v1970
        %v1972 = vrot.slane %v1964, %v1971
        %v1974 = vunpack.c.l.s4 1934713408
        %v1975 = vunpack.c.0.s8 %v1974
        %v1976 = vlaneseq
        %v1977 = vshrl.u32 %v1976, 7
        %v1978 = vsub.s32 %v1975, %v1977
        %v1979 = vrot.slane %v1965, %v1978
        %v1980 = vcombine.low %v1956, %v1972
        %v1981 = vcombine.high %v1956, %v1972
        %v1982 = vcombine.low %v1963, %v1979
        %v1983 = vcombine.high %v1963, %v1979
        %v1984 = vpack.c.bf16 %v1980, %v1912
        %v1985 = vpack.c.bf16 %v1981, %v1913
        %v1986 = vpack.c.bf16 %v1982, %v1914
        %v1987 = vpack.c.bf16 %v1983, %v1915
        %vm1988 = vcmask 261120
        %v1990 = vsel %vm1988, %v1392, 0
        %v1993 = vsel %vm1988, %v1688, 0
        %1995 = vmatprep.subr.bf16.mxu0 0
        %1996 = vmatpush1.bf16.xpose.msra.mxu0 %v1993
        %1997 = vmatprep.subr.bf16.mxu0 0
        %1998 = vmatpush1.bf16.xpose.msra.mxu0 0
        %1999 = vmatprep.subr.bf16.mxu0 0
        %2000 = vmatpush1.bf16.xpose.msra.mxu0 0
        %2001 = vmatprep.subr.bf16.mxu0 0
        %2002 = vmatpush1.bf16.xpose.msra.mxu0 0
        %2003 = vmatprep.subr.bf16.mxu0 0
        %2004 = vmatpush1.bf16.xpose.msra.mxu0 0
        %2005 = vmatprep.subr.bf16.mxu0 0
        %2006 = vmatpush1.bf16.xpose.msra.mxu0 0
        %2007 = vmatprep.subr.bf16.mxu0 0
        %2008 = vmatpush1.bf16.xpose.msra.mxu0 0
        %2009 = vmatprep.subr.bf16.mxu0 0
        %2010 = vmatpush1.bf16.xpose.msra.mxu0 0
        %2011 = vmatprep.subr.bf16.mxu0 0
        %2012 = vmatpush1.bf16.xpose.msra.mxu0 0
        %2013 = vmatprep.subr.bf16.mxu0 0
        %2014 = vmatpush1.bf16.xpose.msra.mxu0 0
        %2015 = vmatprep.subr.bf16.mxu0 0
        %2016 = vmatpush1.bf16.xpose.msra.mxu0 0
        %2017 = vmatprep.subr.bf16.mxu0 0
        %2018 = vmatpush1.bf16.xpose.msra.mxu0 0
        %2019 = vmatprep.subr.bf16.mxu0 0
        %2020 = vmatpush1.bf16.xpose.msra.mxu0 0
        %2021 = vmatprep.subr.bf16.mxu0 0
        %2022 = vmatpush1.bf16.xpose.msra.mxu0 0
        %2023 = vmatprep.subr.bf16.mxu0 0
        %2024 = vmatpush1.bf16.xpose.msra.mxu0 0
        %2025 = vmatprep.subr.bf16.mxu0 0
        %2026 = vmatpush1.bf16.xpose.msra.mxu0 0
        %2027 = vmatprep.mubr.bf16.mxu0 0
        %2028 = vmatmul.mubr.bf16.gmra.mrb[0].mxu0 %v1990
        %v2029 = vpop.f32.mrb[0].mxu0
        %v2030 = vadd.f32 0.0, %v2029
        %v2031 = vpop.f32.mrb[0].mxu0
        %v2032 = vpop.f32.mrb[0].mxu0
        %v2033 = vadd.f32 0.0, %v2032
        %v2034 = vpop.f32.mrb[0].mxu0
        %2035 = vdwg.mxu0
        %v2037 = vsel %vm1988, %v1393, 0
        %v2040 = vsel %vm1988, %v1689, 0
        %2042 = vmatprep.subr.bf16.mxu0 0
        %2043 = vmatpush1.bf16.xpose.msra.mxu0 %v2040
        %2044 = vmatprep.subr.bf16.mxu0 0
        %2045 = vmatpush1.bf16.xpose.msra.mxu0 0
        %2046 = vmatprep.subr.bf16.mxu0 0
        %2047 = vmatpush1.bf16.xpose.msra.mxu0 0
        %2048 = vmatprep.subr.bf16.mxu0 0
        %2049 = vmatpush1.bf16.xpose.msra.mxu0 0
        %2050 = vmatprep.subr.bf16.mxu0 0
        %2051 = vmatpush1.bf16.xpose.msra.mxu0 0
        %2052 = vmatprep.subr.bf16.mxu0 0
        %2053 = vmatpush1.bf16.xpose.msra.mxu0 0
        %2054 = vmatprep.subr.bf16.mxu0 0
        %2055 = vmatpush1.bf16.xpose.msra.mxu0 0
        %2056 = vmatprep.subr.bf16.mxu0 0
        %2057 = vmatpush1.bf16.xpose.msra.mxu0 0
        %2058 = vmatprep.subr.bf16.mxu0 0
        %2059 = vmatpush1.bf16.xpose.msra.mxu0 0
        %2060 = vmatprep.subr.bf16.mxu0 0
        %2061 = vmatpush1.bf16.xpose.msra.mxu0 0
        %2062 = vmatprep.subr.bf16.mxu0 0
        %2063 = vmatpush1.bf16.xpose.msra.mxu0 0
        %2064 = vmatprep.subr.bf16.mxu0 0
        %2065 = vmatpush1.bf16.xpose.msra.mxu0 0
        %2066 = vmatprep.subr.bf16.mxu0 0
        %2067 = vmatpush1.bf16.xpose.msra.mxu0 0
        %2068 = vmatprep.subr.bf16.mxu0 0
        %2069 = vmatpush1.bf16.xpose.msra.mxu0 0
        %2070 = vmatprep.subr.bf16.mxu0 0
        %2071 = vmatpush1.bf16.xpose.msra.mxu0 0
        %2072 = vmatprep.subr.bf16.mxu0 0
        %2073 = vmatpush1.bf16.xpose.msra.mxu0 0
        %2074 = vmatprep.mubr.bf16.mxu0 0
        %2075 = vmatmul.mubr.bf16.gmra.mrb[0].mxu0 %v2037
        %v2076 = vpop.f32.mrb[0].mxu0
        %v2077 = vadd.f32 0.0, %v2076
        %v2078 = vpop.f32.mrb[0].mxu0
        %v2079 = vpop.f32.mrb[0].mxu0
        %v2080 = vadd.f32 0.0, %v2079
        %v2081 = vpop.f32.mrb[0].mxu0
        %2082 = vdwg.mxu0
        %v2084 = vsel %vm1988, %v1394, 0
        %v2087 = vsel %vm1988, %v1690, 0
        %2089 = vmatprep.subr.bf16.mxu0 0
        %2090 = vmatpush1.bf16.xpose.msra.mxu0 %v2087
        %2091 = vmatprep.subr.bf16.mxu0 0
        %2092 = vmatpush1.bf16.xpose.msra.mxu0 0
        %2093 = vmatprep.subr.bf16.mxu0 0
        %2094 = vmatpush1.bf16.xpose.msra.mxu0 0
        %2095 = vmatprep.subr.bf16.mxu0 0
        %2096 = vmatpush1.bf16.xpose.msra.mxu0 0
        %2097 = vmatprep.subr.bf16.mxu0 0
        %2098 = vmatpush1.bf16.xpose.msra.mxu0 0
        %2099 = vmatprep.subr.bf16.mxu0 0
        %2100 = vmatpush1.bf16.xpose.msra.mxu0 0
        %2101 = vmatprep.subr.bf16.mxu0 0
        %2102 = vmatpush1.bf16.xpose.msra.mxu0 0
        %2103 = vmatprep.subr.bf16.mxu0 0
        %2104 = vmatpush1.bf16.xpose.msra.mxu0 0
        %2105 = vmatprep.subr.bf16.mxu0 0
        %2106 = vmatpush1.bf16.xpose.msra.mxu0 0
        %2107 = vmatprep.subr.bf16.mxu0 0
        %2108 = vmatpush1.bf16.xpose.msra.mxu0 0
        %2109 = vmatprep.subr.bf16.mxu0 0
        %2110 = vmatpush1.bf16.xpose.msra.mxu0 0
        %2111 = vmatprep.subr.bf16.mxu0 0
        %2112 = vmatpush1.bf16.xpose.msra.mxu0 0
        %2113 = vmatprep.subr.bf16.mxu0 0
        %2114 = vmatpush1.bf16.xpose.msra.mxu0 0
        %2115 = vmatprep.subr.bf16.mxu0 0
        %2116 = vmatpush1.bf16.xpose.msra.mxu0 0
        %2117 = vmatprep.subr.bf16.mxu0 0
        %2118 = vmatpush1.bf16.xpose.msra.mxu0 0
        %2119 = vmatprep.subr.bf16.mxu0 0
        %2120 = vmatpush1.bf16.xpose.msra.mxu0 0
        %2121 = vmatprep.mubr.bf16.mxu0 0
        %2122 = vmatmul.mubr.bf16.gmra.mrb[0].mxu0 %v2084
        %v2123 = vpop.f32.mrb[0].mxu0
        %v2124 = vadd.f32 0.0, %v2123
        %v2125 = vpop.f32.mrb[0].mxu0
        %v2126 = vpop.f32.mrb[0].mxu0
        %v2127 = vadd.f32 0.0, %v2126
        %v2128 = vpop.f32.mrb[0].mxu0
        %2129 = vdwg.mxu0
        %v2131 = vsel %vm1988, %v1395, 0
        %v2134 = vsel %vm1988, %v1691, 0
        %2136 = vmatprep.subr.bf16.mxu0 0
        %2137 = vmatpush1.bf16.xpose.msra.mxu0 %v2134
        %2138 = vmatprep.subr.bf16.mxu0 0
        %2139 = vmatpush1.bf16.xpose.msra.mxu0 0
        %2140 = vmatprep.subr.bf16.mxu0 0
        %2141 = vmatpush1.bf16.xpose.msra.mxu0 0
        %2142 = vmatprep.subr.bf16.mxu0 0
        %2143 = vmatpush1.bf16.xpose.msra.mxu0 0
        %2144 = vmatprep.subr.bf16.mxu0 0
        %2145 = vmatpush1.bf16.xpose.msra.mxu0 0
        %2146 = vmatprep.subr.bf16.mxu0 0
        %2147 = vmatpush1.bf16.xpose.msra.mxu0 0
        %2148 = vmatprep.subr.bf16.mxu0 0
        %2149 = vmatpush1.bf16.xpose.msra.mxu0 0
        %2150 = vmatprep.subr.bf16.mxu0 0
        %2151 = vmatpush1.bf16.xpose.msra.mxu0 0
        %2152 = vmatprep.subr.bf16.mxu0 0
        %2153 = vmatpush1.bf16.xpose.msra.mxu0 0
        %2154 = vmatprep.subr.bf16.mxu0 0
        %2155 = vmatpush1.bf16.xpose.msra.mxu0 0
        %2156 = vmatprep.subr.bf16.mxu0 0
        %2157 = vmatpush1.bf16.xpose.msra.mxu0 0
        %2158 = vmatprep.subr.bf16.mxu0 0
        %2159 = vmatpush1.bf16.xpose.msra.mxu0 0
        %2160 = vmatprep.subr.bf16.mxu0 0
        %2161 = vmatpush1.bf16.xpose.msra.mxu0 0
        %2162 = vmatprep.subr.bf16.mxu0 0
        %2163 = vmatpush1.bf16.xpose.msra.mxu0 0
        %2164 = vmatprep.subr.bf16.mxu0 0
        %2165 = vmatpush1.bf16.xpose.msra.mxu0 0
        %2166 = vmatprep.subr.bf16.mxu0 0
        %2167 = vmatpush1.bf16.xpose.msra.mxu0 0
        %2168 = vmatprep.mubr.bf16.mxu0 0
        %2169 = vmatmul.mubr.bf16.gmra.mrb[0].mxu0 %v2131
        %v2170 = vpop.f32.mrb[0].mxu0
        %v2171 = vadd.f32 0.0, %v2170
        %v2172 = vpop.f32.mrb[0].mxu0
        %v2173 = vpop.f32.mrb[0].mxu0
        %v2174 = vadd.f32 0.0, %v2173
        %v2175 = vpop.f32.mrb[0].mxu0
        %2176 = vdwg.mxu0
        %vm2177 = vcmask 130048
        %v2178 = vsel %vm2177, %v2030, -inf
        %2179 = vmax.xlane.f32.xlu0 %v2178
        %v2180 = vpop.xlane.xlu0 %2179
        %v2181 = vsel %vm2177, %v2033, -inf
        %2182 = vmax.xlane.f32.xlu0 %v2181
        %v2183 = vpop.xlane.xlu0 %2182
        %v2184 = vsel %vm2177, %v2077, -inf
        %2185 = vmax.xlane.f32.xlu0 %v2184
        %v2186 = vpop.xlane.xlu0 %2185
        %v2187 = vsel %vm2177, %v2080, -inf
        %2188 = vmax.xlane.f32.xlu0 %v2187
        %v2189 = vpop.xlane.xlu0 %2188
        %v2190 = vsel %vm2177, %v2124, -inf
        %2191 = vmax.xlane.f32.xlu0 %v2190
        %v2192 = vpop.xlane.xlu0 %2191
        %v2193 = vsel %vm2177, %v2127, -inf
        %2194 = vmax.xlane.f32.xlu0 %v2193
        %v2195 = vpop.xlane.xlu0 %2194
        %v2196 = vsel %vm2177, %v2171, -inf
        %2197 = vmax.xlane.f32.xlu0 %v2196
        %v2198 = vpop.xlane.xlu0 %2197
        %v2199 = vsel %vm2177, %v2174, -inf
        %2200 = vmax.xlane.f32.xlu0 %v2199
        %v2201 = vpop.xlane.xlu0 %2200
        %v2202 = vsub.f32 %v2030, %v2180
        %v2203 = vsub.f32 %v2033, %v2183
        %v2204 = vsub.f32 %v2077, %v2186
        %v2205 = vsub.f32 %v2080, %v2189
        %v2206 = vsub.f32 %v2124, %v2192
        %v2207 = vsub.f32 %v2127, %v2195
        %v2208 = vsub.f32 %v2171, %v2198
        %v2209 = vsub.f32 %v2174, %v2201
        %v2210 = vmul.f32 %v2202, 1.442695
        %v2211 = vpow.pop %v2210
        %v2212 = vmul.f32 %v2203, 1.442695
        %v2213 = vpow.pop %v2212
        %v2214 = vmul.f32 %v2204, 1.442695
        %v2215 = vpow.pop %v2214
        %v2216 = vmul.f32 %v2205, 1.442695
        %v2217 = vpow.pop %v2216
        %v2218 = vmul.f32 %v2206, 1.442695
        %v2219 = vpow.pop %v2218
        %v2220 = vmul.f32 %v2207, 1.442695
        %v2221 = vpow.pop %v2220
        %v2222 = vmul.f32 %v2208, 1.442695
        %v2223 = vpow.pop %v2222
        %v2224 = vmul.f32 %v2209, 1.442695
        %v2225 = vpow.pop %v2224
        %v2226 = vsel %vm2177, %v2211, 0.0
        %2227 = vadd.xlane.f32.xlu0 %v2226
        %v2228 = vpop.xlane.xlu0 %2227
        %v2229 = vsel %vm2177, %v2213, 0.0
        %2230 = vadd.xlane.f32.xlu0 %v2229
        %v2231 = vpop.xlane.xlu0 %2230
        %v2232 = vsel %vm2177, %v2215, 0.0
        %2233 = vadd.xlane.f32.xlu0 %v2232
        %v2234 = vpop.xlane.xlu0 %2233
        %v2235 = vsel %vm2177, %v2217, 0.0
        %2236 = vadd.xlane.f32.xlu0 %v2235
        %v2237 = vpop.xlane.xlu0 %2236
        %v2238 = vsel %vm2177, %v2219, 0.0
        %2239 = vadd.xlane.f32.xlu0 %v2238
        %v2240 = vpop.xlane.xlu0 %2239
        %v2241 = vsel %vm2177, %v2221, 0.0
        %2242 = vadd.xlane.f32.xlu0 %v2241
        %v2243 = vpop.xlane.xlu0 %2242
        %v2244 = vsel %vm2177, %v2223, 0.0
        %2245 = vadd.xlane.f32.xlu0 %v2244
        %v2246 = vpop.xlane.xlu0 %2245
        %v2247 = vsel %vm2177, %v2225, 0.0
        %2248 = vadd.xlane.f32.xlu0 %v2247
        %v2249 = vpop.xlane.xlu0 %2248
        %v2250 = vrcp.pop %v2228
        %v2251 = vrcp.pop %v2231
        %v2252 = vrcp.pop %v2234
        %v2253 = vrcp.pop %v2237
        %v2254 = vrcp.pop %v2240
        %v2255 = vrcp.pop %v2243
        %v2256 = vrcp.pop %v2246
        %v2257 = vrcp.pop %v2249
        %v2258 = vmul.f32 %v2228, %v2250
        %v2259 = vmul.f32 %v2231, %v2251
        %v2260 = vmul.f32 %v2234, %v2252
        %v2261 = vmul.f32 %v2237, %v2253
        %v2262 = vmul.f32 %v2240, %v2254
        %v2263 = vmul.f32 %v2243, %v2255
        %v2264 = vmul.f32 %v2246, %v2256
        %v2265 = vmul.f32 %v2249, %v2257
        %v2266 = vsub.f32 2.0, %v2258
        %v2267 = vsub.f32 2.0, %v2259
        %v2268 = vsub.f32 2.0, %v2260
        %v2269 = vsub.f32 2.0, %v2261
        %v2270 = vsub.f32 2.0, %v2262
        %v2271 = vsub.f32 2.0, %v2263
        %v2272 = vsub.f32 2.0, %v2264
        %v2273 = vsub.f32 2.0, %v2265
        %v2274 = vmul.f32 %v2250, %v2266
        %v2275 = vmul.f32 %v2251, %v2267
        %v2276 = vmul.f32 %v2252, %v2268
        %v2277 = vmul.f32 %v2253, %v2269
        %v2278 = vmul.f32 %v2254, %v2270
        %v2279 = vmul.f32 %v2255, %v2271
        %v2280 = vmul.f32 %v2256, %v2272
        %v2281 = vmul.f32 %v2257, %v2273
        %v2282 = vpack.c.bf16 %v2213, %v2211
        %v2283 = vpack.c.bf16 %v2217, %v2215
        %v2284 = vpack.c.bf16 %v2221, %v2219
        %v2285 = vpack.c.bf16 %v2225, %v2223
        %v2287 = vsel %vm2177, %v2282, 0
        %2289 = vmatprep.subr.bf16.mxu0 0
        %2290 = vmatpush1.bf16.msra.mxu0 %v1984
        %2291 = vmatprep.subr.bf16.mxu0 0
        %2292 = vmatpush1.bf16.msra.mxu0 0
        %2293 = vmatprep.subr.bf16.mxu0 0
        %2294 = vmatpush1.bf16.msra.mxu0 0
        %2295 = vmatprep.subr.bf16.mxu0 0
        %2296 = vmatpush1.bf16.msra.mxu0 0
        %2297 = vmatprep.subr.bf16.mxu0 0
        %2298 = vmatpush1.bf16.msra.mxu0 0
        %2299 = vmatprep.subr.bf16.mxu0 0
        %2300 = vmatpush1.bf16.msra.mxu0 0
        %2301 = vmatprep.subr.bf16.mxu0 0
        %2302 = vmatpush1.bf16.msra.mxu0 0
        %2303 = vmatprep.subr.bf16.mxu0 0
        %2304 = vmatpush1.bf16.msra.mxu0 0
        %2305 = vmatprep.subr.bf16.mxu0 0
        %2306 = vmatpush1.bf16.msra.mxu0 0
        %2307 = vmatprep.subr.bf16.mxu0 0
        %2308 = vmatpush1.bf16.msra.mxu0 0
        %2309 = vmatprep.subr.bf16.mxu0 0
        %2310 = vmatpush1.bf16.msra.mxu0 0
        %2311 = vmatprep.subr.bf16.mxu0 0
        %2312 = vmatpush1.bf16.msra.mxu0 0
        %2313 = vmatprep.subr.bf16.mxu0 0
        %2314 = vmatpush1.bf16.msra.mxu0 0
        %2315 = vmatprep.subr.bf16.mxu0 0
        %2316 = vmatpush1.bf16.msra.mxu0 0
        %2317 = vmatprep.subr.bf16.mxu0 0
        %2318 = vmatpush1.bf16.msra.mxu0 0
        %2319 = vmatprep.subr.bf16.mxu0 0
        %2320 = vmatpush1.bf16.msra.mxu0 0
        %2321 = vmatprep.mubr.bf16.mxu0 0
        %2322 = vmatmul.mubr.bf16.gmra.mrb[0].mxu0 %v2287
        %v2323 = vpop.f32.mrb[0].mxu0
        %v2324 = vadd.f32 0.0, %v2323
        %v2325 = vpop.f32.mrb[0].mxu0
        %v2326 = vpop.f32.mrb[0].mxu0
        %v2327 = vadd.f32 0.0, %v2326
        %v2328 = vpop.f32.mrb[0].mxu0
        %2329 = vdwg.mxu0
        %v2331 = vsel %vm2177, %v2283, 0
        %2333 = vmatprep.subr.bf16.mxu0 0
        %2334 = vmatpush1.bf16.msra.mxu0 %v1985
        %2335 = vmatprep.subr.bf16.mxu0 0
        %2336 = vmatpush1.bf16.msra.mxu0 0
        %2337 = vmatprep.subr.bf16.mxu0 0
        %2338 = vmatpush1.bf16.msra.mxu0 0
        %2339 = vmatprep.subr.bf16.mxu0 0
        %2340 = vmatpush1.bf16.msra.mxu0 0
        %2341 = vmatprep.subr.bf16.mxu0 0
        %2342 = vmatpush1.bf16.msra.mxu0 0
        %2343 = vmatprep.subr.bf16.mxu0 0
        %2344 = vmatpush1.bf16.msra.mxu0 0
        %2345 = vmatprep.subr.bf16.mxu0 0
        %2346 = vmatpush1.bf16.msra.mxu0 0
        %2347 = vmatprep.subr.bf16.mxu0 0
        %2348 = vmatpush1.bf16.msra.mxu0 0
        %2349 = vmatprep.subr.bf16.mxu0 0
        %2350 = vmatpush1.bf16.msra.mxu0 0
        %2351 = vmatprep.subr.bf16.mxu0 0
        %2352 = vmatpush1.bf16.msra.mxu0 0
        %2353 = vmatprep.subr.bf16.mxu0 0
        %2354 = vmatpush1.bf16.msra.mxu0 0
        %2355 = vmatprep.subr.bf16.mxu0 0
        %2356 = vmatpush1.bf16.msra.mxu0 0
        %2357 = vmatprep.subr.bf16.mxu0 0
        %2358 = vmatpush1.bf16.msra.mxu0 0
        %2359 = vmatprep.subr.bf16.mxu0 0
        %2360 = vmatpush1.bf16.msra.mxu0 0
        %2361 = vmatprep.subr.bf16.mxu0 0
        %2362 = vmatpush1.bf16.msra.mxu0 0
        %2363 = vmatprep.subr.bf16.mxu0 0
        %2364 = vmatpush1.bf16.msra.mxu0 0
        %2365 = vmatprep.mubr.bf16.mxu0 0
        %2366 = vmatmul.mubr.bf16.gmra.mrb[0].mxu0 %v2331
        %v2367 = vpop.f32.mrb[0].mxu0
        %v2368 = vadd.f32 0.0, %v2367
        %v2369 = vpop.f32.mrb[0].mxu0
        %v2370 = vpop.f32.mrb[0].mxu0
        %v2371 = vadd.f32 0.0, %v2370
        %v2372 = vpop.f32.mrb[0].mxu0
        %2373 = vdwg.mxu0
        %v2375 = vsel %vm2177, %v2284, 0
        %2377 = vmatprep.subr.bf16.mxu0 0
        %2378 = vmatpush1.bf16.msra.mxu0 %v1986
        %2379 = vmatprep.subr.bf16.mxu0 0
        %2380 = vmatpush1.bf16.msra.mxu0 0
        %2381 = vmatprep.subr.bf16.mxu0 0
        %2382 = vmatpush1.bf16.msra.mxu0 0
        %2383 = vmatprep.subr.bf16.mxu0 0
        %2384 = vmatpush1.bf16.msra.mxu0 0
        %2385 = vmatprep.subr.bf16.mxu0 0
        %2386 = vmatpush1.bf16.msra.mxu0 0
        %2387 = vmatprep.subr.bf16.mxu0 0
        %2388 = vmatpush1.bf16.msra.mxu0 0
        %2389 = vmatprep.subr.bf16.mxu0 0
        %2390 = vmatpush1.bf16.msra.mxu0 0
        %2391 = vmatprep.subr.bf16.mxu0 0
        %2392 = vmatpush1.bf16.msra.mxu0 0
        %2393 = vmatprep.subr.bf16.mxu0 0
        %2394 = vmatpush1.bf16.msra.mxu0 0
        %2395 = vmatprep.subr.bf16.mxu0 0
        %2396 = vmatpush1.bf16.msra.mxu0 0
        %2397 = vmatprep.subr.bf16.mxu0 0
        %2398 = vmatpush1.bf16.msra.mxu0 0
        %2399 = vmatprep.subr.bf16.mxu0 0
        %2400 = vmatpush1.bf16.msra.mxu0 0
        %2401 = vmatprep.subr.bf16.mxu0 0
        %2402 = vmatpush1.bf16.msra.mxu0 0
        %2403 = vmatprep.subr.bf16.mxu0 0
        %2404 = vmatpush1.bf16.msra.mxu0 0
        %2405 = vmatprep.subr.bf16.mxu0 0
        %2406 = vmatpush1.bf16.msra.mxu0 0
        %2407 = vmatprep.subr.bf16.mxu0 0
        %2408 = vmatpush1.bf16.msra.mxu0 0
        %2409 = vmatprep.mubr.bf16.mxu0 0
        %2410 = vmatmul.mubr.bf16.gmra.mrb[0].mxu0 %v2375
        %v2411 = vpop.f32.mrb[0].mxu0
        %v2412 = vadd.f32 0.0, %v2411
        %v2413 = vpop.f32.mrb[0].mxu0
        %v2414 = vpop.f32.mrb[0].mxu0
        %v2415 = vadd.f32 0.0, %v2414
        %v2416 = vpop.f32.mrb[0].mxu0
        %2417 = vdwg.mxu0
        %v2419 = vsel %vm2177, %v2285, 0
        %2421 = vmatprep.subr.bf16.mxu0 0
        %2422 = vmatpush1.bf16.msra.mxu0 %v1987
        %2423 = vmatprep.subr.bf16.mxu0 0
        %2424 = vmatpush1.bf16.msra.mxu0 0
        %2425 = vmatprep.subr.bf16.mxu0 0
        %2426 = vmatpush1.bf16.msra.mxu0 0
        %2427 = vmatprep.subr.bf16.mxu0 0
        %2428 = vmatpush1.bf16.msra.mxu0 0
        %2429 = vmatprep.subr.bf16.mxu0 0
        %2430 = vmatpush1.bf16.msra.mxu0 0
        %2431 = vmatprep.subr.bf16.mxu0 0
        %2432 = vmatpush1.bf16.msra.mxu0 0
        %2433 = vmatprep.subr.bf16.mxu0 0
        %2434 = vmatpush1.bf16.msra.mxu0 0
        %2435 = vmatprep.subr.bf16.mxu0 0
        %2436 = vmatpush1.bf16.msra.mxu0 0
        %2437 = vmatprep.subr.bf16.mxu0 0
        %2438 = vmatpush1.bf16.msra.mxu0 0
        %2439 = vmatprep.subr.bf16.mxu0 0
        %2440 = vmatpush1.bf16.msra.mxu0 0
        %2441 = vmatprep.subr.bf16.mxu0 0
        %2442 = vmatpush1.bf16.msra.mxu0 0
        %2443 = vmatprep.subr.bf16.mxu0 0
        %2444 = vmatpush1.bf16.msra.mxu0 0
        %2445 = vmatprep.subr.bf16.mxu0 0
        %2446 = vmatpush1.bf16.msra.mxu0 0
        %2447 = vmatprep.subr.bf16.mxu0 0
        %2448 = vmatpush1.bf16.msra.mxu0 0
        %2449 = vmatprep.subr.bf16.mxu0 0
        %2450 = vmatpush1.bf16.msra.mxu0 0
        %2451 = vmatprep.subr.bf16.mxu0 0
        %2452 = vmatpush1.bf16.msra.mxu0 0
        %2453 = vmatprep.mubr.bf16.mxu0 0
        %2454 = vmatmul.mubr.bf16.gmra.mrb[0].mxu0 %v2419
        %v2455 = vpop.f32.mrb[0].mxu0
        %v2456 = vadd.f32 0.0, %v2455
        %v2457 = vpop.f32.mrb[0].mxu0
        %v2458 = vpop.f32.mrb[0].mxu0
        %v2459 = vadd.f32 0.0, %v2458
        %v2460 = vpop.f32.mrb[0].mxu0
        %2461 = vdwg.mxu0
        %v2462 = vmul.f32 %v2324, %v2274
        %v2463 = vmul.f32 %v2327, %v2275
        %v2464 = vmul.f32 %v2368, %v2276
        %v2465 = vmul.f32 %v2371, %v2277
        %v2466 = vmul.f32 %v2412, %v2278
        %v2467 = vmul.f32 %v2415, %v2279
        %v2468 = vmul.f32 %v2456, %v2280
        %v2469 = vmul.f32 %v2459, %v2281
        %v2470 = vcombine.low %v2462, %v2466
        %v2471 = vcombine.high %v2462, %v2466
        %v2473 = vunpack.c.l.s4 1983009808
        %v2474 = vunpack.c.0.s8 %v2473
        %v2475 = vlaneseq
        %v2476 = vshrl.u32 %v2475, 7
        %v2477 = vsub.s32 %v2474, %v2476
        %v2478 = vrot.slane %v2470, %v2477
        %v2480 = vunpack.c.l.s4 1983009808
        %v2481 = vunpack.c.0.s8 %v2480
        %v2482 = vlaneseq
        %v2483 = vshrl.u32 %v2482, 7
        %v2484 = vsub.s32 %v2481, %v2483
        %v2485 = vrot.slane %v2471, %v2484
        %v2486 = vcombine.low %v2464, %v2468
        %v2487 = vcombine.high %v2464, %v2468
        %v2489 = vunpack.c.l.s4 1983009808
        %v2490 = vunpack.c.0.s8 %v2489
        %v2491 = vlaneseq
        %v2492 = vshrl.u32 %v2491, 7
        %v2493 = vsub.s32 %v2490, %v2492
        %v2494 = vrot.slane %v2486, %v2493
        %v2496 = vunpack.c.l.s4 1983009808
        %v2497 = vunpack.c.0.s8 %v2496
        %v2498 = vlaneseq
        %v2499 = vshrl.u32 %v2498, 7
        %v2500 = vsub.s32 %v2497, %v2499
        %v2501 = vrot.slane %v2487, %v2500
        %v2502 = vcombine.low %v2478, %v2494
        %v2503 = vcombine.high %v2478, %v2494
        %v2505 = vunpack.c.l.s4 1934713408
        %v2506 = vunpack.c.0.s8 %v2505
        %v2507 = vlaneseq
        %v2508 = vshrl.u32 %v2507, 7
        %v2509 = vsub.s32 %v2506, %v2508
        %v2510 = vrot.slane %v2502, %v2509
        %v2512 = vunpack.c.l.s4 1934713408
        %v2513 = vunpack.c.0.s8 %v2512
        %v2514 = vlaneseq
        %v2515 = vshrl.u32 %v2514, 7
        %v2516 = vsub.s32 %v2513, %v2515
        %v2517 = vrot.slane %v2503, %v2516
        %v2518 = vcombine.low %v2485, %v2501
        %v2519 = vcombine.high %v2485, %v2501
        %v2521 = vunpack.c.l.s4 1934713408
        %v2522 = vunpack.c.0.s8 %v2521
        %v2523 = vlaneseq
        %v2524 = vshrl.u32 %v2523, 7
        %v2525 = vsub.s32 %v2522, %v2524
        %v2526 = vrot.slane %v2518, %v2525
        %v2528 = vunpack.c.l.s4 1934713408
        %v2529 = vunpack.c.0.s8 %v2528
        %v2530 = vlaneseq
        %v2531 = vshrl.u32 %v2530, 7
        %v2532 = vsub.s32 %v2529, %v2531
        %v2533 = vrot.slane %v2519, %v2532
        %v2534 = vcombine.high %v2510, 0.0
        %v2535 = vcombine.high %v2517, 0.0
        %v2536 = vcombine.high %v2526, 0.0
        %v2537 = vcombine.high %v2533, 0.0
        %v2538 = vcombine.low %v2463, %v2467
        %v2539 = vcombine.high %v2463, %v2467
        %v2541 = vunpack.c.l.s4 1983009808
        %v2542 = vunpack.c.0.s8 %v2541
        %v2543 = vlaneseq
        %v2544 = vshrl.u32 %v2543, 7
        %v2545 = vsub.s32 %v2542, %v2544
        %v2546 = vrot.slane %v2538, %v2545
        %v2548 = vunpack.c.l.s4 1983009808
        %v2549 = vunpack.c.0.s8 %v2548
        %v2550 = vlaneseq
        %v2551 = vshrl.u32 %v2550, 7
        %v2552 = vsub.s32 %v2549, %v2551
        %v2553 = vrot.slane %v2539, %v2552
        %v2554 = vcombine.low %v2465, %v2469
        %v2555 = vcombine.high %v2465, %v2469
        %v2557 = vunpack.c.l.s4 1983009808
        %v2558 = vunpack.c.0.s8 %v2557
        %v2559 = vlaneseq
        %v2560 = vshrl.u32 %v2559, 7
        %v2561 = vsub.s32 %v2558, %v2560
        %v2562 = vrot.slane %v2554, %v2561
        %v2564 = vunpack.c.l.s4 1983009808
        %v2565 = vunpack.c.0.s8 %v2564
        %v2566 = vlaneseq
        %v2567 = vshrl.u32 %v2566, 7
        %v2568 = vsub.s32 %v2565, %v2567
        %v2569 = vrot.slane %v2555, %v2568
        %v2570 = vcombine.low %v2546, %v2562
        %v2571 = vcombine.high %v2546, %v2562
        %v2573 = vunpack.c.l.s4 1934713408
        %v2574 = vunpack.c.0.s8 %v2573
        %v2575 = vlaneseq
        %v2576 = vshrl.u32 %v2575, 7
        %v2577 = vsub.s32 %v2574, %v2576
        %v2578 = vrot.slane %v2570, %v2577
        %v2580 = vunpack.c.l.s4 1934713408
        %v2581 = vunpack.c.0.s8 %v2580
        %v2582 = vlaneseq
        %v2583 = vshrl.u32 %v2582, 7
        %v2584 = vsub.s32 %v2581, %v2583
        %v2585 = vrot.slane %v2571, %v2584
        %v2586 = vcombine.low %v2553, %v2569
        %v2587 = vcombine.high %v2553, %v2569
        %v2589 = vunpack.c.l.s4 1934713408
        %v2590 = vunpack.c.0.s8 %v2589
        %v2591 = vlaneseq
        %v2592 = vshrl.u32 %v2591, 7
        %v2593 = vsub.s32 %v2590, %v2592
        %v2594 = vrot.slane %v2586, %v2593
        %v2596 = vunpack.c.l.s4 1934713408
        %v2597 = vunpack.c.0.s8 %v2596
        %v2598 = vlaneseq
        %v2599 = vshrl.u32 %v2598, 7
        %v2600 = vsub.s32 %v2597, %v2599
        %v2601 = vrot.slane %v2587, %v2600
        %v2602 = vcombine.high %v2578, 0.0
        %v2603 = vcombine.high %v2585, 0.0
        %v2604 = vcombine.high %v2594, 0.0
        %v2605 = vcombine.high %v2601, 0.0
        %v2606 = vcombine.low %v2510, %v2517
        %v2608 = vunpack.c.l.s4 1983009808
        %v2609 = vunpack.c.0.s8 %v2608
        %v2610 = vlaneseq
        %v2611 = vshrl.u32 %v2610, 7
        %v2612 = vsub.s32 %v2609, %v2611
        %v2613 = vrot.slane %v2606, %v2612
        %v2614 = vcombine.low %v2534, %v2535
        %v2616 = vunpack.c.l.s4 1983009808
        %v2617 = vunpack.c.0.s8 %v2616
        %v2618 = vlaneseq
        %v2619 = vshrl.u32 %v2618, 7
        %v2620 = vsub.s32 %v2617, %v2619
        %v2621 = vrot.slane %v2614, %v2620
        %v2622 = vcombine.low %v2526, %v2533
        %v2624 = vunpack.c.l.s4 1983009808
        %v2625 = vunpack.c.0.s8 %v2624
        %v2626 = vlaneseq
        %v2627 = vshrl.u32 %v2626, 7
        %v2628 = vsub.s32 %v2625, %v2627
        %v2629 = vrot.slane %v2622, %v2628
        %v2630 = vcombine.low %v2536, %v2537
        %v2632 = vunpack.c.l.s4 1983009808
        %v2633 = vunpack.c.0.s8 %v2632
        %v2634 = vlaneseq
        %v2635 = vshrl.u32 %v2634, 7
        %v2636 = vsub.s32 %v2633, %v2635
        %v2637 = vrot.slane %v2630, %v2636
        %v2638 = vcombine.low %v2613, %v2621
        %v2639 = vcombine.high %v2613, %v2621
        %v2641 = vunpack.c.l.s4 1934713408
        %v2642 = vunpack.c.0.s8 %v2641
        %v2643 = vlaneseq
        %v2644 = vshrl.u32 %v2643, 7
        %v2645 = vsub.s32 %v2642, %v2644
        %v2646 = vrot.slane %v2638, %v2645
        %v2648 = vunpack.c.l.s4 1934713408
        %v2649 = vunpack.c.0.s8 %v2648
        %v2650 = vlaneseq
        %v2651 = vshrl.u32 %v2650, 7
        %v2652 = vsub.s32 %v2649, %v2651
        %v2653 = vrot.slane %v2639, %v2652
        %v2654 = vcombine.low %v2629, %v2637
        %v2655 = vcombine.high %v2629, %v2637
        %v2657 = vunpack.c.l.s4 1934713408
        %v2658 = vunpack.c.0.s8 %v2657
        %v2659 = vlaneseq
        %v2660 = vshrl.u32 %v2659, 7
        %v2661 = vsub.s32 %v2658, %v2660
        %v2662 = vrot.slane %v2654, %v2661
        %v2664 = vunpack.c.l.s4 1934713408
        %v2665 = vunpack.c.0.s8 %v2664
        %v2666 = vlaneseq
        %v2667 = vshrl.u32 %v2666, 7
        %v2668 = vsub.s32 %v2665, %v2667
        %v2669 = vrot.slane %v2655, %v2668
        %v2670 = vcombine.low %v2646, %v2662
        %v2671 = vcombine.high %v2646, %v2662
        %v2672 = vcombine.low %v2653, %v2669
        %v2673 = vcombine.high %v2653, %v2669
        %v2674 = vcombine.low %v2578, %v2585
        %v2676 = vunpack.c.l.s4 1983009808
        %v2677 = vunpack.c.0.s8 %v2676
        %v2678 = vlaneseq
        %v2679 = vshrl.u32 %v2678, 7
        %v2680 = vsub.s32 %v2677, %v2679
        %v2681 = vrot.slane %v2674, %v2680
        %v2682 = vcombine.low %v2602, %v2603
        %v2684 = vunpack.c.l.s4 1983009808
        %v2685 = vunpack.c.0.s8 %v2684
        %v2686 = vlaneseq
        %v2687 = vshrl.u32 %v2686, 7
        %v2688 = vsub.s32 %v2685, %v2687
        %v2689 = vrot.slane %v2682, %v2688
        %v2690 = vcombine.low %v2594, %v2601
        %v2692 = vunpack.c.l.s4 1983009808
        %v2693 = vunpack.c.0.s8 %v2692
        %v2694 = vlaneseq
        %v2695 = vshrl.u32 %v2694, 7
        %v2696 = vsub.s32 %v2693, %v2695
        %v2697 = vrot.slane %v2690, %v2696
        %v2698 = vcombine.low %v2604, %v2605
        %v2700 = vunpack.c.l.s4 1983009808
        %v2701 = vunpack.c.0.s8 %v2700
        %v2702 = vlaneseq
        %v2703 = vshrl.u32 %v2702, 7
        %v2704 = vsub.s32 %v2701, %v2703
        %v2705 = vrot.slane %v2698, %v2704
        %v2706 = vcombine.low %v2681, %v2689
        %v2707 = vcombine.high %v2681, %v2689
        %v2709 = vunpack.c.l.s4 1934713408
        %v2710 = vunpack.c.0.s8 %v2709
        %v2711 = vlaneseq
        %v2712 = vshrl.u32 %v2711, 7
        %v2713 = vsub.s32 %v2710, %v2712
        %v2714 = vrot.slane %v2706, %v2713
        %v2716 = vunpack.c.l.s4 1934713408
        %v2717 = vunpack.c.0.s8 %v2716
        %v2718 = vlaneseq
        %v2719 = vshrl.u32 %v2718, 7
        %v2720 = vsub.s32 %v2717, %v2719
        %v2721 = vrot.slane %v2707, %v2720
        %v2722 = vcombine.low %v2697, %v2705
        %v2723 = vcombine.high %v2697, %v2705
        %v2725 = vunpack.c.l.s4 1934713408
        %v2726 = vunpack.c.0.s8 %v2725
        %v2727 = vlaneseq
        %v2728 = vshrl.u32 %v2727, 7
        %v2729 = vsub.s32 %v2726, %v2728
        %v2730 = vrot.slane %v2722, %v2729
        %v2732 = vunpack.c.l.s4 1934713408
        %v2733 = vunpack.c.0.s8 %v2732
        %v2734 = vlaneseq
        %v2735 = vshrl.u32 %v2734, 7
        %v2736 = vsub.s32 %v2733, %v2735
        %v2737 = vrot.slane %v2723, %v2736
        %v2738 = vcombine.low %v2714, %v2730
        %v2739 = vcombine.high %v2714, %v2730
        %v2740 = vcombine.low %v2721, %v2737
        %v2741 = vcombine.high %v2721, %v2737
        %2744 = vrot.lane.b32.xlu0 %v2671, 32
        %v2745 = vpop.permute.xlu0 %2744
        %2746 = vrot.lane.b32.xlu0 %v2739, 32
        %v2747 = vpop.permute.xlu0 %2746
        %2752 = vrot.lane.b32.xlu0 %v2672, 64
        %v2753 = vpop.permute.xlu0 %2752
        %2754 = vrot.lane.b32.xlu0 %v2740, 64
        %v2755 = vpop.permute.xlu0 %2754
        %2760 = vrot.lane.b32.xlu0 %v2673, 96
        %v2761 = vpop.permute.xlu0 %2760
        %2762 = vrot.lane.b32.xlu0 %v2741, 96
        %v2763 = vpop.permute.xlu0 %2762
        %v2766 = vsel %vm1988, %v2670, %v2745
        %v2767 = vsel %vm1988, %v2738, %v2747
        %vm2768 = vcmask 523264
        %v2769 = vsel %vm2768, %v2766, %v2753
        %v2770 = vsel %vm2768, %v2767, %v2755
        %vm2771 = vcmask 785408
        %v2772 = vsel %vm2771, %v2769, %v2761
        %v2773 = vsel %vm2771, %v2770, %v2763
        %v2774 = vadd.f32 %v840, %v2772
        %v2775 = vadd.f32 %v841, %v2773
        %v2776 = vld [vmem:[%s9] sm:$0x1]
        %v2777 = vld [vmem:[%s10] sm:$0x1]
        %2778 = vadd.xlane.f32.xlu0 %v2774
        %v2779 = vpop.xlane.xlu0 %2778
        %2780 = vadd.xlane.f32.xlu0 %v2775
        %v2781 = vpop.xlane.xlu0 %2780
        %v2782 = vrcp.pop 128.0
        %v2783 = vmul.f32 %v2779, %v2782
        %v2784 = vmul.f32 %v2781, %v2782
        %v2785 = vmul.f32 %v2774, %v2774
        %v2786 = vmul.f32 %v2775, %v2775
        %2787 = vadd.xlane.f32.xlu0 %v2785
        %v2788 = vpop.xlane.xlu0 %2787
        %2789 = vadd.xlane.f32.xlu0 %v2786
        %v2790 = vpop.xlane.xlu0 %2789
        %v2791 = vmul.f32 %v2788, %v2782
        %v2792 = vmul.f32 %v2790, %v2782
        %v2793 = vmul.f32 %v2783, %v2783
        %v2794 = vmul.f32 %v2784, %v2784
        %v2795 = vsub.f32 %v2791, %v2793
        %v2796 = vsub.f32 %v2792, %v2794
        %v2797 = vmax.f32 %v2795, 0.0
        %v2798 = vmax.f32 %v2796, 0.0
        %v2799 = vsub.f32 %v2774, %v2783
        %v2800 = vsub.f32 %v2775, %v2784
        %v2801 = vadd.f32 %v2797, 1e-05
        %v2802 = vadd.f32 %v2798, 1e-05
        %v2803 = vrsqrt.pop %v2801
        %v2804 = vrsqrt.pop %v2802
        %v2805 = vmul.f32 %v2799, %v2803
        %v2806 = vmul.f32 %v2800, %v2804
        %v2808 = vlaneseq
        %v2809 = vshrl.u32 %v2808, 7
        %v2810 = vsub.s32 0, %v2809
        %v2811 = vrot.slane %v2776, %v2810
        %v2813 = vmul.f32 %v2805, %v2811
        %v2814 = vmul.f32 %v2806, %v2811
        %v2816 = vlaneseq
        %v2817 = vshrl.u32 %v2816, 7
        %v2818 = vsub.s32 0, %v2817
        %v2819 = vrot.slane %v2777, %v2818
        %v2821 = vadd.f32 %v2813, %v2819
        %v2822 = vadd.f32 %v2814, %v2819
        %v2823 = vadd.f32 %v2821, %v850
        %v2824 = vadd.f32 %v2822, %v851
        %v2825 = vpack.c.bf16 %v2824, %v2823
        %v2826 = vld [vmem:[#allocation13] sm:$0xf]
        %v2827 = vld [vmem:[#allocation13 + $0x4] sm:$0xf]
        %v2828 = vld [vmem:[#allocation13 + $0x8] sm:$0xf]
        %v2829 = vld [vmem:[#allocation13 + $0xc] sm:$0xf]
        %v2830 = vld [vmem:[#allocation13 + $0x10] sm:$0xf]
        %v2831 = vld [vmem:[#allocation13 + $0x14] sm:$0xf]
        %v2832 = vld [vmem:[#allocation13 + $0x18] sm:$0xf]
        %v2833 = vld [vmem:[#allocation13 + $0x1c] sm:$0xf]
        %v2834 = vld [vmem:[#allocation13 + $0x20] sm:$0xf]
        %v2835 = vld [vmem:[#allocation13 + $0x24] sm:$0xf]
        %v2836 = vld [vmem:[#allocation13 + $0x28] sm:$0xf]
        %v2837 = vld [vmem:[#allocation13 + $0x2c] sm:$0xf]
        %v2838 = vld [vmem:[#allocation13 + $0x30] sm:$0xf]
        %v2839 = vld [vmem:[#allocation13 + $0x34] sm:$0xf]
        %v2840 = vld [vmem:[#allocation13 + $0x38] sm:$0xf]
        %v2841 = vld [vmem:[#allocation13 + $0x3c] sm:$0xf]
        %v2858 = vunpack.c.l.b16 %v2826
        %v2859 = vunpack.c.l.b16 %v2827
        %v2860 = vunpack.c.l.b16 %v2828
        %v2861 = vunpack.c.l.b16 %v2829
        %v2862 = vunpack.c.l.b16 %v2830
        %v2863 = vunpack.c.l.b16 %v2831
        %v2864 = vunpack.c.l.b16 %v2832
        %v2865 = vunpack.c.l.b16 %v2833
        %v2866 = vunpack.c.l.b16 %v2834
        %v2867 = vunpack.c.l.b16 %v2835
        %v2868 = vunpack.c.l.b16 %v2836
        %v2869 = vunpack.c.l.b16 %v2837
        %v2870 = vunpack.c.l.b16 %v2838
        %v2871 = vunpack.c.l.b16 %v2839
        %v2872 = vunpack.c.l.b16 %v2840
        %v2873 = vunpack.c.l.b16 %v2841
        %v2874 = vpack.c.b16 %v2859, %v2858
        %v2875 = vpack.c.b16 %v2861, %v2860
        %v2876 = vpack.c.b16 %v2863, %v2862
        %v2877 = vpack.c.b16 %v2865, %v2864
        %v2878 = vpack.c.b16 %v2867, %v2866
        %v2879 = vpack.c.b16 %v2869, %v2868
        %v2880 = vpack.c.b16 %v2871, %v2870
        %v2881 = vpack.c.b16 %v2873, %v2872
        %2890 = vmatprep.subr.bf16.mxu0 0
        %2891 = vmatpush1.bf16.msra.mxu0 %v2874
        %2892 = vmatprep.subr.bf16.mxu0 0
        %2893 = vmatpush1.bf16.msra.mxu0 %v2875
        %2894 = vmatprep.subr.bf16.mxu0 0
        %2895 = vmatpush1.bf16.msra.mxu0 %v2876
        %2896 = vmatprep.subr.bf16.mxu0 0
        %2897 = vmatpush1.bf16.msra.mxu0 %v2877
        %2898 = vmatprep.subr.bf16.mxu0 0
        %2899 = vmatpush1.bf16.msra.mxu0 %v2878
        %2900 = vmatprep.subr.bf16.mxu0 0
        %2901 = vmatpush1.bf16.msra.mxu0 %v2879
        %2902 = vmatprep.subr.bf16.mxu0 0
        %2903 = vmatpush1.bf16.msra.mxu0 %v2880
        %2904 = vmatprep.subr.bf16.mxu0 0
        %2905 = vmatpush1.bf16.msra.mxu0 %v2881
        %2906 = vmatprep.subr.bf16.mxu0 0
        %2907 = vmatpush1.bf16.msra.mxu0 0
        %2908 = vmatprep.subr.bf16.mxu0 0
        %2909 = vmatpush1.bf16.msra.mxu0 0
        %2910 = vmatprep.subr.bf16.mxu0 0
        %2911 = vmatpush1.bf16.msra.mxu0 0
        %2912 = vmatprep.subr.bf16.mxu0 0
        %2913 = vmatpush1.bf16.msra.mxu0 0
        %2914 = vmatprep.subr.bf16.mxu0 0
        %2915 = vmatpush1.bf16.msra.mxu0 0
        %2916 = vmatprep.subr.bf16.mxu0 0
        %2917 = vmatpush1.bf16.msra.mxu0 0
        %2918 = vmatprep.subr.bf16.mxu0 0
        %2919 = vmatpush1.bf16.msra.mxu0 0
        %2920 = vmatprep.subr.bf16.mxu0 0
        %2921 = vmatpush1.bf16.msra.mxu0 0
        %2922 = vmatprep.mubr.bf16.mxu0 0
        %2923 = vmatmul.mubr.bf16.gmra.mrb[0].mxu0 %v2825
        %v2924 = vpop.f32.mrb[0].mxu0
        %v2925 = vadd.f32 0.0, %v2924
        %v2926 = vpop.f32.mrb[0].mxu0
        %v2927 = vpop.f32.mrb[0].mxu0
        %v2928 = vadd.f32 0.0, %v2927
        %v2929 = vpop.f32.mrb[0].mxu0
        %2930 = vdwg.mxu0
        %v2931 = vadd.f32 %v842, %v846
        %v2932 = vadd.f32 %v843, %v847
        %v2933 = vadd.f32 %v844, %v848
        %v2934 = vadd.f32 %v845, %v849
        %v2935 = vpack.c.bf16 %v2932, %v2931
        %v2936 = vpack.c.bf16 %v2934, %v2933
        %v2937 = vld [vmem:[#allocation14] sm:$0xf]
        %v2938 = vld [vmem:[#allocation14 + $0x4] sm:$0xf]
        %v2939 = vld [vmem:[#allocation14 + $0x8] sm:$0xf]
        %v2940 = vld [vmem:[#allocation14 + $0xc] sm:$0xf]
        %v2941 = vld [vmem:[#allocation14 + $0x10] sm:$0xf]
        %v2942 = vld [vmem:[#allocation14 + $0x14] sm:$0xf]
        %v2943 = vld [vmem:[#allocation14 + $0x18] sm:$0xf]
        %v2944 = vld [vmem:[#allocation14 + $0x1c] sm:$0xf]
        %v2945 = vld [vmem:[#allocation14 + $0x20] sm:$0xf]
        %v2946 = vld [vmem:[#allocation14 + $0x24] sm:$0xf]
        %v2947 = vld [vmem:[#allocation14 + $0x28] sm:$0xf]
        %v2948 = vld [vmem:[#allocation14 + $0x2c] sm:$0xf]
        %v2949 = vld [vmem:[#allocation14 + $0x30] sm:$0xf]
        %v2950 = vld [vmem:[#allocation14 + $0x34] sm:$0xf]
        %v2951 = vld [vmem:[#allocation14 + $0x38] sm:$0xf]
        %v2952 = vld [vmem:[#allocation14 + $0x3c] sm:$0xf]
        %v2969 = vunpack.c.l.b16 %v2937
        %v2970 = vunpack.c.l.b16 %v2938
        %v2971 = vunpack.c.l.b16 %v2939
        %v2972 = vunpack.c.l.b16 %v2940
        %v2973 = vunpack.c.l.b16 %v2941
        %v2974 = vunpack.c.l.b16 %v2942
        %v2975 = vunpack.c.l.b16 %v2943
        %v2976 = vunpack.c.l.b16 %v2944
        %v2977 = vunpack.c.l.b16 %v2945
        %v2978 = vunpack.c.l.b16 %v2946
        %v2979 = vunpack.c.l.b16 %v2947
        %v2980 = vunpack.c.l.b16 %v2948
        %v2981 = vunpack.c.l.b16 %v2949
        %v2982 = vunpack.c.l.b16 %v2950
        %v2983 = vunpack.c.l.b16 %v2951
        %v2984 = vunpack.c.l.b16 %v2952
        %v2985 = vpack.c.b16 %v2970, %v2969
        %v2986 = vpack.c.b16 %v2972, %v2971
        %v2987 = vpack.c.b16 %v2974, %v2973
        %v2988 = vpack.c.b16 %v2976, %v2975
        %v2989 = vpack.c.b16 %v2978, %v2977
        %v2990 = vpack.c.b16 %v2980, %v2979
        %v2991 = vpack.c.b16 %v2982, %v2981
        %v2992 = vpack.c.b16 %v2984, %v2983
        %3001 = vmatprep.subr.bf16.mxu0 0
        %3002 = vmatpush1.bf16.msra.mxu0 %v2985
        %3003 = vmatprep.subr.bf16.mxu0 0
        %3004 = vmatpush1.bf16.msra.mxu0 %v2986
        %3005 = vmatprep.subr.bf16.mxu0 0
        %3006 = vmatpush1.bf16.msra.mxu0 %v2987
        %3007 = vmatprep.subr.bf16.mxu0 0
        %3008 = vmatpush1.bf16.msra.mxu0 %v2988
        %3009 = vmatprep.subr.bf16.mxu0 0
        %3010 = vmatpush1.bf16.msra.mxu0 %v2989
        %3011 = vmatprep.subr.bf16.mxu0 0
        %3012 = vmatpush1.bf16.msra.mxu0 %v2990
        %3013 = vmatprep.subr.bf16.mxu0 0
        %3014 = vmatpush1.bf16.msra.mxu0 %v2991
        %3015 = vmatprep.subr.bf16.mxu0 0
        %3016 = vmatpush1.bf16.msra.mxu0 %v2992
        %3017 = vmatprep.subr.bf16.mxu0 0
        %3018 = vmatpush1.bf16.msra.mxu0 0
        %3019 = vmatprep.subr.bf16.mxu0 0
        %3020 = vmatpush1.bf16.msra.mxu0 0
        %3021 = vmatprep.subr.bf16.mxu0 0
        %3022 = vmatpush1.bf16.msra.mxu0 0
        %3023 = vmatprep.subr.bf16.mxu0 0
        %3024 = vmatpush1.bf16.msra.mxu0 0
        %3025 = vmatprep.subr.bf16.mxu0 0
        %3026 = vmatpush1.bf16.msra.mxu0 0
        %3027 = vmatprep.subr.bf16.mxu0 0
        %3028 = vmatpush1.bf16.msra.mxu0 0
        %3029 = vmatprep.subr.bf16.mxu0 0
        %3030 = vmatpush1.bf16.msra.mxu0 0
        %3031 = vmatprep.subr.bf16.mxu0 0
        %3032 = vmatpush1.bf16.msra.mxu0 0
        %3033 = vmatprep.mubr.bf16.mxu0 0
        %3034 = vmatmul.mubr.bf16.gmra.mrb[0].mxu0 %v2935
        %v3035 = vpop.f32.mrb[0].mxu0
        %v3036 = vadd.f32 0.0, %v3035
        %v3037 = vpop.f32.mrb[0].mxu0
        %v3038 = vpop.f32.mrb[0].mxu0
        %v3039 = vadd.f32 0.0, %v3038
        %v3040 = vpop.f32.mrb[0].mxu0
        %3041 = vmatprep.mubr.bf16.mxu0 0
        %3042 = vmatmul.mubr.bf16.gmra.mrb[0].mxu0 %v2936
        %v3043 = vpop.f32.mrb[0].mxu0
        %v3044 = vadd.f32 0.0, %v3043
        %v3045 = vpop.f32.mrb[0].mxu0
        %v3046 = vpop.f32.mrb[0].mxu0
        %v3047 = vadd.f32 0.0, %v3046
        %v3048 = vpop.f32.mrb[0].mxu0
        %3049 = vdwg.mxu0
        %v3050 = vpack.c.bf16 %v843, %v842
        %v3051 = vpack.c.bf16 %v845, %v844
        %v3052 = vld [vmem:[#allocation16] sm:$0xf]
        %v3053 = vld [vmem:[#allocation16 + $0x4] sm:$0xf]
        %v3054 = vld [vmem:[#allocation16 + $0x8] sm:$0xf]
        %v3055 = vld [vmem:[#allocation16 + $0xc] sm:$0xf]
        %v3056 = vld [vmem:[#allocation16 + $0x10] sm:$0xf]
        %v3057 = vld [vmem:[#allocation16 + $0x14] sm:$0xf]
        %v3058 = vld [vmem:[#allocation16 + $0x18] sm:$0xf]
        %v3059 = vld [vmem:[#allocation16 + $0x1c] sm:$0xf]
        %v3060 = vld [vmem:[#allocation16 + $0x20] sm:$0xf]
        %v3061 = vld [vmem:[#allocation16 + $0x24] sm:$0xf]
        %v3062 = vld [vmem:[#allocation16 + $0x28] sm:$0xf]
        %v3063 = vld [vmem:[#allocation16 + $0x2c] sm:$0xf]
        %v3064 = vld [vmem:[#allocation16 + $0x30] sm:$0xf]
        %v3065 = vld [vmem:[#allocation16 + $0x34] sm:$0xf]
        %v3066 = vld [vmem:[#allocation16 + $0x38] sm:$0xf]
        %v3067 = vld [vmem:[#allocation16 + $0x3c] sm:$0xf]
        %v3084 = vunpack.c.l.b16 %v3052
        %v3085 = vunpack.c.l.b16 %v3053
        %v3086 = vunpack.c.l.b16 %v3054
        %v3087 = vunpack.c.l.b16 %v3055
        %v3088 = vunpack.c.l.b16 %v3056
        %v3089 = vunpack.c.l.b16 %v3057
        %v3090 = vunpack.c.l.b16 %v3058
        %v3091 = vunpack.c.l.b16 %v3059
        %v3092 = vunpack.c.l.b16 %v3060
        %v3093 = vunpack.c.l.b16 %v3061
        %v3094 = vunpack.c.l.b16 %v3062
        %v3095 = vunpack.c.l.b16 %v3063
        %v3096 = vunpack.c.l.b16 %v3064
        %v3097 = vunpack.c.l.b16 %v3065
        %v3098 = vunpack.c.l.b16 %v3066
        %v3099 = vunpack.c.l.b16 %v3067
        %v3100 = vpack.c.b16 %v3085, %v3084
        %v3101 = vpack.c.b16 %v3087, %v3086
        %v3102 = vpack.c.b16 %v3089, %v3088
        %v3103 = vpack.c.b16 %v3091, %v3090
        %v3104 = vpack.c.b16 %v3093, %v3092
        %v3105 = vpack.c.b16 %v3095, %v3094
        %v3106 = vpack.c.b16 %v3097, %v3096
        %v3107 = vpack.c.b16 %v3099, %v3098
        %3116 = vmatprep.subr.bf16.mxu0 0
        %3117 = vmatpush1.bf16.msra.mxu0 %v3100
        %3118 = vmatprep.subr.bf16.mxu0 0
        %3119 = vmatpush1.bf16.msra.mxu0 %v3101
        %3120 = vmatprep.subr.bf16.mxu0 0
        %3121 = vmatpush1.bf16.msra.mxu0 %v3102
        %3122 = vmatprep.subr.bf16.mxu0 0
        %3123 = vmatpush1.bf16.msra.mxu0 %v3103
        %3124 = vmatprep.subr.bf16.mxu0 0
        %3125 = vmatpush1.bf16.msra.mxu0 %v3104
        %3126 = vmatprep.subr.bf16.mxu0 0
        %3127 = vmatpush1.bf16.msra.mxu0 %v3105
        %3128 = vmatprep.subr.bf16.mxu0 0
        %3129 = vmatpush1.bf16.msra.mxu0 %v3106
        %3130 = vmatprep.subr.bf16.mxu0 0
        %3131 = vmatpush1.bf16.msra.mxu0 %v3107
        %3132 = vmatprep.subr.bf16.mxu0 0
        %3133 = vmatpush1.bf16.msra.mxu0 0
        %3134 = vmatprep.subr.bf16.mxu0 0
        %3135 = vmatpush1.bf16.msra.mxu0 0
        %3136 = vmatprep.subr.bf16.mxu0 0
        %3137 = vmatpush1.bf16.msra.mxu0 0
        %3138 = vmatprep.subr.bf16.mxu0 0
        %3139 = vmatpush1.bf16.msra.mxu0 0
        %3140 = vmatprep.subr.bf16.mxu0 0
        %3141 = vmatpush1.bf16.msra.mxu0 0
        %3142 = vmatprep.subr.bf16.mxu0 0
        %3143 = vmatpush1.bf16.msra.mxu0 0
        %3144 = vmatprep.subr.bf16.mxu0 0
        %3145 = vmatpush1.bf16.msra.mxu0 0
        %3146 = vmatprep.subr.bf16.mxu0 0
        %3147 = vmatpush1.bf16.msra.mxu0 0
        %3148 = vmatprep.mubr.bf16.mxu0 0
        %3149 = vmatmul.mubr.bf16.gmra.mrb[0].mxu0 %v3050
        %v3150 = vpop.f32.mrb[0].mxu0
        %v3151 = vadd.f32 0.0, %v3150
        %v3152 = vpop.f32.mrb[0].mxu0
        %v3153 = vpop.f32.mrb[0].mxu0
        %v3154 = vadd.f32 0.0, %v3153
        %v3155 = vpop.f32.mrb[0].mxu0
        %3156 = vmatprep.mubr.bf16.mxu0 0
        %3157 = vmatmul.mubr.bf16.gmra.mrb[0].mxu0 %v3051
        %v3158 = vpop.f32.mrb[0].mxu0
        %v3159 = vadd.f32 0.0, %v3158
        %v3160 = vpop.f32.mrb[0].mxu0
        %v3161 = vpop.f32.mrb[0].mxu0
        %v3162 = vadd.f32 0.0, %v3161
        %v3163 = vpop.f32.mrb[0].mxu0
        %3164 = vdwg.mxu0
        %3167 = vrot.lane.b32.xlu0 %v2925, 96
        %v3168 = vpop.permute.xlu0 %3167
        %3169 = vrot.lane.b32.xlu0 %v2928, 96
        %v3170 = vpop.permute.xlu0 %3169
        %3173 = vrot.lane.b32.xlu0 %v2925, 64
        %v3174 = vpop.permute.xlu0 %3173
        %3175 = vrot.lane.b32.xlu0 %v2928, 64
        %v3176 = vpop.permute.xlu0 %3175
        %3179 = vrot.lane.b32.xlu0 %v2925, 32
        %v3180 = vpop.permute.xlu0 %3179
        %3181 = vrot.lane.b32.xlu0 %v2928, 32
        %v3182 = vpop.permute.xlu0 %3181
        %v3185 = vcombine.low %v2925, %v3174
        %v3186 = vcombine.high %v2925, %v3174
        %v3188 = vunpack.c.l.s4 1983009808
        %v3189 = vunpack.c.0.s8 %v3188
        %v3190 = vlaneseq
        %v3191 = vshrl.u32 %v3190, 7
        %v3192 = vsub.s32 %v3189, %v3191
        %v3193 = vrot.slane %v3185, %v3192
        %v3195 = vunpack.c.l.s4 1983009808
        %v3196 = vunpack.c.0.s8 %v3195
        %v3197 = vlaneseq
        %v3198 = vshrl.u32 %v3197, 7
        %v3199 = vsub.s32 %v3196, %v3198
        %v3200 = vrot.slane %v3186, %v3199
        %v3201 = vcombine.low %v3168, %v3180
        %v3202 = vcombine.high %v3168, %v3180
        %v3204 = vunpack.c.l.s4 1983009808
        %v3205 = vunpack.c.0.s8 %v3204
        %v3206 = vlaneseq
        %v3207 = vshrl.u32 %v3206, 7
        %v3208 = vsub.s32 %v3205, %v3207
        %v3209 = vrot.slane %v3201, %v3208
        %v3211 = vunpack.c.l.s4 1983009808
        %v3212 = vunpack.c.0.s8 %v3211
        %v3213 = vlaneseq
        %v3214 = vshrl.u32 %v3213, 7
        %v3215 = vsub.s32 %v3212, %v3214
        %v3216 = vrot.slane %v3202, %v3215
        %v3217 = vcombine.low %v3193, %v3209
        %v3218 = vcombine.high %v3193, %v3209
        %v3220 = vunpack.c.l.s4 1934713408
        %v3221 = vunpack.c.0.s8 %v3220
        %v3222 = vlaneseq
        %v3223 = vshrl.u32 %v3222, 7
        %v3224 = vsub.s32 %v3221, %v3223
        %v3225 = vrot.slane %v3217, %v3224
        %v3227 = vunpack.c.l.s4 1934713408
        %v3228 = vunpack.c.0.s8 %v3227
        %v3229 = vlaneseq
        %v3230 = vshrl.u32 %v3229, 7
        %v3231 = vsub.s32 %v3228, %v3230
        %v3232 = vrot.slane %v3218, %v3231
        %v3233 = vcombine.low %v3200, %v3216
        %v3234 = vcombine.high %v3200, %v3216
        %v3236 = vunpack.c.l.s4 1934713408
        %v3237 = vunpack.c.0.s8 %v3236
        %v3238 = vlaneseq
        %v3239 = vshrl.u32 %v3238, 7
        %v3240 = vsub.s32 %v3237, %v3239
        %v3241 = vrot.slane %v3233, %v3240
        %v3243 = vunpack.c.l.s4 1934713408
        %v3244 = vunpack.c.0.s8 %v3243
        %v3245 = vlaneseq
        %v3246 = vshrl.u32 %v3245, 7
        %v3247 = vsub.s32 %v3244, %v3246
        %v3248 = vrot.slane %v3234, %v3247
        %v3249 = vcombine.high %v3225, 0.0
        %v3250 = vcombine.high %v3232, 0.0
        %v3251 = vcombine.high %v3241, 0.0
        %v3252 = vcombine.high %v3248, 0.0
        %v3253 = vcombine.low %v2928, %v3176
        %v3254 = vcombine.high %v2928, %v3176
        %v3256 = vunpack.c.l.s4 1983009808
        %v3257 = vunpack.c.0.s8 %v3256
        %v3258 = vlaneseq
        %v3259 = vshrl.u32 %v3258, 7
        %v3260 = vsub.s32 %v3257, %v3259
        %v3261 = vrot.slane %v3253, %v3260
        %v3263 = vunpack.c.l.s4 1983009808
        %v3264 = vunpack.c.0.s8 %v3263
        %v3265 = vlaneseq
        %v3266 = vshrl.u32 %v3265, 7
        %v3267 = vsub.s32 %v3264, %v3266
        %v3268 = vrot.slane %v3254, %v3267
        %v3269 = vcombine.low %v3170, %v3182
        %v3270 = vcombine.high %v3170, %v3182
        %v3272 = vunpack.c.l.s4 1983009808
        %v3273 = vunpack.c.0.s8 %v3272
        %v3274 = vlaneseq
        %v3275 = vshrl.u32 %v3274, 7
        %v3276 = vsub.s32 %v3273, %v3275
        %v3277 = vrot.slane %v3269, %v3276
        %v3279 = vunpack.c.l.s4 1983009808
        %v3280 = vunpack.c.0.s8 %v3279
        %v3281 = vlaneseq
        %v3282 = vshrl.u32 %v3281, 7
        %v3283 = vsub.s32 %v3280, %v3282
        %v3284 = vrot.slane %v3270, %v3283
        %v3285 = vcombine.low %v3261, %v3277
        %v3286 = vcombine.high %v3261, %v3277
        %v3288 = vunpack.c.l.s4 1934713408
        %v3289 = vunpack.c.0.s8 %v3288
        %v3290 = vlaneseq
        %v3291 = vshrl.u32 %v3290, 7
        %v3292 = vsub.s32 %v3289, %v3291
        %v3293 = vrot.slane %v3285, %v3292
        %v3295 = vunpack.c.l.s4 1934713408
        %v3296 = vunpack.c.0.s8 %v3295
        %v3297 = vlaneseq
        %v3298 = vshrl.u32 %v3297, 7
        %v3299 = vsub.s32 %v3296, %v3298
        %v3300 = vrot.slane %v3286, %v3299
        %v3301 = vcombine.low %v3268, %v3284
        %v3302 = vcombine.high %v3268, %v3284
        %v3304 = vunpack.c.l.s4 1934713408
        %v3305 = vunpack.c.0.s8 %v3304
        %v3306 = vlaneseq
        %v3307 = vshrl.u32 %v3306, 7
        %v3308 = vsub.s32 %v3305, %v3307
        %v3309 = vrot.slane %v3301, %v3308
        %v3311 = vunpack.c.l.s4 1934713408
        %v3312 = vunpack.c.0.s8 %v3311
        %v3313 = vlaneseq
        %v3314 = vshrl.u32 %v3313, 7
        %v3315 = vsub.s32 %v3312, %v3314
        %v3316 = vrot.slane %v3302, %v3315
        %v3317 = vcombine.high %v3293, 0.0
        %v3318 = vcombine.high %v3300, 0.0
        %v3319 = vcombine.high %v3309, 0.0
        %v3320 = vcombine.high %v3316, 0.0
        %v3321 = vcombine.low %v3225, %v3232
        %v3323 = vunpack.c.l.s4 1983009808
        %v3324 = vunpack.c.0.s8 %v3323
        %v3325 = vlaneseq
        %v3326 = vshrl.u32 %v3325, 7
        %v3327 = vsub.s32 %v3324, %v3326
        %v3328 = vrot.slane %v3321, %v3327
        %v3329 = vcombine.low %v3249, %v3250
        %v3331 = vunpack.c.l.s4 1983009808
        %v3332 = vunpack.c.0.s8 %v3331
        %v3333 = vlaneseq
        %v3334 = vshrl.u32 %v3333, 7
        %v3335 = vsub.s32 %v3332, %v3334
        %v3336 = vrot.slane %v3329, %v3335
        %v3337 = vcombine.low %v3241, %v3248
        %v3339 = vunpack.c.l.s4 1983009808
        %v3340 = vunpack.c.0.s8 %v3339
        %v3341 = vlaneseq
        %v3342 = vshrl.u32 %v3341, 7
        %v3343 = vsub.s32 %v3340, %v3342
        %v3344 = vrot.slane %v3337, %v3343
        %v3345 = vcombine.low %v3251, %v3252
        %v3347 = vunpack.c.l.s4 1983009808
        %v3348 = vunpack.c.0.s8 %v3347
        %v3349 = vlaneseq
        %v3350 = vshrl.u32 %v3349, 7
        %v3351 = vsub.s32 %v3348, %v3350
        %v3352 = vrot.slane %v3345, %v3351
        %v3353 = vcombine.low %v3328, %v3336
        %v3354 = vcombine.high %v3328, %v3336
        %v3356 = vunpack.c.l.s4 1934713408
        %v3357 = vunpack.c.0.s8 %v3356
        %v3358 = vlaneseq
        %v3359 = vshrl.u32 %v3358, 7
        %v3360 = vsub.s32 %v3357, %v3359
        %v3361 = vrot.slane %v3353, %v3360
        %v3363 = vunpack.c.l.s4 1934713408
        %v3364 = vunpack.c.0.s8 %v3363
        %v3365 = vlaneseq
        %v3366 = vshrl.u32 %v3365, 7
        %v3367 = vsub.s32 %v3364, %v3366
        %v3368 = vrot.slane %v3354, %v3367
        %v3369 = vcombine.low %v3344, %v3352
        %v3370 = vcombine.high %v3344, %v3352
        %v3372 = vunpack.c.l.s4 1934713408
        %v3373 = vunpack.c.0.s8 %v3372
        %v3374 = vlaneseq
        %v3375 = vshrl.u32 %v3374, 7
        %v3376 = vsub.s32 %v3373, %v3375
        %v3377 = vrot.slane %v3369, %v3376
        %v3379 = vunpack.c.l.s4 1934713408
        %v3380 = vunpack.c.0.s8 %v3379
        %v3381 = vlaneseq
        %v3382 = vshrl.u32 %v3381, 7
        %v3383 = vsub.s32 %v3380, %v3382
        %v3384 = vrot.slane %v3370, %v3383
        %v3385 = vcombine.low %v3361, %v3377
        %v3386 = vcombine.high %v3361, %v3377
        %v3387 = vcombine.low %v3368, %v3384
        %v3388 = vcombine.high %v3368, %v3384
        %v3389 = vcombine.low %v3293, %v3300
        %v3391 = vunpack.c.l.s4 1983009808
        %v3392 = vunpack.c.0.s8 %v3391
        %v3393 = vlaneseq
        %v3394 = vshrl.u32 %v3393, 7
        %v3395 = vsub.s32 %v3392, %v3394
        %v3396 = vrot.slane %v3389, %v3395
        %v3397 = vcombine.low %v3317, %v3318
        %v3399 = vunpack.c.l.s4 1983009808
        %v3400 = vunpack.c.0.s8 %v3399
        %v3401 = vlaneseq
        %v3402 = vshrl.u32 %v3401, 7
        %v3403 = vsub.s32 %v3400, %v3402
        %v3404 = vrot.slane %v3397, %v3403
        %v3405 = vcombine.low %v3309, %v3316
        %v3407 = vunpack.c.l.s4 1983009808
        %v3408 = vunpack.c.0.s8 %v3407
        %v3409 = vlaneseq
        %v3410 = vshrl.u32 %v3409, 7
        %v3411 = vsub.s32 %v3408, %v3410
        %v3412 = vrot.slane %v3405, %v3411
        %v3413 = vcombine.low %v3319, %v3320
        %v3415 = vunpack.c.l.s4 1983009808
        %v3416 = vunpack.c.0.s8 %v3415
        %v3417 = vlaneseq
        %v3418 = vshrl.u32 %v3417, 7
        %v3419 = vsub.s32 %v3416, %v3418
        %v3420 = vrot.slane %v3413, %v3419
        %v3421 = vcombine.low %v3396, %v3404
        %v3422 = vcombine.high %v3396, %v3404
        %v3424 = vunpack.c.l.s4 1934713408
        %v3425 = vunpack.c.0.s8 %v3424
        %v3426 = vlaneseq
        %v3427 = vshrl.u32 %v3426, 7
        %v3428 = vsub.s32 %v3425, %v3427
        %v3429 = vrot.slane %v3421, %v3428
        %v3431 = vunpack.c.l.s4 1934713408
        %v3432 = vunpack.c.0.s8 %v3431
        %v3433 = vlaneseq
        %v3434 = vshrl.u32 %v3433, 7
        %v3435 = vsub.s32 %v3432, %v3434
        %v3436 = vrot.slane %v3422, %v3435
        %v3437 = vcombine.low %v3412, %v3420
        %v3438 = vcombine.high %v3412, %v3420
        %v3440 = vunpack.c.l.s4 1934713408
        %v3441 = vunpack.c.0.s8 %v3440
        %v3442 = vlaneseq
        %v3443 = vshrl.u32 %v3442, 7
        %v3444 = vsub.s32 %v3441, %v3443
        %v3445 = vrot.slane %v3437, %v3444
        %v3447 = vunpack.c.l.s4 1934713408
        %v3448 = vunpack.c.0.s8 %v3447
        %v3449 = vlaneseq
        %v3450 = vshrl.u32 %v3449, 7
        %v3451 = vsub.s32 %v3448, %v3450
        %v3452 = vrot.slane %v3438, %v3451
        %v3453 = vcombine.low %v3429, %v3445
        %v3454 = vcombine.high %v3429, %v3445
        %v3455 = vcombine.low %v3436, %v3452
        %v3456 = vcombine.high %v3436, %v3452
        %v3457 = vpack.c.bf16 %v3453, %v3385
        %v3458 = vpack.c.bf16 %v3454, %v3386
        %v3459 = vpack.c.bf16 %v3455, %v3387
        %v3460 = vpack.c.bf16 %v3456, %v3388
        %3465 = vrot.lane.b32.xlu0 %v3036, 96
        %v3466 = vpop.permute.xlu0 %3465
        %3467 = vrot.lane.b32.xlu0 %v3039, 96
        %v3468 = vpop.permute.xlu0 %3467
        %3469 = vrot.lane.b32.xlu0 %v3044, 96
        %v3470 = vpop.permute.xlu0 %3469
        %3471 = vrot.lane.b32.xlu0 %v3047, 96
        %v3472 = vpop.permute.xlu0 %3471
        %3477 = vrot.lane.b32.xlu0 %v3036, 64
        %v3478 = vpop.permute.xlu0 %3477
        %3479 = vrot.lane.b32.xlu0 %v3039, 64
        %v3480 = vpop.permute.xlu0 %3479
        %3481 = vrot.lane.b32.xlu0 %v3044, 64
        %v3482 = vpop.permute.xlu0 %3481
        %3483 = vrot.lane.b32.xlu0 %v3047, 64
        %v3484 = vpop.permute.xlu0 %3483
        %3489 = vrot.lane.b32.xlu0 %v3036, 32
        %v3490 = vpop.permute.xlu0 %3489
        %3491 = vrot.lane.b32.xlu0 %v3039, 32
        %v3492 = vpop.permute.xlu0 %3491
        %3493 = vrot.lane.b32.xlu0 %v3044, 32
        %v3494 = vpop.permute.xlu0 %3493
        %3495 = vrot.lane.b32.xlu0 %v3047, 32
        %v3496 = vpop.permute.xlu0 %3495
        %v3501 = vcombine.low %v3036, %v3478
        %v3502 = vcombine.high %v3036, %v3478
        %v3504 = vunpack.c.l.s4 1983009808
        %v3505 = vunpack.c.0.s8 %v3504
        %v3506 = vlaneseq
        %v3507 = vshrl.u32 %v3506, 7
        %v3508 = vsub.s32 %v3505, %v3507
        %v3509 = vrot.slane %v3501, %v3508
        %v3511 = vunpack.c.l.s4 1983009808
        %v3512 = vunpack.c.0.s8 %v3511
        %v3513 = vlaneseq
        %v3514 = vshrl.u32 %v3513, 7
        %v3515 = vsub.s32 %v3512, %v3514
        %v3516 = vrot.slane %v3502, %v3515
        %v3517 = vcombine.low %v3466, %v3490
        %v3518 = vcombine.high %v3466, %v3490
        %v3520 = vunpack.c.l.s4 1983009808
        %v3521 = vunpack.c.0.s8 %v3520
        %v3522 = vlaneseq
        %v3523 = vshrl.u32 %v3522, 7
        %v3524 = vsub.s32 %v3521, %v3523
        %v3525 = vrot.slane %v3517, %v3524
        %v3527 = vunpack.c.l.s4 1983009808
        %v3528 = vunpack.c.0.s8 %v3527
        %v3529 = vlaneseq
        %v3530 = vshrl.u32 %v3529, 7
        %v3531 = vsub.s32 %v3528, %v3530
        %v3532 = vrot.slane %v3518, %v3531
        %v3533 = vcombine.low %v3509, %v3525
        %v3534 = vcombine.high %v3509, %v3525
        %v3536 = vunpack.c.l.s4 1934713408
        %v3537 = vunpack.c.0.s8 %v3536
        %v3538 = vlaneseq
        %v3539 = vshrl.u32 %v3538, 7
        %v3540 = vsub.s32 %v3537, %v3539
        %v3541 = vrot.slane %v3533, %v3540
        %v3543 = vunpack.c.l.s4 1934713408
        %v3544 = vunpack.c.0.s8 %v3543
        %v3545 = vlaneseq
        %v3546 = vshrl.u32 %v3545, 7
        %v3547 = vsub.s32 %v3544, %v3546
        %v3548 = vrot.slane %v3534, %v3547
        %v3549 = vcombine.low %v3516, %v3532
        %v3550 = vcombine.high %v3516, %v3532
        %v3552 = vunpack.c.l.s4 1934713408
        %v3553 = vunpack.c.0.s8 %v3552
        %v3554 = vlaneseq
        %v3555 = vshrl.u32 %v3554, 7
        %v3556 = vsub.s32 %v3553, %v3555
        %v3557 = vrot.slane %v3549, %v3556
        %v3559 = vunpack.c.l.s4 1934713408
        %v3560 = vunpack.c.0.s8 %v3559
        %v3561 = vlaneseq
        %v3562 = vshrl.u32 %v3561, 7
        %v3563 = vsub.s32 %v3560, %v3562
        %v3564 = vrot.slane %v3550, %v3563
        %v3565 = vcombine.high %v3541, 0.0
        %v3566 = vcombine.high %v3548, 0.0
        %v3567 = vcombine.high %v3557, 0.0
        %v3568 = vcombine.high %v3564, 0.0
        %v3569 = vcombine.low %v3039, %v3480
        %v3570 = vcombine.high %v3039, %v3480
        %v3572 = vunpack.c.l.s4 1983009808
        %v3573 = vunpack.c.0.s8 %v3572
        %v3574 = vlaneseq
        %v3575 = vshrl.u32 %v3574, 7
        %v3576 = vsub.s32 %v3573, %v3575
        %v3577 = vrot.slane %v3569, %v3576
        %v3579 = vunpack.c.l.s4 1983009808
        %v3580 = vunpack.c.0.s8 %v3579
        %v3581 = vlaneseq
        %v3582 = vshrl.u32 %v3581, 7
        %v3583 = vsub.s32 %v3580, %v3582
        %v3584 = vrot.slane %v3570, %v3583
        %v3585 = vcombine.low %v3468, %v3492
        %v3586 = vcombine.high %v3468, %v3492
        %v3588 = vunpack.c.l.s4 1983009808
        %v3589 = vunpack.c.0.s8 %v3588
        %v3590 = vlaneseq
        %v3591 = vshrl.u32 %v3590, 7
        %v3592 = vsub.s32 %v3589, %v3591
        %v3593 = vrot.slane %v3585, %v3592
        %v3595 = vunpack.c.l.s4 1983009808
        %v3596 = vunpack.c.0.s8 %v3595
        %v3597 = vlaneseq
        %v3598 = vshrl.u32 %v3597, 7
        %v3599 = vsub.s32 %v3596, %v3598
        %v3600 = vrot.slane %v3586, %v3599
        %v3601 = vcombine.low %v3577, %v3593
        %v3602 = vcombine.high %v3577, %v3593
        %v3604 = vunpack.c.l.s4 1934713408
        %v3605 = vunpack.c.0.s8 %v3604
        %v3606 = vlaneseq
        %v3607 = vshrl.u32 %v3606, 7
        %v3608 = vsub.s32 %v3605, %v3607
        %v3609 = vrot.slane %v3601, %v3608
        %v3611 = vunpack.c.l.s4 1934713408
        %v3612 = vunpack.c.0.s8 %v3611
        %v3613 = vlaneseq
        %v3614 = vshrl.u32 %v3613, 7
        %v3615 = vsub.s32 %v3612, %v3614
        %v3616 = vrot.slane %v3602, %v3615
        %v3617 = vcombine.low %v3584, %v3600
        %v3618 = vcombine.high %v3584, %v3600
        %v3620 = vunpack.c.l.s4 1934713408
        %v3621 = vunpack.c.0.s8 %v3620
        %v3622 = vlaneseq
        %v3623 = vshrl.u32 %v3622, 7
        %v3624 = vsub.s32 %v3621, %v3623
        %v3625 = vrot.slane %v3617, %v3624
        %v3627 = vunpack.c.l.s4 1934713408
        %v3628 = vunpack.c.0.s8 %v3627
        %v3629 = vlaneseq
        %v3630 = vshrl.u32 %v3629, 7
        %v3631 = vsub.s32 %v3628, %v3630
        %v3632 = vrot.slane %v3618, %v3631
        %v3633 = vcombine.high %v3609, 0.0
        %v3634 = vcombine.high %v3616, 0.0
        %v3635 = vcombine.high %v3625, 0.0
        %v3636 = vcombine.high %v3632, 0.0
        %v3637 = vcombine.low %v3044, %v3482
        %v3638 = vcombine.high %v3044, %v3482
        %v3640 = vunpack.c.l.s4 1983009808
        %v3641 = vunpack.c.0.s8 %v3640
        %v3642 = vlaneseq
        %v3643 = vshrl.u32 %v3642, 7
        %v3644 = vsub.s32 %v3641, %v3643
        %v3645 = vrot.slane %v3637, %v3644
        %v3647 = vunpack.c.l.s4 1983009808
        %v3648 = vunpack.c.0.s8 %v3647
        %v3649 = vlaneseq
        %v3650 = vshrl.u32 %v3649, 7
        %v3651 = vsub.s32 %v3648, %v3650
        %v3652 = vrot.slane %v3638, %v3651
        %v3653 = vcombine.low %v3470, %v3494
        %v3654 = vcombine.high %v3470, %v3494
        %v3656 = vunpack.c.l.s4 1983009808
        %v3657 = vunpack.c.0.s8 %v3656
        %v3658 = vlaneseq
        %v3659 = vshrl.u32 %v3658, 7
        %v3660 = vsub.s32 %v3657, %v3659
        %v3661 = vrot.slane %v3653, %v3660
        %v3663 = vunpack.c.l.s4 1983009808
        %v3664 = vunpack.c.0.s8 %v3663
        %v3665 = vlaneseq
        %v3666 = vshrl.u32 %v3665, 7
        %v3667 = vsub.s32 %v3664, %v3666
        %v3668 = vrot.slane %v3654, %v3667
        %v3669 = vcombine.low %v3645, %v3661
        %v3670 = vcombine.high %v3645, %v3661
        %v3672 = vunpack.c.l.s4 1934713408
        %v3673 = vunpack.c.0.s8 %v3672
        %v3674 = vlaneseq
        %v3675 = vshrl.u32 %v3674, 7
        %v3676 = vsub.s32 %v3673, %v3675
        %v3677 = vrot.slane %v3669, %v3676
        %v3679 = vunpack.c.l.s4 1934713408
        %v3680 = vunpack.c.0.s8 %v3679
        %v3681 = vlaneseq
        %v3682 = vshrl.u32 %v3681, 7
        %v3683 = vsub.s32 %v3680, %v3682
        %v3684 = vrot.slane %v3670, %v3683
        %v3685 = vcombine.low %v3652, %v3668
        %v3686 = vcombine.high %v3652, %v3668
        %v3688 = vunpack.c.l.s4 1934713408
        %v3689 = vunpack.c.0.s8 %v3688
        %v3690 = vlaneseq
        %v3691 = vshrl.u32 %v3690, 7
        %v3692 = vsub.s32 %v3689, %v3691
        %v3693 = vrot.slane %v3685, %v3692
        %v3695 = vunpack.c.l.s4 1934713408
        %v3696 = vunpack.c.0.s8 %v3695
        %v3697 = vlaneseq
        %v3698 = vshrl.u32 %v3697, 7
        %v3699 = vsub.s32 %v3696, %v3698
        %v3700 = vrot.slane %v3686, %v3699
        %v3701 = vcombine.high %v3677, 0.0
        %v3702 = vcombine.high %v3684, 0.0
        %v3703 = vcombine.high %v3693, 0.0
        %v3704 = vcombine.high %v3700, 0.0
        %v3705 = vcombine.low %v3047, %v3484
        %v3706 = vcombine.high %v3047, %v3484
        %v3708 = vunpack.c.l.s4 1983009808
        %v3709 = vunpack.c.0.s8 %v3708
        %v3710 = vlaneseq
        %v3711 = vshrl.u32 %v3710, 7
        %v3712 = vsub.s32 %v3709, %v3711
        %v3713 = vrot.slane %v3705, %v3712
        %v3715 = vunpack.c.l.s4 1983009808
        %v3716 = vunpack.c.0.s8 %v3715
        %v3717 = vlaneseq
        %v3718 = vshrl.u32 %v3717, 7
        %v3719 = vsub.s32 %v3716, %v3718
        %v3720 = vrot.slane %v3706, %v3719
        %v3721 = vcombine.low %v3472, %v3496
        %v3722 = vcombine.high %v3472, %v3496
        %v3724 = vunpack.c.l.s4 1983009808
        %v3725 = vunpack.c.0.s8 %v3724
        %v3726 = vlaneseq
        %v3727 = vshrl.u32 %v3726, 7
        %v3728 = vsub.s32 %v3725, %v3727
        %v3729 = vrot.slane %v3721, %v3728
        %v3731 = vunpack.c.l.s4 1983009808
        %v3732 = vunpack.c.0.s8 %v3731
        %v3733 = vlaneseq
        %v3734 = vshrl.u32 %v3733, 7
        %v3735 = vsub.s32 %v3732, %v3734
        %v3736 = vrot.slane %v3722, %v3735
        %v3737 = vcombine.low %v3713, %v3729
        %v3738 = vcombine.high %v3713, %v3729
        %v3740 = vunpack.c.l.s4 1934713408
        %v3741 = vunpack.c.0.s8 %v3740
        %v3742 = vlaneseq
        %v3743 = vshrl.u32 %v3742, 7
        %v3744 = vsub.s32 %v3741, %v3743
        %v3745 = vrot.slane %v3737, %v3744
        %v3747 = vunpack.c.l.s4 1934713408
        %v3748 = vunpack.c.0.s8 %v3747
        %v3749 = vlaneseq
        %v3750 = vshrl.u32 %v3749, 7
        %v3751 = vsub.s32 %v3748, %v3750
        %v3752 = vrot.slane %v3738, %v3751
        %v3753 = vcombine.low %v3720, %v3736
        %v3754 = vcombine.high %v3720, %v3736
        %v3756 = vunpack.c.l.s4 1934713408
        %v3757 = vunpack.c.0.s8 %v3756
        %v3758 = vlaneseq
        %v3759 = vshrl.u32 %v3758, 7
        %v3760 = vsub.s32 %v3757, %v3759
        %v3761 = vrot.slane %v3753, %v3760
        %v3763 = vunpack.c.l.s4 1934713408
        %v3764 = vunpack.c.0.s8 %v3763
        %v3765 = vlaneseq
        %v3766 = vshrl.u32 %v3765, 7
        %v3767 = vsub.s32 %v3764, %v3766
        %v3768 = vrot.slane %v3754, %v3767
        %v3769 = vcombine.high %v3745, 0.0
        %v3770 = vcombine.high %v3752, 0.0
        %v3771 = vcombine.high %v3761, 0.0
        %v3772 = vcombine.high %v3768, 0.0
        %v3773 = vcombine.low %v3541, %v3548
        %v3775 = vunpack.c.l.s4 1983009808
        %v3776 = vunpack.c.0.s8 %v3775
        %v3777 = vlaneseq
        %v3778 = vshrl.u32 %v3777, 7
        %v3779 = vsub.s32 %v3776, %v3778
        %v3780 = vrot.slane %v3773, %v3779
        %v3781 = vcombine.low %v3565, %v3566
        %v3783 = vunpack.c.l.s4 1983009808
        %v3784 = vunpack.c.0.s8 %v3783
        %v3785 = vlaneseq
        %v3786 = vshrl.u32 %v3785, 7
        %v3787 = vsub.s32 %v3784, %v3786
        %v3788 = vrot.slane %v3781, %v3787
        %v3789 = vcombine.low %v3557, %v3564
        %v3791 = vunpack.c.l.s4 1983009808
        %v3792 = vunpack.c.0.s8 %v3791
        %v3793 = vlaneseq
        %v3794 = vshrl.u32 %v3793, 7
        %v3795 = vsub.s32 %v3792, %v3794
        %v3796 = vrot.slane %v3789, %v3795
        %v3797 = vcombine.low %v3567, %v3568
        %v3799 = vunpack.c.l.s4 1983009808
        %v3800 = vunpack.c.0.s8 %v3799
        %v3801 = vlaneseq
        %v3802 = vshrl.u32 %v3801, 7
        %v3803 = vsub.s32 %v3800, %v3802
        %v3804 = vrot.slane %v3797, %v3803
        %v3805 = vcombine.low %v3780, %v3788
        %v3806 = vcombine.high %v3780, %v3788
        %v3808 = vunpack.c.l.s4 1934713408
        %v3809 = vunpack.c.0.s8 %v3808
        %v3810 = vlaneseq
        %v3811 = vshrl.u32 %v3810, 7
        %v3812 = vsub.s32 %v3809, %v3811
        %v3813 = vrot.slane %v3805, %v3812
        %v3815 = vunpack.c.l.s4 1934713408
        %v3816 = vunpack.c.0.s8 %v3815
        %v3817 = vlaneseq
        %v3818 = vshrl.u32 %v3817, 7
        %v3819 = vsub.s32 %v3816, %v3818
        %v3820 = vrot.slane %v3806, %v3819
        %v3821 = vcombine.low %v3796, %v3804
        %v3822 = vcombine.high %v3796, %v3804
        %v3824 = vunpack.c.l.s4 1934713408
        %v3825 = vunpack.c.0.s8 %v3824
        %v3826 = vlaneseq
        %v3827 = vshrl.u32 %v3826, 7
        %v3828 = vsub.s32 %v3825, %v3827
        %v3829 = vrot.slane %v3821, %v3828
        %v3831 = vunpack.c.l.s4 1934713408
        %v3832 = vunpack.c.0.s8 %v3831
        %v3833 = vlaneseq
        %v3834 = vshrl.u32 %v3833, 7
        %v3835 = vsub.s32 %v3832, %v3834
        %v3836 = vrot.slane %v3822, %v3835
        %v3837 = vcombine.low %v3813, %v3829
        %v3838 = vcombine.high %v3813, %v3829
        %v3839 = vcombine.low %v3820, %v3836
        %v3840 = vcombine.high %v3820, %v3836
        %v3841 = vcombine.low %v3609, %v3616
        %v3843 = vunpack.c.l.s4 1983009808
        %v3844 = vunpack.c.0.s8 %v3843
        %v3845 = vlaneseq
        %v3846 = vshrl.u32 %v3845, 7
        %v3847 = vsub.s32 %v3844, %v3846
        %v3848 = vrot.slane %v3841, %v3847
        %v3849 = vcombine.low %v3633, %v3634
        %v3851 = vunpack.c.l.s4 1983009808
        %v3852 = vunpack.c.0.s8 %v3851
        %v3853 = vlaneseq
        %v3854 = vshrl.u32 %v3853, 7
        %v3855 = vsub.s32 %v3852, %v3854
        %v3856 = vrot.slane %v3849, %v3855
        %v3857 = vcombine.low %v3625, %v3632
        %v3859 = vunpack.c.l.s4 1983009808
        %v3860 = vunpack.c.0.s8 %v3859
        %v3861 = vlaneseq
        %v3862 = vshrl.u32 %v3861, 7
        %v3863 = vsub.s32 %v3860, %v3862
        %v3864 = vrot.slane %v3857, %v3863
        %v3865 = vcombine.low %v3635, %v3636
        %v3867 = vunpack.c.l.s4 1983009808
        %v3868 = vunpack.c.0.s8 %v3867
        %v3869 = vlaneseq
        %v3870 = vshrl.u32 %v3869, 7
        %v3871 = vsub.s32 %v3868, %v3870
        %v3872 = vrot.slane %v3865, %v3871
        %v3873 = vcombine.low %v3848, %v3856
        %v3874 = vcombine.high %v3848, %v3856
        %v3876 = vunpack.c.l.s4 1934713408
        %v3877 = vunpack.c.0.s8 %v3876
        %v3878 = vlaneseq
        %v3879 = vshrl.u32 %v3878, 7
        %v3880 = vsub.s32 %v3877, %v3879
        %v3881 = vrot.slane %v3873, %v3880
        %v3883 = vunpack.c.l.s4 1934713408
        %v3884 = vunpack.c.0.s8 %v3883
        %v3885 = vlaneseq
        %v3886 = vshrl.u32 %v3885, 7
        %v3887 = vsub.s32 %v3884, %v3886
        %v3888 = vrot.slane %v3874, %v3887
        %v3889 = vcombine.low %v3864, %v3872
        %v3890 = vcombine.high %v3864, %v3872
        %v3892 = vunpack.c.l.s4 1934713408
        %v3893 = vunpack.c.0.s8 %v3892
        %v3894 = vlaneseq
        %v3895 = vshrl.u32 %v3894, 7
        %v3896 = vsub.s32 %v3893, %v3895
        %v3897 = vrot.slane %v3889, %v3896
        %v3899 = vunpack.c.l.s4 1934713408
        %v3900 = vunpack.c.0.s8 %v3899
        %v3901 = vlaneseq
        %v3902 = vshrl.u32 %v3901, 7
        %v3903 = vsub.s32 %v3900, %v3902
        %v3904 = vrot.slane %v3890, %v3903
        %v3905 = vcombine.low %v3881, %v3897
        %v3906 = vcombine.high %v3881, %v3897
        %v3907 = vcombine.low %v3888, %v3904
        %v3908 = vcombine.high %v3888, %v3904
        %v3909 = vcombine.low %v3677, %v3684
        %v3911 = vunpack.c.l.s4 1983009808
        %v3912 = vunpack.c.0.s8 %v3911
        %v3913 = vlaneseq
        %v3914 = vshrl.u32 %v3913, 7
        %v3915 = vsub.s32 %v3912, %v3914
        %v3916 = vrot.slane %v3909, %v3915
        %v3917 = vcombine.low %v3701, %v3702
        %v3919 = vunpack.c.l.s4 1983009808
        %v3920 = vunpack.c.0.s8 %v3919
        %v3921 = vlaneseq
        %v3922 = vshrl.u32 %v3921, 7
        %v3923 = vsub.s32 %v3920, %v3922
        %v3924 = vrot.slane %v3917, %v3923
        %v3925 = vcombine.low %v3693, %v3700
        %v3927 = vunpack.c.l.s4 1983009808
        %v3928 = vunpack.c.0.s8 %v3927
        %v3929 = vlaneseq
        %v3930 = vshrl.u32 %v3929, 7
        %v3931 = vsub.s32 %v3928, %v3930
        %v3932 = vrot.slane %v3925, %v3931
        %v3933 = vcombine.low %v3703, %v3704
        %v3935 = vunpack.c.l.s4 1983009808
        %v3936 = vunpack.c.0.s8 %v3935
        %v3937 = vlaneseq
        %v3938 = vshrl.u32 %v3937, 7
        %v3939 = vsub.s32 %v3936, %v3938
        %v3940 = vrot.slane %v3933, %v3939
        %v3941 = vcombine.low %v3916, %v3924
        %v3942 = vcombine.high %v3916, %v3924
        %v3944 = vunpack.c.l.s4 1934713408
        %v3945 = vunpack.c.0.s8 %v3944
        %v3946 = vlaneseq
        %v3947 = vshrl.u32 %v3946, 7
        %v3948 = vsub.s32 %v3945, %v3947
        %v3949 = vrot.slane %v3941, %v3948
        %v3951 = vunpack.c.l.s4 1934713408
        %v3952 = vunpack.c.0.s8 %v3951
        %v3953 = vlaneseq
        %v3954 = vshrl.u32 %v3953, 7
        %v3955 = vsub.s32 %v3952, %v3954
        %v3956 = vrot.slane %v3942, %v3955
        %v3957 = vcombine.low %v3932, %v3940
        %v3958 = vcombine.high %v3932, %v3940
        %v3960 = vunpack.c.l.s4 1934713408
        %v3961 = vunpack.c.0.s8 %v3960
        %v3962 = vlaneseq
        %v3963 = vshrl.u32 %v3962, 7
        %v3964 = vsub.s32 %v3961, %v3963
        %v3965 = vrot.slane %v3957, %v3964
        %v3967 = vunpack.c.l.s4 1934713408
        %v3968 = vunpack.c.0.s8 %v3967
        %v3969 = vlaneseq
        %v3970 = vshrl.u32 %v3969, 7
        %v3971 = vsub.s32 %v3968, %v3970
        %v3972 = vrot.slane %v3958, %v3971
        %v3973 = vcombine.low %v3949, %v3965
        %v3974 = vcombine.high %v3949, %v3965
        %v3975 = vcombine.low %v3956, %v3972
        %v3976 = vcombine.high %v3956, %v3972
        %v3977 = vcombine.low %v3745, %v3752
        %v3979 = vunpack.c.l.s4 1983009808
        %v3980 = vunpack.c.0.s8 %v3979
        %v3981 = vlaneseq
        %v3982 = vshrl.u32 %v3981, 7
        %v3983 = vsub.s32 %v3980, %v3982
        %v3984 = vrot.slane %v3977, %v3983
        %v3985 = vcombine.low %v3769, %v3770
        %v3987 = vunpack.c.l.s4 1983009808
        %v3988 = vunpack.c.0.s8 %v3987
        %v3989 = vlaneseq
        %v3990 = vshrl.u32 %v3989, 7
        %v3991 = vsub.s32 %v3988, %v3990
        %v3992 = vrot.slane %v3985, %v3991
        %v3993 = vcombine.low %v3761, %v3768
        %v3995 = vunpack.c.l.s4 1983009808
        %v3996 = vunpack.c.0.s8 %v3995
        %v3997 = vlaneseq
        %v3998 = vshrl.u32 %v3997, 7
        %v3999 = vsub.s32 %v3996, %v3998
        %v4000 = vrot.slane %v3993, %v3999
        %v4001 = vcombine.low %v3771, %v3772
        %v4003 = vunpack.c.l.s4 1983009808
        %v4004 = vunpack.c.0.s8 %v4003
        %v4005 = vlaneseq
        %v4006 = vshrl.u32 %v4005, 7
        %v4007 = vsub.s32 %v4004, %v4006
        %v4008 = vrot.slane %v4001, %v4007
        %v4009 = vcombine.low %v3984, %v3992
        %v4010 = vcombine.high %v3984, %v3992
        %v4012 = vunpack.c.l.s4 1934713408
        %v4013 = vunpack.c.0.s8 %v4012
        %v4014 = vlaneseq
        %v4015 = vshrl.u32 %v4014, 7
        %v4016 = vsub.s32 %v4013, %v4015
        %v4017 = vrot.slane %v4009, %v4016
        %v4019 = vunpack.c.l.s4 1934713408
        %v4020 = vunpack.c.0.s8 %v4019
        %v4021 = vlaneseq
        %v4022 = vshrl.u32 %v4021, 7
        %v4023 = vsub.s32 %v4020, %v4022
        %v4024 = vrot.slane %v4010, %v4023
        %v4025 = vcombine.low %v4000, %v4008
        %v4026 = vcombine.high %v4000, %v4008
        %v4028 = vunpack.c.l.s4 1934713408
        %v4029 = vunpack.c.0.s8 %v4028
        %v4030 = vlaneseq
        %v4031 = vshrl.u32 %v4030, 7
        %v4032 = vsub.s32 %v4029, %v4031
        %v4033 = vrot.slane %v4025, %v4032
        %v4035 = vunpack.c.l.s4 1934713408
        %v4036 = vunpack.c.0.s8 %v4035
        %v4037 = vlaneseq
        %v4038 = vshrl.u32 %v4037, 7
        %v4039 = vsub.s32 %v4036, %v4038
        %v4040 = vrot.slane %v4026, %v4039
        %v4041 = vcombine.low %v4017, %v4033
        %v4042 = vcombine.high %v4017, %v4033
        %v4043 = vcombine.low %v4024, %v4040
        %v4044 = vcombine.high %v4024, %v4040
        %v4045 = vpack.c.bf16 %v3905, %v3837
        %v4046 = vpack.c.bf16 %v4041, %v3973
        %v4047 = vpack.c.bf16 %v3906, %v3838
        %v4048 = vpack.c.bf16 %v4042, %v3974
        %v4049 = vpack.c.bf16 %v3907, %v3839
        %v4050 = vpack.c.bf16 %v4043, %v3975
        %v4051 = vpack.c.bf16 %v3908, %v3840
        %v4052 = vpack.c.bf16 %v4044, %v3976
        %4057 = vrot.lane.b32.xlu0 %v3151, 96
        %v4058 = vpop.permute.xlu0 %4057
        %4059 = vrot.lane.b32.xlu0 %v3154, 96
        %v4060 = vpop.permute.xlu0 %4059
        %4061 = vrot.lane.b32.xlu0 %v3159, 96
        %v4062 = vpop.permute.xlu0 %4061
        %4063 = vrot.lane.b32.xlu0 %v3162, 96
        %v4064 = vpop.permute.xlu0 %4063
        %4069 = vrot.lane.b32.xlu0 %v3151, 64
        %v4070 = vpop.permute.xlu0 %4069
        %4071 = vrot.lane.b32.xlu0 %v3154, 64
        %v4072 = vpop.permute.xlu0 %4071
        %4073 = vrot.lane.b32.xlu0 %v3159, 64
        %v4074 = vpop.permute.xlu0 %4073
        %4075 = vrot.lane.b32.xlu0 %v3162, 64
        %v4076 = vpop.permute.xlu0 %4075
        %4081 = vrot.lane.b32.xlu0 %v3151, 32
        %v4082 = vpop.permute.xlu0 %4081
        %4083 = vrot.lane.b32.xlu0 %v3154, 32
        %v4084 = vpop.permute.xlu0 %4083
        %4085 = vrot.lane.b32.xlu0 %v3159, 32
        %v4086 = vpop.permute.xlu0 %4085
        %4087 = vrot.lane.b32.xlu0 %v3162, 32
        %v4088 = vpop.permute.xlu0 %4087
        %v4093 = vcombine.low %v3151, %v4070
        %v4094 = vcombine.high %v3151, %v4070
        %v4096 = vunpack.c.l.s4 1983009808
        %v4097 = vunpack.c.0.s8 %v4096
        %v4098 = vlaneseq
        %v4099 = vshrl.u32 %v4098, 7
        %v4100 = vsub.s32 %v4097, %v4099
        %v4101 = vrot.slane %v4093, %v4100
        %v4103 = vunpack.c.l.s4 1983009808
        %v4104 = vunpack.c.0.s8 %v4103
        %v4105 = vlaneseq
        %v4106 = vshrl.u32 %v4105, 7
        %v4107 = vsub.s32 %v4104, %v4106
        %v4108 = vrot.slane %v4094, %v4107
        %v4109 = vcombine.low %v4058, %v4082
        %v4110 = vcombine.high %v4058, %v4082
        %v4112 = vunpack.c.l.s4 1983009808
        %v4113 = vunpack.c.0.s8 %v4112
        %v4114 = vlaneseq
        %v4115 = vshrl.u32 %v4114, 7
        %v4116 = vsub.s32 %v4113, %v4115
        %v4117 = vrot.slane %v4109, %v4116
        %v4119 = vunpack.c.l.s4 1983009808
        %v4120 = vunpack.c.0.s8 %v4119
        %v4121 = vlaneseq
        %v4122 = vshrl.u32 %v4121, 7
        %v4123 = vsub.s32 %v4120, %v4122
        %v4124 = vrot.slane %v4110, %v4123
        %v4125 = vcombine.low %v4101, %v4117
        %v4126 = vcombine.high %v4101, %v4117
        %v4128 = vunpack.c.l.s4 1934713408
        %v4129 = vunpack.c.0.s8 %v4128
        %v4130 = vlaneseq
        %v4131 = vshrl.u32 %v4130, 7
        %v4132 = vsub.s32 %v4129, %v4131
        %v4133 = vrot.slane %v4125, %v4132
        %v4135 = vunpack.c.l.s4 1934713408
        %v4136 = vunpack.c.0.s8 %v4135
        %v4137 = vlaneseq
        %v4138 = vshrl.u32 %v4137, 7
        %v4139 = vsub.s32 %v4136, %v4138
        %v4140 = vrot.slane %v4126, %v4139
        %v4141 = vcombine.low %v4108, %v4124
        %v4142 = vcombine.high %v4108, %v4124
        %v4144 = vunpack.c.l.s4 1934713408
        %v4145 = vunpack.c.0.s8 %v4144
        %v4146 = vlaneseq
        %v4147 = vshrl.u32 %v4146, 7
        %v4148 = vsub.s32 %v4145, %v4147
        %v4149 = vrot.slane %v4141, %v4148
        %v4151 = vunpack.c.l.s4 1934713408
        %v4152 = vunpack.c.0.s8 %v4151
        %v4153 = vlaneseq
        %v4154 = vshrl.u32 %v4153, 7
        %v4155 = vsub.s32 %v4152, %v4154
        %v4156 = vrot.slane %v4142, %v4155
        %v4157 = vcombine.high %v4133, 0.0
        %v4158 = vcombine.high %v4140, 0.0
        %v4159 = vcombine.high %v4149, 0.0
        %v4160 = vcombine.high %v4156, 0.0
        %v4161 = vcombine.low %v3154, %v4072
        %v4162 = vcombine.high %v3154, %v4072
        %v4164 = vunpack.c.l.s4 1983009808
        %v4165 = vunpack.c.0.s8 %v4164
        %v4166 = vlaneseq
        %v4167 = vshrl.u32 %v4166, 7
        %v4168 = vsub.s32 %v4165, %v4167
        %v4169 = vrot.slane %v4161, %v4168
        %v4171 = vunpack.c.l.s4 1983009808
        %v4172 = vunpack.c.0.s8 %v4171
        %v4173 = vlaneseq
        %v4174 = vshrl.u32 %v4173, 7
        %v4175 = vsub.s32 %v4172, %v4174
        %v4176 = vrot.slane %v4162, %v4175
        %v4177 = vcombine.low %v4060, %v4084
        %v4178 = vcombine.high %v4060, %v4084
        %v4180 = vunpack.c.l.s4 1983009808
        %v4181 = vunpack.c.0.s8 %v4180
        %v4182 = vlaneseq
        %v4183 = vshrl.u32 %v4182, 7
        %v4184 = vsub.s32 %v4181, %v4183
        %v4185 = vrot.slane %v4177, %v4184
        %v4187 = vunpack.c.l.s4 1983009808
        %v4188 = vunpack.c.0.s8 %v4187
        %v4189 = vlaneseq
        %v4190 = vshrl.u32 %v4189, 7
        %v4191 = vsub.s32 %v4188, %v4190
        %v4192 = vrot.slane %v4178, %v4191
        %v4193 = vcombine.low %v4169, %v4185
        %v4194 = vcombine.high %v4169, %v4185
        %v4196 = vunpack.c.l.s4 1934713408
        %v4197 = vunpack.c.0.s8 %v4196
        %v4198 = vlaneseq
        %v4199 = vshrl.u32 %v4198, 7
        %v4200 = vsub.s32 %v4197, %v4199
        %v4201 = vrot.slane %v4193, %v4200
        %v4203 = vunpack.c.l.s4 1934713408
        %v4204 = vunpack.c.0.s8 %v4203
        %v4205 = vlaneseq
        %v4206 = vshrl.u32 %v4205, 7
        %v4207 = vsub.s32 %v4204, %v4206
        %v4208 = vrot.slane %v4194, %v4207
        %v4209 = vcombine.low %v4176, %v4192
        %v4210 = vcombine.high %v4176, %v4192
        %v4212 = vunpack.c.l.s4 1934713408
        %v4213 = vunpack.c.0.s8 %v4212
        %v4214 = vlaneseq
        %v4215 = vshrl.u32 %v4214, 7
        %v4216 = vsub.s32 %v4213, %v4215
        %v4217 = vrot.slane %v4209, %v4216
        %v4219 = vunpack.c.l.s4 1934713408
        %v4220 = vunpack.c.0.s8 %v4219
        %v4221 = vlaneseq
        %v4222 = vshrl.u32 %v4221, 7
        %v4223 = vsub.s32 %v4220, %v4222
        %v4224 = vrot.slane %v4210, %v4223
        %v4225 = vcombine.high %v4201, 0.0
        %v4226 = vcombine.high %v4208, 0.0
        %v4227 = vcombine.high %v4217, 0.0
        %v4228 = vcombine.high %v4224, 0.0
        %v4229 = vcombine.low %v3159, %v4074
        %v4230 = vcombine.high %v3159, %v4074
        %v4232 = vunpack.c.l.s4 1983009808
        %v4233 = vunpack.c.0.s8 %v4232
        %v4234 = vlaneseq
        %v4235 = vshrl.u32 %v4234, 7
        %v4236 = vsub.s32 %v4233, %v4235
        %v4237 = vrot.slane %v4229, %v4236
        %v4239 = vunpack.c.l.s4 1983009808
        %v4240 = vunpack.c.0.s8 %v4239
        %v4241 = vlaneseq
        %v4242 = vshrl.u32 %v4241, 7
        %v4243 = vsub.s32 %v4240, %v4242
        %v4244 = vrot.slane %v4230, %v4243
        %v4245 = vcombine.low %v4062, %v4086
        %v4246 = vcombine.high %v4062, %v4086
        %v4248 = vunpack.c.l.s4 1983009808
        %v4249 = vunpack.c.0.s8 %v4248
        %v4250 = vlaneseq
        %v4251 = vshrl.u32 %v4250, 7
        %v4252 = vsub.s32 %v4249, %v4251
        %v4253 = vrot.slane %v4245, %v4252
        %v4255 = vunpack.c.l.s4 1983009808
        %v4256 = vunpack.c.0.s8 %v4255
        %v4257 = vlaneseq
        %v4258 = vshrl.u32 %v4257, 7
        %v4259 = vsub.s32 %v4256, %v4258
        %v4260 = vrot.slane %v4246, %v4259
        %v4261 = vcombine.low %v4237, %v4253
        %v4262 = vcombine.high %v4237, %v4253
        %v4264 = vunpack.c.l.s4 1934713408
        %v4265 = vunpack.c.0.s8 %v4264
        %v4266 = vlaneseq
        %v4267 = vshrl.u32 %v4266, 7
        %v4268 = vsub.s32 %v4265, %v4267
        %v4269 = vrot.slane %v4261, %v4268
        %v4271 = vunpack.c.l.s4 1934713408
        %v4272 = vunpack.c.0.s8 %v4271
        %v4273 = vlaneseq
        %v4274 = vshrl.u32 %v4273, 7
        %v4275 = vsub.s32 %v4272, %v4274
        %v4276 = vrot.slane %v4262, %v4275
        %v4277 = vcombine.low %v4244, %v4260
        %v4278 = vcombine.high %v4244, %v4260
        %v4280 = vunpack.c.l.s4 1934713408
        %v4281 = vunpack.c.0.s8 %v4280
        %v4282 = vlaneseq
        %v4283 = vshrl.u32 %v4282, 7
        %v4284 = vsub.s32 %v4281, %v4283
        %v4285 = vrot.slane %v4277, %v4284
        %v4287 = vunpack.c.l.s4 1934713408
        %v4288 = vunpack.c.0.s8 %v4287
        %v4289 = vlaneseq
        %v4290 = vshrl.u32 %v4289, 7
        %v4291 = vsub.s32 %v4288, %v4290
        %v4292 = vrot.slane %v4278, %v4291
        %v4293 = vcombine.high %v4269, 0.0
        %v4294 = vcombine.high %v4276, 0.0
        %v4295 = vcombine.high %v4285, 0.0
        %v4296 = vcombine.high %v4292, 0.0
        %v4297 = vcombine.low %v3162, %v4076
        %v4298 = vcombine.high %v3162, %v4076
        %v4300 = vunpack.c.l.s4 1983009808
        %v4301 = vunpack.c.0.s8 %v4300
        %v4302 = vlaneseq
        %v4303 = vshrl.u32 %v4302, 7
        %v4304 = vsub.s32 %v4301, %v4303
        %v4305 = vrot.slane %v4297, %v4304
        %v4307 = vunpack.c.l.s4 1983009808
        %v4308 = vunpack.c.0.s8 %v4307
        %v4309 = vlaneseq
        %v4310 = vshrl.u32 %v4309, 7
        %v4311 = vsub.s32 %v4308, %v4310
        %v4312 = vrot.slane %v4298, %v4311
        %v4313 = vcombine.low %v4064, %v4088
        %v4314 = vcombine.high %v4064, %v4088
        %v4316 = vunpack.c.l.s4 1983009808
        %v4317 = vunpack.c.0.s8 %v4316
        %v4318 = vlaneseq
        %v4319 = vshrl.u32 %v4318, 7
        %v4320 = vsub.s32 %v4317, %v4319
        %v4321 = vrot.slane %v4313, %v4320
        %v4323 = vunpack.c.l.s4 1983009808
        %v4324 = vunpack.c.0.s8 %v4323
        %v4325 = vlaneseq
        %v4326 = vshrl.u32 %v4325, 7
        %v4327 = vsub.s32 %v4324, %v4326
        %v4328 = vrot.slane %v4314, %v4327
        %v4329 = vcombine.low %v4305, %v4321
        %v4330 = vcombine.high %v4305, %v4321
        %v4332 = vunpack.c.l.s4 1934713408
        %v4333 = vunpack.c.0.s8 %v4332
        %v4334 = vlaneseq
        %v4335 = vshrl.u32 %v4334, 7
        %v4336 = vsub.s32 %v4333, %v4335
        %v4337 = vrot.slane %v4329, %v4336
        %v4339 = vunpack.c.l.s4 1934713408
        %v4340 = vunpack.c.0.s8 %v4339
        %v4341 = vlaneseq
        %v4342 = vshrl.u32 %v4341, 7
        %v4343 = vsub.s32 %v4340, %v4342
        %v4344 = vrot.slane %v4330, %v4343
        %v4345 = vcombine.low %v4312, %v4328
        %v4346 = vcombine.high %v4312, %v4328
        %v4348 = vunpack.c.l.s4 1934713408
        %v4349 = vunpack.c.0.s8 %v4348
        %v4350 = vlaneseq
        %v4351 = vshrl.u32 %v4350, 7
        %v4352 = vsub.s32 %v4349, %v4351
        %v4353 = vrot.slane %v4345, %v4352
        %v4355 = vunpack.c.l.s4 1934713408
        %v4356 = vunpack.c.0.s8 %v4355
        %v4357 = vlaneseq
        %v4358 = vshrl.u32 %v4357, 7
        %v4359 = vsub.s32 %v4356, %v4358
        %v4360 = vrot.slane %v4346, %v4359
        %v4361 = vcombine.high %v4337, 0.0
        %v4362 = vcombine.high %v4344, 0.0
        %v4363 = vcombine.high %v4353, 0.0
        %v4364 = vcombine.high %v4360, 0.0
        %v4365 = vcombine.low %v4133, %v4140
        %v4367 = vunpack.c.l.s4 1983009808
        %v4368 = vunpack.c.0.s8 %v4367
        %v4369 = vlaneseq
        %v4370 = vshrl.u32 %v4369, 7
        %v4371 = vsub.s32 %v4368, %v4370
        %v4372 = vrot.slane %v4365, %v4371
        %v4373 = vcombine.low %v4157, %v4158
        %v4375 = vunpack.c.l.s4 1983009808
        %v4376 = vunpack.c.0.s8 %v4375
        %v4377 = vlaneseq
        %v4378 = vshrl.u32 %v4377, 7
        %v4379 = vsub.s32 %v4376, %v4378
        %v4380 = vrot.slane %v4373, %v4379
        %v4381 = vcombine.low %v4149, %v4156
        %v4383 = vunpack.c.l.s4 1983009808
        %v4384 = vunpack.c.0.s8 %v4383
        %v4385 = vlaneseq
        %v4386 = vshrl.u32 %v4385, 7
        %v4387 = vsub.s32 %v4384, %v4386
        %v4388 = vrot.slane %v4381, %v4387
        %v4389 = vcombine.low %v4159, %v4160
        %v4391 = vunpack.c.l.s4 1983009808
        %v4392 = vunpack.c.0.s8 %v4391
        %v4393 = vlaneseq
        %v4394 = vshrl.u32 %v4393, 7
        %v4395 = vsub.s32 %v4392, %v4394
        %v4396 = vrot.slane %v4389, %v4395
        %v4397 = vcombine.low %v4372, %v4380
        %v4398 = vcombine.high %v4372, %v4380
        %v4400 = vunpack.c.l.s4 1934713408
        %v4401 = vunpack.c.0.s8 %v4400
        %v4402 = vlaneseq
        %v4403 = vshrl.u32 %v4402, 7
        %v4404 = vsub.s32 %v4401, %v4403
        %v4405 = vrot.slane %v4397, %v4404
        %v4407 = vunpack.c.l.s4 1934713408
        %v4408 = vunpack.c.0.s8 %v4407
        %v4409 = vlaneseq
        %v4410 = vshrl.u32 %v4409, 7
        %v4411 = vsub.s32 %v4408, %v4410
        %v4412 = vrot.slane %v4398, %v4411
        %v4413 = vcombine.low %v4388, %v4396
        %v4414 = vcombine.high %v4388, %v4396
        %v4416 = vunpack.c.l.s4 1934713408
        %v4417 = vunpack.c.0.s8 %v4416
        %v4418 = vlaneseq
        %v4419 = vshrl.u32 %v4418, 7
        %v4420 = vsub.s32 %v4417, %v4419
        %v4421 = vrot.slane %v4413, %v4420
        %v4423 = vunpack.c.l.s4 1934713408
        %v4424 = vunpack.c.0.s8 %v4423
        %v4425 = vlaneseq
        %v4426 = vshrl.u32 %v4425, 7
        %v4427 = vsub.s32 %v4424, %v4426
        %v4428 = vrot.slane %v4414, %v4427
        %v4429 = vcombine.low %v4405, %v4421
        %v4430 = vcombine.high %v4405, %v4421
        %v4431 = vcombine.low %v4412, %v4428
        %v4432 = vcombine.high %v4412, %v4428
        %v4433 = vcombine.low %v4201, %v4208
        %v4435 = vunpack.c.l.s4 1983009808
        %v4436 = vunpack.c.0.s8 %v4435
        %v4437 = vlaneseq
        %v4438 = vshrl.u32 %v4437, 7
        %v4439 = vsub.s32 %v4436, %v4438
        %v4440 = vrot.slane %v4433, %v4439
        %v4441 = vcombine.low %v4225, %v4226
        %v4443 = vunpack.c.l.s4 1983009808
        %v4444 = vunpack.c.0.s8 %v4443
        %v4445 = vlaneseq
        %v4446 = vshrl.u32 %v4445, 7
        %v4447 = vsub.s32 %v4444, %v4446
        %v4448 = vrot.slane %v4441, %v4447
        %v4449 = vcombine.low %v4217, %v4224
        %v4451 = vunpack.c.l.s4 1983009808
        %v4452 = vunpack.c.0.s8 %v4451
        %v4453 = vlaneseq
        %v4454 = vshrl.u32 %v4453, 7
        %v4455 = vsub.s32 %v4452, %v4454
        %v4456 = vrot.slane %v4449, %v4455
        %v4457 = vcombine.low %v4227, %v4228
        %v4459 = vunpack.c.l.s4 1983009808
        %v4460 = vunpack.c.0.s8 %v4459
        %v4461 = vlaneseq
        %v4462 = vshrl.u32 %v4461, 7
        %v4463 = vsub.s32 %v4460, %v4462
        %v4464 = vrot.slane %v4457, %v4463
        %v4465 = vcombine.low %v4440, %v4448
        %v4466 = vcombine.high %v4440, %v4448
        %v4468 = vunpack.c.l.s4 1934713408
        %v4469 = vunpack.c.0.s8 %v4468
        %v4470 = vlaneseq
        %v4471 = vshrl.u32 %v4470, 7
        %v4472 = vsub.s32 %v4469, %v4471
        %v4473 = vrot.slane %v4465, %v4472
        %v4475 = vunpack.c.l.s4 1934713408
        %v4476 = vunpack.c.0.s8 %v4475
        %v4477 = vlaneseq
        %v4478 = vshrl.u32 %v4477, 7
        %v4479 = vsub.s32 %v4476, %v4478
        %v4480 = vrot.slane %v4466, %v4479
        %v4481 = vcombine.low %v4456, %v4464
        %v4482 = vcombine.high %v4456, %v4464
        %v4484 = vunpack.c.l.s4 1934713408
        %v4485 = vunpack.c.0.s8 %v4484
        %v4486 = vlaneseq
        %v4487 = vshrl.u32 %v4486, 7
        %v4488 = vsub.s32 %v4485, %v4487
        %v4489 = vrot.slane %v4481, %v4488
        %v4491 = vunpack.c.l.s4 1934713408
        %v4492 = vunpack.c.0.s8 %v4491
        %v4493 = vlaneseq
        %v4494 = vshrl.u32 %v4493, 7
        %v4495 = vsub.s32 %v4492, %v4494
        %v4496 = vrot.slane %v4482, %v4495
        %v4497 = vcombine.low %v4473, %v4489
        %v4498 = vcombine.high %v4473, %v4489
        %v4499 = vcombine.low %v4480, %v4496
        %v4500 = vcombine.high %v4480, %v4496
        %v4501 = vcombine.low %v4269, %v4276
        %v4503 = vunpack.c.l.s4 1983009808
        %v4504 = vunpack.c.0.s8 %v4503
        %v4505 = vlaneseq
        %v4506 = vshrl.u32 %v4505, 7
        %v4507 = vsub.s32 %v4504, %v4506
        %v4508 = vrot.slane %v4501, %v4507
        %v4509 = vcombine.low %v4293, %v4294
        %v4511 = vunpack.c.l.s4 1983009808
        %v4512 = vunpack.c.0.s8 %v4511
        %v4513 = vlaneseq
        %v4514 = vshrl.u32 %v4513, 7
        %v4515 = vsub.s32 %v4512, %v4514
        %v4516 = vrot.slane %v4509, %v4515
        %v4517 = vcombine.low %v4285, %v4292
        %v4519 = vunpack.c.l.s4 1983009808
        %v4520 = vunpack.c.0.s8 %v4519
        %v4521 = vlaneseq
        %v4522 = vshrl.u32 %v4521, 7
        %v4523 = vsub.s32 %v4520, %v4522
        %v4524 = vrot.slane %v4517, %v4523
        %v4525 = vcombine.low %v4295, %v4296
        %v4527 = vunpack.c.l.s4 1983009808
        %v4528 = vunpack.c.0.s8 %v4527
        %v4529 = vlaneseq
        %v4530 = vshrl.u32 %v4529, 7
        %v4531 = vsub.s32 %v4528, %v4530
        %v4532 = vrot.slane %v4525, %v4531
        %v4533 = vcombine.low %v4508, %v4516
        %v4534 = vcombine.high %v4508, %v4516
        %v4536 = vunpack.c.l.s4 1934713408
        %v4537 = vunpack.c.0.s8 %v4536
        %v4538 = vlaneseq
        %v4539 = vshrl.u32 %v4538, 7
        %v4540 = vsub.s32 %v4537, %v4539
        %v4541 = vrot.slane %v4533, %v4540
        %v4543 = vunpack.c.l.s4 1934713408
        %v4544 = vunpack.c.0.s8 %v4543
        %v4545 = vlaneseq
        %v4546 = vshrl.u32 %v4545, 7
        %v4547 = vsub.s32 %v4544, %v4546
        %v4548 = vrot.slane %v4534, %v4547
        %v4549 = vcombine.low %v4524, %v4532
        %v4550 = vcombine.high %v4524, %v4532
        %v4552 = vunpack.c.l.s4 1934713408
        %v4553 = vunpack.c.0.s8 %v4552
        %v4554 = vlaneseq
        %v4555 = vshrl.u32 %v4554, 7
        %v4556 = vsub.s32 %v4553, %v4555
        %v4557 = vrot.slane %v4549, %v4556
        %v4559 = vunpack.c.l.s4 1934713408
        %v4560 = vunpack.c.0.s8 %v4559
        %v4561 = vlaneseq
        %v4562 = vshrl.u32 %v4561, 7
        %v4563 = vsub.s32 %v4560, %v4562
        %v4564 = vrot.slane %v4550, %v4563
        %v4565 = vcombine.low %v4541, %v4557
        %v4566 = vcombine.high %v4541, %v4557
        %v4567 = vcombine.low %v4548, %v4564
        %v4568 = vcombine.high %v4548, %v4564
        %v4569 = vcombine.low %v4337, %v4344
        %v4571 = vunpack.c.l.s4 1983009808
        %v4572 = vunpack.c.0.s8 %v4571
        %v4573 = vlaneseq
        %v4574 = vshrl.u32 %v4573, 7
        %v4575 = vsub.s32 %v4572, %v4574
        %v4576 = vrot.slane %v4569, %v4575
        %v4577 = vcombine.low %v4361, %v4362
        %v4579 = vunpack.c.l.s4 1983009808
        %v4580 = vunpack.c.0.s8 %v4579
        %v4581 = vlaneseq
        %v4582 = vshrl.u32 %v4581, 7
        %v4583 = vsub.s32 %v4580, %v4582
        %v4584 = vrot.slane %v4577, %v4583
        %v4585 = vcombine.low %v4353, %v4360
        %v4587 = vunpack.c.l.s4 1983009808
        %v4588 = vunpack.c.0.s8 %v4587
        %v4589 = vlaneseq
        %v4590 = vshrl.u32 %v4589, 7
        %v4591 = vsub.s32 %v4588, %v4590
        %v4592 = vrot.slane %v4585, %v4591
        %v4593 = vcombine.low %v4363, %v4364
        %v4595 = vunpack.c.l.s4 1983009808
        %v4596 = vunpack.c.0.s8 %v4595
        %v4597 = vlaneseq
        %v4598 = vshrl.u32 %v4597, 7
        %v4599 = vsub.s32 %v4596, %v4598
        %v4600 = vrot.slane %v4593, %v4599
        %v4601 = vcombine.low %v4576, %v4584
        %v4602 = vcombine.high %v4576, %v4584
        %v4604 = vunpack.c.l.s4 1934713408
        %v4605 = vunpack.c.0.s8 %v4604
        %v4606 = vlaneseq
        %v4607 = vshrl.u32 %v4606, 7
        %v4608 = vsub.s32 %v4605, %v4607
        %v4609 = vrot.slane %v4601, %v4608
        %v4611 = vunpack.c.l.s4 1934713408
        %v4612 = vunpack.c.0.s8 %v4611
        %v4613 = vlaneseq
        %v4614 = vshrl.u32 %v4613, 7
        %v4615 = vsub.s32 %v4612, %v4614
        %v4616 = vrot.slane %v4602, %v4615
        %v4617 = vcombine.low %v4592, %v4600
        %v4618 = vcombine.high %v4592, %v4600
        %v4620 = vunpack.c.l.s4 1934713408
        %v4621 = vunpack.c.0.s8 %v4620
        %v4622 = vlaneseq
        %v4623 = vshrl.u32 %v4622, 7
        %v4624 = vsub.s32 %v4621, %v4623
        %v4625 = vrot.slane %v4617, %v4624
        %v4627 = vunpack.c.l.s4 1934713408
        %v4628 = vunpack.c.0.s8 %v4627
        %v4629 = vlaneseq
        %v4630 = vshrl.u32 %v4629, 7
        %v4631 = vsub.s32 %v4628, %v4630
        %v4632 = vrot.slane %v4618, %v4631
        %v4633 = vcombine.low %v4609, %v4625
        %v4634 = vcombine.high %v4609, %v4625
        %v4635 = vcombine.low %v4616, %v4632
        %v4636 = vcombine.high %v4616, %v4632
        %v4637 = vpack.c.bf16 %v4497, %v4429
        %v4638 = vpack.c.bf16 %v4633, %v4565
        %v4639 = vpack.c.bf16 %v4498, %v4430
        %v4640 = vpack.c.bf16 %v4634, %v4566
        %v4641 = vpack.c.bf16 %v4499, %v4431
        %v4642 = vpack.c.bf16 %v4635, %v4567
        %v4643 = vpack.c.bf16 %v4500, %v4432
        %v4644 = vpack.c.bf16 %v4636, %v4568
        %v4646 = vsel %vm1988, %v3457, 0
        %v4649 = vsel %vm1988, %v4045, 0
        %v4652 = vsel %vm1988, %v4046, 0
        %4654 = vmatprep.subr.bf16.mxu0 0
        %4655 = vmatpush1.bf16.xpose.msra.mxu0 %v4649
        %4656 = vmatprep.subr.bf16.mxu0 0
        %4657 = vmatpush1.bf16.xpose.msra.mxu0 %v4652
        %4658 = vmatprep.subr.bf16.mxu0 0
        %4659 = vmatpush1.bf16.xpose.msra.mxu0 0
        %4660 = vmatprep.subr.bf16.mxu0 0
        %4661 = vmatpush1.bf16.xpose.msra.mxu0 0
        %4662 = vmatprep.subr.bf16.mxu0 0
        %4663 = vmatpush1.bf16.xpose.msra.mxu0 0
        %4664 = vmatprep.subr.bf16.mxu0 0
        %4665 = vmatpush1.bf16.xpose.msra.mxu0 0
        %4666 = vmatprep.subr.bf16.mxu0 0
        %4667 = vmatpush1.bf16.xpose.msra.mxu0 0
        %4668 = vmatprep.subr.bf16.mxu0 0
        %4669 = vmatpush1.bf16.xpose.msra.mxu0 0
        %4670 = vmatprep.subr.bf16.mxu0 0
        %4671 = vmatpush1.bf16.xpose.msra.mxu0 0
        %4672 = vmatprep.subr.bf16.mxu0 0
        %4673 = vmatpush1.bf16.xpose.msra.mxu0 0
        %4674 = vmatprep.subr.bf16.mxu0 0
        %4675 = vmatpush1.bf16.xpose.msra.mxu0 0
        %4676 = vmatprep.subr.bf16.mxu0 0
        %4677 = vmatpush1.bf16.xpose.msra.mxu0 0
        %4678 = vmatprep.subr.bf16.mxu0 0
        %4679 = vmatpush1.bf16.xpose.msra.mxu0 0
        %4680 = vmatprep.subr.bf16.mxu0 0
        %4681 = vmatpush1.bf16.xpose.msra.mxu0 0
        %4682 = vmatprep.subr.bf16.mxu0 0
        %4683 = vmatpush1.bf16.xpose.msra.mxu0 0
        %4684 = vmatprep.subr.bf16.mxu0 0
        %4685 = vmatpush1.bf16.xpose.msra.mxu0 0
        %4686 = vmatprep.mubr.bf16.mxu0 0
        %4687 = vmatmul.mubr.bf16.gmra.mrb[0].mxu0 %v4646
        %v4688 = vpop.f32.mrb[0].mxu0
        %v4689 = vadd.f32 0.0, %v4688
        %v4690 = vpop.f32.mrb[0].mxu0
        %v4691 = vpop.f32.mrb[0].mxu0
        %v4692 = vadd.f32 0.0, %v4691
        %v4693 = vpop.f32.mrb[0].mxu0
        %4694 = vdwg.mxu0
        %v4696 = vsel %vm1988, %v3458, 0
        %v4699 = vsel %vm1988, %v4047, 0
        %v4702 = vsel %vm1988, %v4048, 0
        %4704 = vmatprep.subr.bf16.mxu0 0
        %4705 = vmatpush1.bf16.xpose.msra.mxu0 %v4699
        %4706 = vmatprep.subr.bf16.mxu0 0
        %4707 = vmatpush1.bf16.xpose.msra.mxu0 %v4702
        %4708 = vmatprep.subr.bf16.mxu0 0
        %4709 = vmatpush1.bf16.xpose.msra.mxu0 0
        %4710 = vmatprep.subr.bf16.mxu0 0
        %4711 = vmatpush1.bf16.xpose.msra.mxu0 0
        %4712 = vmatprep.subr.bf16.mxu0 0
        %4713 = vmatpush1.bf16.xpose.msra.mxu0 0
        %4714 = vmatprep.subr.bf16.mxu0 0
        %4715 = vmatpush1.bf16.xpose.msra.mxu0 0
        %4716 = vmatprep.subr.bf16.mxu0 0
        %4717 = vmatpush1.bf16.xpose.msra.mxu0 0
        %4718 = vmatprep.subr.bf16.mxu0 0
        %4719 = vmatpush1.bf16.xpose.msra.mxu0 0
        %4720 = vmatprep.subr.bf16.mxu0 0
        %4721 = vmatpush1.bf16.xpose.msra.mxu0 0
        %4722 = vmatprep.subr.bf16.mxu0 0
        %4723 = vmatpush1.bf16.xpose.msra.mxu0 0
        %4724 = vmatprep.subr.bf16.mxu0 0
        %4725 = vmatpush1.bf16.xpose.msra.mxu0 0
        %4726 = vmatprep.subr.bf16.mxu0 0
        %4727 = vmatpush1.bf16.xpose.msra.mxu0 0
        %4728 = vmatprep.subr.bf16.mxu0 0
        %4729 = vmatpush1.bf16.xpose.msra.mxu0 0
        %4730 = vmatprep.subr.bf16.mxu0 0
        %4731 = vmatpush1.bf16.xpose.msra.mxu0 0
        %4732 = vmatprep.subr.bf16.mxu0 0
        %4733 = vmatpush1.bf16.xpose.msra.mxu0 0
        %4734 = vmatprep.subr.bf16.mxu0 0
        %4735 = vmatpush1.bf16.xpose.msra.mxu0 0
        %4736 = vmatprep.mubr.bf16.mxu0 0
        %4737 = vmatmul.mubr.bf16.gmra.mrb[0].mxu0 %v4696
        %v4738 = vpop.f32.mrb[0].mxu0
        %v4739 = vadd.f32 0.0, %v4738
        %v4740 = vpop.f32.mrb[0].mxu0
        %v4741 = vpop.f32.mrb[0].mxu0
        %v4742 = vadd.f32 0.0, %v4741
        %v4743 = vpop.f32.mrb[0].mxu0
        %4744 = vdwg.mxu0
        %v4746 = vsel %vm1988, %v3459, 0
        %v4749 = vsel %vm1988, %v4049, 0
        %v4752 = vsel %vm1988, %v4050, 0
        %4754 = vmatprep.subr.bf16.mxu0 0
        %4755 = vmatpush1.bf16.xpose.msra.mxu0 %v4749
        %4756 = vmatprep.subr.bf16.mxu0 0
        %4757 = vmatpush1.bf16.xpose.msra.mxu0 %v4752
        %4758 = vmatprep.subr.bf16.mxu0 0
        %4759 = vmatpush1.bf16.xpose.msra.mxu0 0
        %4760 = vmatprep.subr.bf16.mxu0 0
        %4761 = vmatpush1.bf16.xpose.msra.mxu0 0
        %4762 = vmatprep.subr.bf16.mxu0 0
        %4763 = vmatpush1.bf16.xpose.msra.mxu0 0
        %4764 = vmatprep.subr.bf16.mxu0 0
        %4765 = vmatpush1.bf16.xpose.msra.mxu0 0
        %4766 = vmatprep.subr.bf16.mxu0 0
        %4767 = vmatpush1.bf16.xpose.msra.mxu0 0
        %4768 = vmatprep.subr.bf16.mxu0 0
        %4769 = vmatpush1.bf16.xpose.msra.mxu0 0
        %4770 = vmatprep.subr.bf16.mxu0 0
        %4771 = vmatpush1.bf16.xpose.msra.mxu0 0
        %4772 = vmatprep.subr.bf16.mxu0 0
        %4773 = vmatpush1.bf16.xpose.msra.mxu0 0
        %4774 = vmatprep.subr.bf16.mxu0 0
        %4775 = vmatpush1.bf16.xpose.msra.mxu0 0
        %4776 = vmatprep.subr.bf16.mxu0 0
        %4777 = vmatpush1.bf16.xpose.msra.mxu0 0
        %4778 = vmatprep.subr.bf16.mxu0 0
        %4779 = vmatpush1.bf16.xpose.msra.mxu0 0
        %4780 = vmatprep.subr.bf16.mxu0 0
        %4781 = vmatpush1.bf16.xpose.msra.mxu0 0
        %4782 = vmatprep.subr.bf16.mxu0 0
        %4783 = vmatpush1.bf16.xpose.msra.mxu0 0
        %4784 = vmatprep.subr.bf16.mxu0 0
        %4785 = vmatpush1.bf16.xpose.msra.mxu0 0
        %4786 = vmatprep.mubr.bf16.mxu0 0
        %4787 = vmatmul.mubr.bf16.gmra.mrb[0].mxu0 %v4746
        %v4788 = vpop.f32.mrb[0].mxu0
        %v4789 = vadd.f32 0.0, %v4788
        %v4790 = vpop.f32.mrb[0].mxu0
        %v4791 = vpop.f32.mrb[0].mxu0
        %v4792 = vadd.f32 0.0, %v4791
        %v4793 = vpop.f32.mrb[0].mxu0
        %4794 = vdwg.mxu0
        %v4796 = vsel %vm1988, %v3460, 0
        %v4799 = vsel %vm1988, %v4051, 0
        %v4802 = vsel %vm1988, %v4052, 0
        %4804 = vmatprep.subr.bf16.mxu0 0
        %4805 = vmatpush1.bf16.xpose.msra.mxu0 %v4799
        %4806 = vmatprep.subr.bf16.mxu0 0
        %4807 = vmatpush1.bf16.xpose.msra.mxu0 %v4802
        %4808 = vmatprep.subr.bf16.mxu0 0
        %4809 = vmatpush1.bf16.xpose.msra.mxu0 0
        %4810 = vmatprep.subr.bf16.mxu0 0
        %4811 = vmatpush1.bf16.xpose.msra.mxu0 0
        %4812 = vmatprep.subr.bf16.mxu0 0
        %4813 = vmatpush1.bf16.xpose.msra.mxu0 0
        %4814 = vmatprep.subr.bf16.mxu0 0
        %4815 = vmatpush1.bf16.xpose.msra.mxu0 0
        %4816 = vmatprep.subr.bf16.mxu0 0
        %4817 = vmatpush1.bf16.xpose.msra.mxu0 0
        %4818 = vmatprep.subr.bf16.mxu0 0
        %4819 = vmatpush1.bf16.xpose.msra.mxu0 0
        %4820 = vmatprep.subr.bf16.mxu0 0
        %4821 = vmatpush1.bf16.xpose.msra.mxu0 0
        %4822 = vmatprep.subr.bf16.mxu0 0
        %4823 = vmatpush1.bf16.xpose.msra.mxu0 0
        %4824 = vmatprep.subr.bf16.mxu0 0
        %4825 = vmatpush1.bf16.xpose.msra.mxu0 0
        %4826 = vmatprep.subr.bf16.mxu0 0
        %4827 = vmatpush1.bf16.xpose.msra.mxu0 0
        %4828 = vmatprep.subr.bf16.mxu0 0
        %4829 = vmatpush1.bf16.xpose.msra.mxu0 0
        %4830 = vmatprep.subr.bf16.mxu0 0
        %4831 = vmatpush1.bf16.xpose.msra.mxu0 0
        %4832 = vmatprep.subr.bf16.mxu0 0
        %4833 = vmatpush1.bf16.xpose.msra.mxu0 0
        %4834 = vmatprep.subr.bf16.mxu0 0
        %4835 = vmatpush1.bf16.xpose.msra.mxu0 0
        %4836 = vmatprep.mubr.bf16.mxu0 0
        %4837 = vmatmul.mubr.bf16.gmra.mrb[0].mxu0 %v4796
        %v4838 = vpop.f32.mrb[0].mxu0
        %v4839 = vadd.f32 0.0, %v4838
        %v4840 = vpop.f32.mrb[0].mxu0
        %v4841 = vpop.f32.mrb[0].mxu0
        %v4842 = vadd.f32 0.0, %v4841
        %v4843 = vpop.f32.mrb[0].mxu0
        %4844 = vdwg.mxu0
        %v4845 = vsel %vm1988, %v4689, -inf
        %4846 = vmax.xlane.f32.xlu0 %v4845
        %v4847 = vpop.xlane.xlu0 %4846
        %v4848 = vsel %vm1988, %v4692, -inf
        %4849 = vmax.xlane.f32.xlu0 %v4848
        %v4850 = vpop.xlane.xlu0 %4849
        %v4851 = vsel %vm1988, %v4739, -inf
        %4852 = vmax.xlane.f32.xlu0 %v4851
        %v4853 = vpop.xlane.xlu0 %4852
        %v4854 = vsel %vm1988, %v4742, -inf
        %4855 = vmax.xlane.f32.xlu0 %v4854
        %v4856 = vpop.xlane.xlu0 %4855
        %v4857 = vsel %vm1988, %v4789, -inf
        %4858 = vmax.xlane.f32.xlu0 %v4857
        %v4859 = vpop.xlane.xlu0 %4858
        %v4860 = vsel %vm1988, %v4792, -inf
        %4861 = vmax.xlane.f32.xlu0 %v4860
        %v4862 = vpop.xlane.xlu0 %4861
        %v4863 = vsel %vm1988, %v4839, -inf
        %4864 = vmax.xlane.f32.xlu0 %v4863
        %v4865 = vpop.xlane.xlu0 %4864
        %v4866 = vsel %vm1988, %v4842, -inf
        %4867 = vmax.xlane.f32.xlu0 %v4866
        %v4868 = vpop.xlane.xlu0 %4867
        %v4869 = vsub.f32 %v4689, %v4847
        %v4870 = vsub.f32 %v4692, %v4850
        %v4871 = vsub.f32 %v4739, %v4853
        %v4872 = vsub.f32 %v4742, %v4856
        %v4873 = vsub.f32 %v4789, %v4859
        %v4874 = vsub.f32 %v4792, %v4862
        %v4875 = vsub.f32 %v4839, %v4865
        %v4876 = vsub.f32 %v4842, %v4868
        %v4877 = vmul.f32 %v4869, 1.442695
        %v4878 = vpow.pop %v4877
        %v4879 = vmul.f32 %v4870, 1.442695
        %v4880 = vpow.pop %v4879
        %v4881 = vmul.f32 %v4871, 1.442695
        %v4882 = vpow.pop %v4881
        %v4883 = vmul.f32 %v4872, 1.442695
        %v4884 = vpow.pop %v4883
        %v4885 = vmul.f32 %v4873, 1.442695
        %v4886 = vpow.pop %v4885
        %v4887 = vmul.f32 %v4874, 1.442695
        %v4888 = vpow.pop %v4887
        %v4889 = vmul.f32 %v4875, 1.442695
        %v4890 = vpow.pop %v4889
        %v4891 = vmul.f32 %v4876, 1.442695
        %v4892 = vpow.pop %v4891
        %v4893 = vsel %vm1988, %v4878, 0.0
        %4894 = vadd.xlane.f32.xlu0 %v4893
        %v4895 = vpop.xlane.xlu0 %4894
        %v4896 = vsel %vm1988, %v4880, 0.0
        %4897 = vadd.xlane.f32.xlu0 %v4896
        %v4898 = vpop.xlane.xlu0 %4897
        %v4899 = vsel %vm1988, %v4882, 0.0
        %4900 = vadd.xlane.f32.xlu0 %v4899
        %v4901 = vpop.xlane.xlu0 %4900
        %v4902 = vsel %vm1988, %v4884, 0.0
        %4903 = vadd.xlane.f32.xlu0 %v4902
        %v4904 = vpop.xlane.xlu0 %4903
        %v4905 = vsel %vm1988, %v4886, 0.0
        %4906 = vadd.xlane.f32.xlu0 %v4905
        %v4907 = vpop.xlane.xlu0 %4906
        %v4908 = vsel %vm1988, %v4888, 0.0
        %4909 = vadd.xlane.f32.xlu0 %v4908
        %v4910 = vpop.xlane.xlu0 %4909
        %v4911 = vsel %vm1988, %v4890, 0.0
        %4912 = vadd.xlane.f32.xlu0 %v4911
        %v4913 = vpop.xlane.xlu0 %4912
        %v4914 = vsel %vm1988, %v4892, 0.0
        %4915 = vadd.xlane.f32.xlu0 %v4914
        %v4916 = vpop.xlane.xlu0 %4915
        %v4917 = vrcp.pop %v4895
        %v4918 = vrcp.pop %v4898
        %v4919 = vrcp.pop %v4901
        %v4920 = vrcp.pop %v4904
        %v4921 = vrcp.pop %v4907
        %v4922 = vrcp.pop %v4910
        %v4923 = vrcp.pop %v4913
        %v4924 = vrcp.pop %v4916
        %v4925 = vmul.f32 %v4895, %v4917
        %v4926 = vmul.f32 %v4898, %v4918
        %v4927 = vmul.f32 %v4901, %v4919
        %v4928 = vmul.f32 %v4904, %v4920
        %v4929 = vmul.f32 %v4907, %v4921
        %v4930 = vmul.f32 %v4910, %v4922
        %v4931 = vmul.f32 %v4913, %v4923
        %v4932 = vmul.f32 %v4916, %v4924
        %v4933 = vsub.f32 2.0, %v4925
        %v4934 = vsub.f32 2.0, %v4926
        %v4935 = vsub.f32 2.0, %v4927
        %v4936 = vsub.f32 2.0, %v4928
        %v4937 = vsub.f32 2.0, %v4929
        %v4938 = vsub.f32 2.0, %v4930
        %v4939 = vsub.f32 2.0, %v4931
        %v4940 = vsub.f32 2.0, %v4932
        %v4941 = vmul.f32 %v4917, %v4933
        %v4942 = vmul.f32 %v4918, %v4934
        %v4943 = vmul.f32 %v4919, %v4935
        %v4944 = vmul.f32 %v4920, %v4936
        %v4945 = vmul.f32 %v4921, %v4937
        %v4946 = vmul.f32 %v4922, %v4938
        %v4947 = vmul.f32 %v4923, %v4939
        %v4948 = vmul.f32 %v4924, %v4940
        %v4949 = vpack.c.bf16 %v4880, %v4878
        %v4950 = vpack.c.bf16 %v4884, %v4882
        %v4951 = vpack.c.bf16 %v4888, %v4886
        %v4952 = vpack.c.bf16 %v4892, %v4890
        %v4954 = vsel %vm1988, %v4949, 0
        %4956 = vmatprep.subr.bf16.mxu0 0
        %4957 = vmatpush1.bf16.msra.mxu0 %v4637
        %4958 = vmatprep.subr.bf16.mxu0 0
        %4959 = vmatpush1.bf16.msra.mxu0 %v4638
        %4960 = vmatprep.subr.bf16.mxu0 0
        %4961 = vmatpush1.bf16.msra.mxu0 0
        %4962 = vmatprep.subr.bf16.mxu0 0
        %4963 = vmatpush1.bf16.msra.mxu0 0
        %4964 = vmatprep.subr.bf16.mxu0 0
        %4965 = vmatpush1.bf16.msra.mxu0 0
        %4966 = vmatprep.subr.bf16.mxu0 0
        %4967 = vmatpush1.bf16.msra.mxu0 0
        %4968 = vmatprep.subr.bf16.mxu0 0
        %4969 = vmatpush1.bf16.msra.mxu0 0
        %4970 = vmatprep.subr.bf16.mxu0 0
        %4971 = vmatpush1.bf16.msra.mxu0 0
        %4972 = vmatprep.subr.bf16.mxu0 0
        %4973 = vmatpush1.bf16.msra.mxu0 0
        %4974 = vmatprep.subr.bf16.mxu0 0
        %4975 = vmatpush1.bf16.msra.mxu0 0
        %4976 = vmatprep.subr.bf16.mxu0 0
        %4977 = vmatpush1.bf16.msra.mxu0 0
        %4978 = vmatprep.subr.bf16.mxu0 0
        %4979 = vmatpush1.bf16.msra.mxu0 0
        %4980 = vmatprep.subr.bf16.mxu0 0
        %4981 = vmatpush1.bf16.msra.mxu0 0
        %4982 = vmatprep.subr.bf16.mxu0 0
        %4983 = vmatpush1.bf16.msra.mxu0 0
        %4984 = vmatprep.subr.bf16.mxu0 0
        %4985 = vmatpush1.bf16.msra.mxu0 0
        %4986 = vmatprep.subr.bf16.mxu0 0
        %4987 = vmatpush1.bf16.msra.mxu0 0
        %4988 = vmatprep.mubr.bf16.mxu0 0
        %4989 = vmatmul.mubr.bf16.gmra.mrb[0].mxu0 %v4954
        %v4990 = vpop.f32.mrb[0].mxu0
        %v4991 = vadd.f32 0.0, %v4990
        %v4992 = vpop.f32.mrb[0].mxu0
        %v4993 = vpop.f32.mrb[0].mxu0
        %v4994 = vadd.f32 0.0, %v4993
        %v4995 = vpop.f32.mrb[0].mxu0
        %4996 = vdwg.mxu0
        %v4998 = vsel %vm1988, %v4950, 0
        %5000 = vmatprep.subr.bf16.mxu0 0
        %5001 = vmatpush1.bf16.msra.mxu0 %v4639
        %5002 = vmatprep.subr.bf16.mxu0 0
        %5003 = vmatpush1.bf16.msra.mxu0 %v4640
        %5004 = vmatprep.subr.bf16.mxu0 0
        %5005 = vmatpush1.bf16.msra.mxu0 0
        %5006 = vmatprep.subr.bf16.mxu0 0
        %5007 = vmatpush1.bf16.msra.mxu0 0
        %5008 = vmatprep.subr.bf16.mxu0 0
        %5009 = vmatpush1.bf16.msra.mxu0 0
        %5010 = vmatprep.subr.bf16.mxu0 0
        %5011 = vmatpush1.bf16.msra.mxu0 0
        %5012 = vmatprep.subr.bf16.mxu0 0
        %5013 = vmatpush1.bf16.msra.mxu0 0
        %5014 = vmatprep.subr.bf16.mxu0 0
        %5015 = vmatpush1.bf16.msra.mxu0 0
        %5016 = vmatprep.subr.bf16.mxu0 0
        %5017 = vmatpush1.bf16.msra.mxu0 0
        %5018 = vmatprep.subr.bf16.mxu0 0
        %5019 = vmatpush1.bf16.msra.mxu0 0
        %5020 = vmatprep.subr.bf16.mxu0 0
        %5021 = vmatpush1.bf16.msra.mxu0 0
        %5022 = vmatprep.subr.bf16.mxu0 0
        %5023 = vmatpush1.bf16.msra.mxu0 0
        %5024 = vmatprep.subr.bf16.mxu0 0
        %5025 = vmatpush1.bf16.msra.mxu0 0
        %5026 = vmatprep.subr.bf16.mxu0 0
        %5027 = vmatpush1.bf16.msra.mxu0 0
        %5028 = vmatprep.subr.bf16.mxu0 0
        %5029 = vmatpush1.bf16.msra.mxu0 0
        %5030 = vmatprep.subr.bf16.mxu0 0
        %5031 = vmatpush1.bf16.msra.mxu0 0
        %5032 = vmatprep.mubr.bf16.mxu0 0
        %5033 = vmatmul.mubr.bf16.gmra.mrb[0].mxu0 %v4998
        %v5034 = vpop.f32.mrb[0].mxu0
        %v5035 = vadd.f32 0.0, %v5034
        %v5036 = vpop.f32.mrb[0].mxu0
        %v5037 = vpop.f32.mrb[0].mxu0
        %v5038 = vadd.f32 0.0, %v5037
        %v5039 = vpop.f32.mrb[0].mxu0
        %5040 = vdwg.mxu0
        %v5042 = vsel %vm1988, %v4951, 0
        %5044 = vmatprep.subr.bf16.mxu0 0
        %5045 = vmatpush1.bf16.msra.mxu0 %v4641
        %5046 = vmatprep.subr.bf16.mxu0 0
        %5047 = vmatpush1.bf16.msra.mxu0 %v4642
        %5048 = vmatprep.subr.bf16.mxu0 0
        %5049 = vmatpush1.bf16.msra.mxu0 0
        %5050 = vmatprep.subr.bf16.mxu0 0
        %5051 = vmatpush1.bf16.msra.mxu0 0
        %5052 = vmatprep.subr.bf16.mxu0 0
        %5053 = vmatpush1.bf16.msra.mxu0 0
        %5054 = vmatprep.subr.bf16.mxu0 0
        %5055 = vmatpush1.bf16.msra.mxu0 0
        %5056 = vmatprep.subr.bf16.mxu0 0
        %5057 = vmatpush1.bf16.msra.mxu0 0
        %5058 = vmatprep.subr.bf16.mxu0 0
        %5059 = vmatpush1.bf16.msra.mxu0 0
        %5060 = vmatprep.subr.bf16.mxu0 0
        %5061 = vmatpush1.bf16.msra.mxu0 0
        %5062 = vmatprep.subr.bf16.mxu0 0
        %5063 = vmatpush1.bf16.msra.mxu0 0
        %5064 = vmatprep.subr.bf16.mxu0 0
        %5065 = vmatpush1.bf16.msra.mxu0 0
        %5066 = vmatprep.subr.bf16.mxu0 0
        %5067 = vmatpush1.bf16.msra.mxu0 0
        %5068 = vmatprep.subr.bf16.mxu0 0
        %5069 = vmatpush1.bf16.msra.mxu0 0
        %5070 = vmatprep.subr.bf16.mxu0 0
        %5071 = vmatpush1.bf16.msra.mxu0 0
        %5072 = vmatprep.subr.bf16.mxu0 0
        %5073 = vmatpush1.bf16.msra.mxu0 0
        %5074 = vmatprep.subr.bf16.mxu0 0
        %5075 = vmatpush1.bf16.msra.mxu0 0
        %5076 = vmatprep.mubr.bf16.mxu0 0
        %5077 = vmatmul.mubr.bf16.gmra.mrb[0].mxu0 %v5042
        %v5078 = vpop.f32.mrb[0].mxu0
        %v5079 = vadd.f32 0.0, %v5078
        %v5080 = vpop.f32.mrb[0].mxu0
        %v5081 = vpop.f32.mrb[0].mxu0
        %v5082 = vadd.f32 0.0, %v5081
        %v5083 = vpop.f32.mrb[0].mxu0
        %5084 = vdwg.mxu0
        %v5086 = vsel %vm1988, %v4952, 0
        %5088 = vmatprep.subr.bf16.mxu0 0
        %5089 = vmatpush1.bf16.msra.mxu0 %v4643
        %5090 = vmatprep.subr.bf16.mxu0 0
        %5091 = vmatpush1.bf16.msra.mxu0 %v4644
        %5092 = vmatprep.subr.bf16.mxu0 0
        %5093 = vmatpush1.bf16.msra.mxu0 0
        %5094 = vmatprep.subr.bf16.mxu0 0
        %5095 = vmatpush1.bf16.msra.mxu0 0
        %5096 = vmatprep.subr.bf16.mxu0 0
        %5097 = vmatpush1.bf16.msra.mxu0 0
        %5098 = vmatprep.subr.bf16.mxu0 0
        %5099 = vmatpush1.bf16.msra.mxu0 0
        %5100 = vmatprep.subr.bf16.mxu0 0
        %5101 = vmatpush1.bf16.msra.mxu0 0
        %5102 = vmatprep.subr.bf16.mxu0 0
        %5103 = vmatpush1.bf16.msra.mxu0 0
        %5104 = vmatprep.subr.bf16.mxu0 0
        %5105 = vmatpush1.bf16.msra.mxu0 0
        %5106 = vmatprep.subr.bf16.mxu0 0
        %5107 = vmatpush1.bf16.msra.mxu0 0
        %5108 = vmatprep.subr.bf16.mxu0 0
        %5109 = vmatpush1.bf16.msra.mxu0 0
        %5110 = vmatprep.subr.bf16.mxu0 0
        %5111 = vmatpush1.bf16.msra.mxu0 0
        %5112 = vmatprep.subr.bf16.mxu0 0
        %5113 = vmatpush1.bf16.msra.mxu0 0
        %5114 = vmatprep.subr.bf16.mxu0 0
        %5115 = vmatpush1.bf16.msra.mxu0 0
        %5116 = vmatprep.subr.bf16.mxu0 0
        %5117 = vmatpush1.bf16.msra.mxu0 0
        %5118 = vmatprep.subr.bf16.mxu0 0
        %5119 = vmatpush1.bf16.msra.mxu0 0
        %5120 = vmatprep.mubr.bf16.mxu0 0
        %5121 = vmatmul.mubr.bf16.gmra.mrb[0].mxu0 %v5086
        %v5122 = vpop.f32.mrb[0].mxu0
        %v5123 = vadd.f32 0.0, %v5122
        %v5124 = vpop.f32.mrb[0].mxu0
        %v5125 = vpop.f32.mrb[0].mxu0
        %v5126 = vadd.f32 0.0, %v5125
        %v5127 = vpop.f32.mrb[0].mxu0
        %5128 = vdwg.mxu0
        %v5129 = vmul.f32 %v4991, %v4941
        %v5130 = vmul.f32 %v4994, %v4942
        %v5131 = vmul.f32 %v5035, %v4943
        %v5132 = vmul.f32 %v5038, %v4944
        %v5133 = vmul.f32 %v5079, %v4945
        %v5134 = vmul.f32 %v5082, %v4946
        %v5135 = vmul.f32 %v5123, %v4947
        %v5136 = vmul.f32 %v5126, %v4948
        %v5137 = vcombine.low %v5129, %v5133
        %v5138 = vcombine.high %v5129, %v5133
        %v5140 = vunpack.c.l.s4 1983009808
        %v5141 = vunpack.c.0.s8 %v5140
        %v5142 = vlaneseq
        %v5143 = vshrl.u32 %v5142, 7
        %v5144 = vsub.s32 %v5141, %v5143
        %v5145 = vrot.slane %v5137, %v5144
        %v5147 = vunpack.c.l.s4 1983009808
        %v5148 = vunpack.c.0.s8 %v5147
        %v5149 = vlaneseq
        %v5150 = vshrl.u32 %v5149, 7
        %v5151 = vsub.s32 %v5148, %v5150
        %v5152 = vrot.slane %v5138, %v5151
        %v5153 = vcombine.low %v5131, %v5135
        %v5154 = vcombine.high %v5131, %v5135
        %v5156 = vunpack.c.l.s4 1983009808
        %v5157 = vunpack.c.0.s8 %v5156
        %v5158 = vlaneseq
        %v5159 = vshrl.u32 %v5158, 7
        %v5160 = vsub.s32 %v5157, %v5159
        %v5161 = vrot.slane %v5153, %v5160
        %v5163 = vunpack.c.l.s4 1983009808
        %v5164 = vunpack.c.0.s8 %v5163
        %v5165 = vlaneseq
        %v5166 = vshrl.u32 %v5165, 7
        %v5167 = vsub.s32 %v5164, %v5166
        %v5168 = vrot.slane %v5154, %v5167
        %v5169 = vcombine.low %v5145, %v5161
        %v5170 = vcombine.high %v5145, %v5161
        %v5172 = vunpack.c.l.s4 1934713408
        %v5173 = vunpack.c.0.s8 %v5172
        %v5174 = vlaneseq
        %v5175 = vshrl.u32 %v5174, 7
        %v5176 = vsub.s32 %v5173, %v5175
        %v5177 = vrot.slane %v5169, %v5176
        %v5179 = vunpack.c.l.s4 1934713408
        %v5180 = vunpack.c.0.s8 %v5179
        %v5181 = vlaneseq
        %v5182 = vshrl.u32 %v5181, 7
        %v5183 = vsub.s32 %v5180, %v5182
        %v5184 = vrot.slane %v5170, %v5183
        %v5185 = vcombine.low %v5152, %v5168
        %v5186 = vcombine.high %v5152, %v5168
        %v5188 = vunpack.c.l.s4 1934713408
        %v5189 = vunpack.c.0.s8 %v5188
        %v5190 = vlaneseq
        %v5191 = vshrl.u32 %v5190, 7
        %v5192 = vsub.s32 %v5189, %v5191
        %v5193 = vrot.slane %v5185, %v5192
        %v5195 = vunpack.c.l.s4 1934713408
        %v5196 = vunpack.c.0.s8 %v5195
        %v5197 = vlaneseq
        %v5198 = vshrl.u32 %v5197, 7
        %v5199 = vsub.s32 %v5196, %v5198
        %v5200 = vrot.slane %v5186, %v5199
        %v5201 = vcombine.high %v5177, 0.0
        %v5202 = vcombine.high %v5184, 0.0
        %v5203 = vcombine.high %v5193, 0.0
        %v5204 = vcombine.high %v5200, 0.0
        %v5205 = vcombine.low %v5130, %v5134
        %v5206 = vcombine.high %v5130, %v5134
        %v5208 = vunpack.c.l.s4 1983009808
        %v5209 = vunpack.c.0.s8 %v5208
        %v5210 = vlaneseq
        %v5211 = vshrl.u32 %v5210, 7
        %v5212 = vsub.s32 %v5209, %v5211
        %v5213 = vrot.slane %v5205, %v5212
        %v5215 = vunpack.c.l.s4 1983009808
        %v5216 = vunpack.c.0.s8 %v5215
        %v5217 = vlaneseq
        %v5218 = vshrl.u32 %v5217, 7
        %v5219 = vsub.s32 %v5216, %v5218
        %v5220 = vrot.slane %v5206, %v5219
        %v5221 = vcombine.low %v5132, %v5136
        %v5222 = vcombine.high %v5132, %v5136
        %v5224 = vunpack.c.l.s4 1983009808
        %v5225 = vunpack.c.0.s8 %v5224
        %v5226 = vlaneseq
        %v5227 = vshrl.u32 %v5226, 7
        %v5228 = vsub.s32 %v5225, %v5227
        %v5229 = vrot.slane %v5221, %v5228
        %v5231 = vunpack.c.l.s4 1983009808
        %v5232 = vunpack.c.0.s8 %v5231
        %v5233 = vlaneseq
        %v5234 = vshrl.u32 %v5233, 7
        %v5235 = vsub.s32 %v5232, %v5234
        %v5236 = vrot.slane %v5222, %v5235
        %v5237 = vcombine.low %v5213, %v5229
        %v5238 = vcombine.high %v5213, %v5229
        %v5240 = vunpack.c.l.s4 1934713408
        %v5241 = vunpack.c.0.s8 %v5240
        %v5242 = vlaneseq
        %v5243 = vshrl.u32 %v5242, 7
        %v5244 = vsub.s32 %v5241, %v5243
        %v5245 = vrot.slane %v5237, %v5244
        %v5247 = vunpack.c.l.s4 1934713408
        %v5248 = vunpack.c.0.s8 %v5247
        %v5249 = vlaneseq
        %v5250 = vshrl.u32 %v5249, 7
        %v5251 = vsub.s32 %v5248, %v5250
        %v5252 = vrot.slane %v5238, %v5251
        %v5253 = vcombine.low %v5220, %v5236
        %v5254 = vcombine.high %v5220, %v5236
        %v5256 = vunpack.c.l.s4 1934713408
        %v5257 = vunpack.c.0.s8 %v5256
        %v5258 = vlaneseq
        %v5259 = vshrl.u32 %v5258, 7
        %v5260 = vsub.s32 %v5257, %v5259
        %v5261 = vrot.slane %v5253, %v5260
        %v5263 = vunpack.c.l.s4 1934713408
        %v5264 = vunpack.c.0.s8 %v5263
        %v5265 = vlaneseq
        %v5266 = vshrl.u32 %v5265, 7
        %v5267 = vsub.s32 %v5264, %v5266
        %v5268 = vrot.slane %v5254, %v5267
        %v5269 = vcombine.high %v5245, 0.0
        %v5270 = vcombine.high %v5252, 0.0
        %v5271 = vcombine.high %v5261, 0.0
        %v5272 = vcombine.high %v5268, 0.0
        %v5273 = vcombine.low %v5177, %v5184
        %v5275 = vunpack.c.l.s4 1983009808
        %v5276 = vunpack.c.0.s8 %v5275
        %v5277 = vlaneseq
        %v5278 = vshrl.u32 %v5277, 7
        %v5279 = vsub.s32 %v5276, %v5278
        %v5280 = vrot.slane %v5273, %v5279
        %v5281 = vcombine.low %v5201, %v5202
        %v5283 = vunpack.c.l.s4 1983009808
        %v5284 = vunpack.c.0.s8 %v5283
        %v5285 = vlaneseq
        %v5286 = vshrl.u32 %v5285, 7
        %v5287 = vsub.s32 %v5284, %v5286
        %v5288 = vrot.slane %v5281, %v5287
        %v5289 = vcombine.low %v5193, %v5200
        %v5291 = vunpack.c.l.s4 1983009808
        %v5292 = vunpack.c.0.s8 %v5291
        %v5293 = vlaneseq
        %v5294 = vshrl.u32 %v5293, 7
        %v5295 = vsub.s32 %v5292, %v5294
        %v5296 = vrot.slane %v5289, %v5295
        %v5297 = vcombine.low %v5203, %v5204
        %v5299 = vunpack.c.l.s4 1983009808
        %v5300 = vunpack.c.0.s8 %v5299
        %v5301 = vlaneseq
        %v5302 = vshrl.u32 %v5301, 7
        %v5303 = vsub.s32 %v5300, %v5302
        %v5304 = vrot.slane %v5297, %v5303
        %v5305 = vcombine.low %v5280, %v5288
        %v5306 = vcombine.high %v5280, %v5288
        %v5308 = vunpack.c.l.s4 1934713408
        %v5309 = vunpack.c.0.s8 %v5308
        %v5310 = vlaneseq
        %v5311 = vshrl.u32 %v5310, 7
        %v5312 = vsub.s32 %v5309, %v5311
        %v5313 = vrot.slane %v5305, %v5312
        %v5315 = vunpack.c.l.s4 1934713408
        %v5316 = vunpack.c.0.s8 %v5315
        %v5317 = vlaneseq
        %v5318 = vshrl.u32 %v5317, 7
        %v5319 = vsub.s32 %v5316, %v5318
        %v5320 = vrot.slane %v5306, %v5319
        %v5321 = vcombine.low %v5296, %v5304
        %v5322 = vcombine.high %v5296, %v5304
        %v5324 = vunpack.c.l.s4 1934713408
        %v5325 = vunpack.c.0.s8 %v5324
        %v5326 = vlaneseq
        %v5327 = vshrl.u32 %v5326, 7
        %v5328 = vsub.s32 %v5325, %v5327
        %v5329 = vrot.slane %v5321, %v5328
        %v5331 = vunpack.c.l.s4 1934713408
        %v5332 = vunpack.c.0.s8 %v5331
        %v5333 = vlaneseq
        %v5334 = vshrl.u32 %v5333, 7
        %v5335 = vsub.s32 %v5332, %v5334
        %v5336 = vrot.slane %v5322, %v5335
        %v5337 = vcombine.low %v5313, %v5329
        %v5338 = vcombine.high %v5313, %v5329
        %v5339 = vcombine.low %v5320, %v5336
        %v5340 = vcombine.high %v5320, %v5336
        %v5341 = vcombine.low %v5245, %v5252
        %v5343 = vunpack.c.l.s4 1983009808
        %v5344 = vunpack.c.0.s8 %v5343
        %v5345 = vlaneseq
        %v5346 = vshrl.u32 %v5345, 7
        %v5347 = vsub.s32 %v5344, %v5346
        %v5348 = vrot.slane %v5341, %v5347
        %v5349 = vcombine.low %v5269, %v5270
        %v5351 = vunpack.c.l.s4 1983009808
        %v5352 = vunpack.c.0.s8 %v5351
        %v5353 = vlaneseq
        %v5354 = vshrl.u32 %v5353, 7
        %v5355 = vsub.s32 %v5352, %v5354
        %v5356 = vrot.slane %v5349, %v5355
        %v5357 = vcombine.low %v5261, %v5268
        %v5359 = vunpack.c.l.s4 1983009808
        %v5360 = vunpack.c.0.s8 %v5359
        %v5361 = vlaneseq
        %v5362 = vshrl.u32 %v5361, 7
        %v5363 = vsub.s32 %v5360, %v5362
        %v5364 = vrot.slane %v5357, %v5363
        %v5365 = vcombine.low %v5271, %v5272
        %v5367 = vunpack.c.l.s4 1983009808
        %v5368 = vunpack.c.0.s8 %v5367
        %v5369 = vlaneseq
        %v5370 = vshrl.u32 %v5369, 7
        %v5371 = vsub.s32 %v5368, %v5370
        %v5372 = vrot.slane %v5365, %v5371
        %v5373 = vcombine.low %v5348, %v5356
        %v5374 = vcombine.high %v5348, %v5356
        %v5376 = vunpack.c.l.s4 1934713408
        %v5377 = vunpack.c.0.s8 %v5376
        %v5378 = vlaneseq
        %v5379 = vshrl.u32 %v5378, 7
        %v5380 = vsub.s32 %v5377, %v5379
        %v5381 = vrot.slane %v5373, %v5380
        %v5383 = vunpack.c.l.s4 1934713408
        %v5384 = vunpack.c.0.s8 %v5383
        %v5385 = vlaneseq
        %v5386 = vshrl.u32 %v5385, 7
        %v5387 = vsub.s32 %v5384, %v5386
        %v5388 = vrot.slane %v5374, %v5387
        %v5389 = vcombine.low %v5364, %v5372
        %v5390 = vcombine.high %v5364, %v5372
        %v5392 = vunpack.c.l.s4 1934713408
        %v5393 = vunpack.c.0.s8 %v5392
        %v5394 = vlaneseq
        %v5395 = vshrl.u32 %v5394, 7
        %v5396 = vsub.s32 %v5393, %v5395
        %v5397 = vrot.slane %v5389, %v5396
        %v5399 = vunpack.c.l.s4 1934713408
        %v5400 = vunpack.c.0.s8 %v5399
        %v5401 = vlaneseq
        %v5402 = vshrl.u32 %v5401, 7
        %v5403 = vsub.s32 %v5400, %v5402
        %v5404 = vrot.slane %v5390, %v5403
        %v5405 = vcombine.low %v5381, %v5397
        %v5406 = vcombine.high %v5381, %v5397
        %v5407 = vcombine.low %v5388, %v5404
        %v5408 = vcombine.high %v5388, %v5404
        %5411 = vrot.lane.b32.xlu0 %v5338, 32
        %v5412 = vpop.permute.xlu0 %5411
        %5413 = vrot.lane.b32.xlu0 %v5406, 32
        %v5414 = vpop.permute.xlu0 %5413
        %5419 = vrot.lane.b32.xlu0 %v5339, 64
        %v5420 = vpop.permute.xlu0 %5419
        %5421 = vrot.lane.b32.xlu0 %v5407, 64
        %v5422 = vpop.permute.xlu0 %5421
        %5427 = vrot.lane.b32.xlu0 %v5340, 96
        %v5428 = vpop.permute.xlu0 %5427
        %5429 = vrot.lane.b32.xlu0 %v5408, 96
        %v5430 = vpop.permute.xlu0 %5429
        %v5433 = vsel %vm1988, %v5337, %v5412
        %v5434 = vsel %vm1988, %v5405, %v5414
        %v5435 = vsel %vm2768, %v5433, %v5420
        %v5436 = vsel %vm2768, %v5434, %v5422
        %v5437 = vsel %vm2771, %v5435, %v5428
        %v5438 = vsel %vm2771, %v5436, %v5430
        %v5439 = vadd.f32 %v2821, %v5437
        %v5440 = vadd.f32 %v2822, %v5438
        %v5441 = vld [vmem:[%s11] sm:$0x1]
        %v5442 = vld [vmem:[%s12] sm:$0x1]
        %5443 = vadd.xlane.f32.xlu0 %v5439
        %v5444 = vpop.xlane.xlu0 %5443
        %5445 = vadd.xlane.f32.xlu0 %v5440
        %v5446 = vpop.xlane.xlu0 %5445
        %v5447 = vmul.f32 %v5444, %v2782
        %v5448 = vmul.f32 %v5446, %v2782
        %v5449 = vmul.f32 %v5439, %v5439
        %v5450 = vmul.f32 %v5440, %v5440
        %5451 = vadd.xlane.f32.xlu0 %v5449
        %v5452 = vpop.xlane.xlu0 %5451
        %5453 = vadd.xlane.f32.xlu0 %v5450
        %v5454 = vpop.xlane.xlu0 %5453
        %v5455 = vmul.f32 %v5452, %v2782
        %v5456 = vmul.f32 %v5454, %v2782
        %v5457 = vmul.f32 %v5447, %v5447
        %v5458 = vmul.f32 %v5448, %v5448
        %v5459 = vsub.f32 %v5455, %v5457
        %v5460 = vsub.f32 %v5456, %v5458
        %v5461 = vmax.f32 %v5459, 0.0
        %v5462 = vmax.f32 %v5460, 0.0
        %v5463 = vsub.f32 %v5439, %v5447
        %v5464 = vsub.f32 %v5440, %v5448
        %v5465 = vadd.f32 %v5461, 1e-05
        %v5466 = vadd.f32 %v5462, 1e-05
        %v5467 = vrsqrt.pop %v5465
        %v5468 = vrsqrt.pop %v5466
        %v5469 = vmul.f32 %v5463, %v5467
        %v5470 = vmul.f32 %v5464, %v5468
        %v5472 = vlaneseq
        %v5473 = vshrl.u32 %v5472, 7
        %v5474 = vsub.s32 0, %v5473
        %v5475 = vrot.slane %v5441, %v5474
        %v5477 = vmul.f32 %v5469, %v5475
        %v5478 = vmul.f32 %v5470, %v5475
        %v5480 = vlaneseq
        %v5481 = vshrl.u32 %v5480, 7
        %v5482 = vsub.s32 0, %v5481
        %v5483 = vrot.slane %v5442, %v5482
        %v5485 = vadd.f32 %v5477, %v5483
        %v5486 = vadd.f32 %v5478, %v5483
        %v5487 = vpack.c.bf16 %v5486, %v5485
        %v5488 = vld [vmem:[#allocation17] sm:$0xff]
        %v5489 = vld [vmem:[#allocation17 + $0x8] sm:$0xff]
        %v5490 = vld [vmem:[#allocation17 + $0x10] sm:$0xff]
        %v5491 = vld [vmem:[#allocation17 + $0x18] sm:$0xff]
        %v5492 = vld [vmem:[#allocation17 + $0x20] sm:$0xff]
        %v5493 = vld [vmem:[#allocation17 + $0x28] sm:$0xff]
        %v5494 = vld [vmem:[#allocation17 + $0x30] sm:$0xff]
        %v5495 = vld [vmem:[#allocation17 + $0x38] sm:$0xff]
        %v5496 = vld [vmem:[#allocation17 + $0x40] sm:$0xff]
        %v5497 = vld [vmem:[#allocation17 + $0x48] sm:$0xff]
        %v5498 = vld [vmem:[#allocation17 + $0x50] sm:$0xff]
        %v5499 = vld [vmem:[#allocation17 + $0x58] sm:$0xff]
        %v5500 = vld [vmem:[#allocation17 + $0x60] sm:$0xff]
        %v5501 = vld [vmem:[#allocation17 + $0x68] sm:$0xff]
        %v5502 = vld [vmem:[#allocation17 + $0x70] sm:$0xff]
        %v5503 = vld [vmem:[#allocation17 + $0x78] sm:$0xff]
        %v5504 = vld [vmem:[%s16] sm:$0x3]
        %v5506 = vlaneseq
        %v5507 = vshrl.u32 %v5506, 7
        %v5508 = vsub.s32 0, %v5507
        %v5509 = vrot.slane %v5504, %v5508
        %v5510 = vlaneseq
        %v5511 = vshrl.u32 %v5510, 7
        %v5512 = vsub.s32 1, %v5511
        %v5513 = vrot.slane %v5504, %v5512
        %v5532 = vunpack.c.l.b16 %v5488
        %v5533 = vunpack.c.h.b16 %v5488
        %v5534 = vunpack.c.l.b16 %v5489
        %v5535 = vunpack.c.h.b16 %v5489
        %v5536 = vunpack.c.l.b16 %v5490
        %v5537 = vunpack.c.h.b16 %v5490
        %v5538 = vunpack.c.l.b16 %v5491
        %v5539 = vunpack.c.h.b16 %v5491
        %v5540 = vunpack.c.l.b16 %v5492
        %v5541 = vunpack.c.h.b16 %v5492
        %v5542 = vunpack.c.l.b16 %v5493
        %v5543 = vunpack.c.h.b16 %v5493
        %v5544 = vunpack.c.l.b16 %v5494
        %v5545 = vunpack.c.h.b16 %v5494
        %v5546 = vunpack.c.l.b16 %v5495
        %v5547 = vunpack.c.h.b16 %v5495
        %v5548 = vunpack.c.l.b16 %v5496
        %v5549 = vunpack.c.h.b16 %v5496
        %v5550 = vunpack.c.l.b16 %v5497
        %v5551 = vunpack.c.h.b16 %v5497
        %v5552 = vunpack.c.l.b16 %v5498
        %v5553 = vunpack.c.h.b16 %v5498
        %v5554 = vunpack.c.l.b16 %v5499
        %v5555 = vunpack.c.h.b16 %v5499
        %v5556 = vunpack.c.l.b16 %v5500
        %v5557 = vunpack.c.h.b16 %v5500
        %v5558 = vunpack.c.l.b16 %v5501
        %v5559 = vunpack.c.h.b16 %v5501
        %v5560 = vunpack.c.l.b16 %v5502
        %v5561 = vunpack.c.h.b16 %v5502
        %v5562 = vunpack.c.l.b16 %v5503
        %v5563 = vunpack.c.h.b16 %v5503
        %v5564 = vpack.c.b16 %v5534, %v5532
        %v5565 = vpack.c.b16 %v5535, %v5533
        %v5566 = vpack.c.b16 %v5538, %v5536
        %v5567 = vpack.c.b16 %v5539, %v5537
        %v5568 = vpack.c.b16 %v5542, %v5540
        %v5569 = vpack.c.b16 %v5543, %v5541
        %v5570 = vpack.c.b16 %v5546, %v5544
        %v5571 = vpack.c.b16 %v5547, %v5545
        %v5572 = vpack.c.b16 %v5550, %v5548
        %v5573 = vpack.c.b16 %v5551, %v5549
        %v5574 = vpack.c.b16 %v5554, %v5552
        %v5575 = vpack.c.b16 %v5555, %v5553
        %v5576 = vpack.c.b16 %v5558, %v5556
        %v5577 = vpack.c.b16 %v5559, %v5557
        %v5578 = vpack.c.b16 %v5562, %v5560
        %v5579 = vpack.c.b16 %v5563, %v5561
        %5596 = vmatprep.subr.bf16.mxu0 %v5565
        %5597 = vmatpush1.bf16.msra.mxu0 %v5564
        %5598 = vmatprep.subr.bf16.mxu0 %v5567
        %5599 = vmatpush1.bf16.msra.mxu0 %v5566
        %5600 = vmatprep.subr.bf16.mxu0 %v5569
        %5601 = vmatpush1.bf16.msra.mxu0 %v5568
        %5602 = vmatprep.subr.bf16.mxu0 %v5571
        %5603 = vmatpush1.bf16.msra.mxu0 %v5570
        %5604 = vmatprep.subr.bf16.mxu0 %v5573
        %5605 = vmatpush1.bf16.msra.mxu0 %v5572
        %5606 = vmatprep.subr.bf16.mxu0 %v5575
        %5607 = vmatpush1.bf16.msra.mxu0 %v5574
        %5608 = vmatprep.subr.bf16.mxu0 %v5577
        %5609 = vmatpush1.bf16.msra.mxu0 %v5576
        %5610 = vmatprep.subr.bf16.mxu0 %v5579
        %5611 = vmatpush1.bf16.msra.mxu0 %v5578
        %5612 = vmatprep.subr.bf16.mxu0 0
        %5613 = vmatpush1.bf16.msra.mxu0 0
        %5614 = vmatprep.subr.bf16.mxu0 0
        %5615 = vmatpush1.bf16.msra.mxu0 0
        %5616 = vmatprep.subr.bf16.mxu0 0
        %5617 = vmatpush1.bf16.msra.mxu0 0
        %5618 = vmatprep.subr.bf16.mxu0 0
        %5619 = vmatpush1.bf16.msra.mxu0 0
        %5620 = vmatprep.subr.bf16.mxu0 0
        %5621 = vmatpush1.bf16.msra.mxu0 0
        %5622 = vmatprep.subr.bf16.mxu0 0
        %5623 = vmatpush1.bf16.msra.mxu0 0
        %5624 = vmatprep.subr.bf16.mxu0 0
        %5625 = vmatpush1.bf16.msra.mxu0 0
        %5626 = vmatprep.subr.bf16.mxu0 0
        %5627 = vmatpush1.bf16.msra.mxu0 0
        %5628 = vmatprep.mubr.bf16.mxu0 0
        %5629 = vmatmul.mubr.bf16.gmra.mrb[0].mxu0 %v5487
        %v5630 = vpop.f32.mrb[0].mxu0
        %v5631 = vadd.f32 %v5509, %v5630
        %v5632 = vpop.f32.mrb[0].mxu0
        %v5633 = vadd.f32 %v5513, %v5632
        %v5634 = vpop.f32.mrb[0].mxu0
        %v5635 = vadd.f32 %v5509, %v5634
        %v5636 = vpop.f32.mrb[0].mxu0
        %v5637 = vadd.f32 %v5513, %v5636
        %5638 = vdwg.mxu0
        %v5639 = vmax.f32 %v5631, 0.0
        %v5640 = vmax.f32 %v5633, 0.0
        %v5641 = vmax.f32 %v5635, 0.0
        %v5642 = vmax.f32 %v5637, 0.0
        %v5643 = vpack.c.bf16 %v5641, %v5639
        %v5644 = vpack.c.bf16 %v5642, %v5640
        %v5645 = vld [vmem:[#allocation19] sm:$0xf]
        %v5646 = vld [vmem:[#allocation19 + $0x4] sm:$0xf]
        %v5647 = vld [vmem:[#allocation19 + $0x8] sm:$0xf]
        %v5648 = vld [vmem:[#allocation19 + $0xc] sm:$0xf]
        %v5649 = vld [vmem:[#allocation19 + $0x10] sm:$0xf]
        %v5650 = vld [vmem:[#allocation19 + $0x14] sm:$0xf]
        %v5651 = vld [vmem:[#allocation19 + $0x18] sm:$0xf]
        %v5652 = vld [vmem:[#allocation19 + $0x1c] sm:$0xf]
        %v5653 = vld [vmem:[#allocation19 + $0x20] sm:$0xf]
        %v5654 = vld [vmem:[#allocation19 + $0x24] sm:$0xf]
        %v5655 = vld [vmem:[#allocation19 + $0x28] sm:$0xf]
        %v5656 = vld [vmem:[#allocation19 + $0x2c] sm:$0xf]
        %v5657 = vld [vmem:[#allocation19 + $0x30] sm:$0xf]
        %v5658 = vld [vmem:[#allocation19 + $0x34] sm:$0xf]
        %v5659 = vld [vmem:[#allocation19 + $0x38] sm:$0xf]
        %v5660 = vld [vmem:[#allocation19 + $0x3c] sm:$0xf]
        %v5661 = vld [vmem:[#allocation19 + $0x40] sm:$0xf]
        %v5662 = vld [vmem:[#allocation19 + $0x44] sm:$0xf]
        %v5663 = vld [vmem:[#allocation19 + $0x48] sm:$0xf]
        %v5664 = vld [vmem:[#allocation19 + $0x4c] sm:$0xf]
        %v5665 = vld [vmem:[#allocation19 + $0x50] sm:$0xf]
        %v5666 = vld [vmem:[#allocation19 + $0x54] sm:$0xf]
        %v5667 = vld [vmem:[#allocation19 + $0x58] sm:$0xf]
        %v5668 = vld [vmem:[#allocation19 + $0x5c] sm:$0xf]
        %v5669 = vld [vmem:[#allocation19 + $0x60] sm:$0xf]
        %v5670 = vld [vmem:[#allocation19 + $0x64] sm:$0xf]
        %v5671 = vld [vmem:[#allocation19 + $0x68] sm:$0xf]
        %v5672 = vld [vmem:[#allocation19 + $0x6c] sm:$0xf]
        %v5673 = vld [vmem:[#allocation19 + $0x70] sm:$0xf]
        %v5674 = vld [vmem:[#allocation19 + $0x74] sm:$0xf]
        %v5675 = vld [vmem:[#allocation19 + $0x78] sm:$0xf]
        %v5676 = vld [vmem:[#allocation19 + $0x7c] sm:$0xf]
        %v5677 = vld [vmem:[%s18] sm:$0x1]
        %v5679 = vlaneseq
        %v5680 = vshrl.u32 %v5679, 7
        %v5681 = vsub.s32 0, %v5680
        %v5682 = vrot.slane %v5677, %v5681
        %v5716 = vunpack.c.l.b16 %v5645
        %v5717 = vunpack.c.l.b16 %v5646
        %v5718 = vunpack.c.l.b16 %v5647
        %v5719 = vunpack.c.l.b16 %v5648
        %v5720 = vunpack.c.l.b16 %v5649
        %v5721 = vunpack.c.l.b16 %v5650
        %v5722 = vunpack.c.l.b16 %v5651
        %v5723 = vunpack.c.l.b16 %v5652
        %v5724 = vunpack.c.l.b16 %v5653
        %v5725 = vunpack.c.l.b16 %v5654
        %v5726 = vunpack.c.l.b16 %v5655
        %v5727 = vunpack.c.l.b16 %v5656
        %v5728 = vunpack.c.l.b16 %v5657
        %v5729 = vunpack.c.l.b16 %v5658
        %v5730 = vunpack.c.l.b16 %v5659
        %v5731 = vunpack.c.l.b16 %v5660
        %v5732 = vunpack.c.l.b16 %v5661
        %v5733 = vunpack.c.l.b16 %v5662
        %v5734 = vunpack.c.l.b16 %v5663
        %v5735 = vunpack.c.l.b16 %v5664
        %v5736 = vunpack.c.l.b16 %v5665
        %v5737 = vunpack.c.l.b16 %v5666
        %v5738 = vunpack.c.l.b16 %v5667
        %v5739 = vunpack.c.l.b16 %v5668
        %v5740 = vunpack.c.l.b16 %v5669
        %v5741 = vunpack.c.l.b16 %v5670
        %v5742 = vunpack.c.l.b16 %v5671
        %v5743 = vunpack.c.l.b16 %v5672
        %v5744 = vunpack.c.l.b16 %v5673
        %v5745 = vunpack.c.l.b16 %v5674
        %v5746 = vunpack.c.l.b16 %v5675
        %v5747 = vunpack.c.l.b16 %v5676
        %v5748 = vpack.c.b16 %v5717, %v5716
        %v5749 = vpack.c.b16 %v5719, %v5718
        %v5750 = vpack.c.b16 %v5721, %v5720
        %v5751 = vpack.c.b16 %v5723, %v5722
        %v5752 = vpack.c.b16 %v5725, %v5724
        %v5753 = vpack.c.b16 %v5727, %v5726
        %v5754 = vpack.c.b16 %v5729, %v5728
        %v5755 = vpack.c.b16 %v5731, %v5730
        %v5756 = vpack.c.b16 %v5733, %v5732
        %v5757 = vpack.c.b16 %v5735, %v5734
        %v5758 = vpack.c.b16 %v5737, %v5736
        %v5759 = vpack.c.b16 %v5739, %v5738
        %v5760 = vpack.c.b16 %v5741, %v5740
        %v5761 = vpack.c.b16 %v5743, %v5742
        %v5762 = vpack.c.b16 %v5745, %v5744
        %v5763 = vpack.c.b16 %v5747, %v5746
        %5780 = vmatprep.subr.bf16.mxu0 0
        %5781 = vmatpush1.bf16.msra.mxu0 %v5748
        %5782 = vmatprep.subr.bf16.mxu0 0
        %5783 = vmatpush1.bf16.msra.mxu0 %v5749
        %5784 = vmatprep.subr.bf16.mxu0 0
        %5785 = vmatpush1.bf16.msra.mxu0 %v5750
        %5786 = vmatprep.subr.bf16.mxu0 0
        %5787 = vmatpush1.bf16.msra.mxu0 %v5751
        %5788 = vmatprep.subr.bf16.mxu0 0
        %5789 = vmatpush1.bf16.msra.mxu0 %v5752
        %5790 = vmatprep.subr.bf16.mxu0 0
        %5791 = vmatpush1.bf16.msra.mxu0 %v5753
        %5792 = vmatprep.subr.bf16.mxu0 0
        %5793 = vmatpush1.bf16.msra.mxu0 %v5754
        %5794 = vmatprep.subr.bf16.mxu0 0
        %5795 = vmatpush1.bf16.msra.mxu0 %v5755
        %5796 = vmatprep.subr.bf16.mxu0 0
        %5797 = vmatpush1.bf16.msra.mxu0 %v5756
        %5798 = vmatprep.subr.bf16.mxu0 0
        %5799 = vmatpush1.bf16.msra.mxu0 %v5757
        %5800 = vmatprep.subr.bf16.mxu0 0
        %5801 = vmatpush1.bf16.msra.mxu0 %v5758
        %5802 = vmatprep.subr.bf16.mxu0 0
        %5803 = vmatpush1.bf16.msra.mxu0 %v5759
        %5804 = vmatprep.subr.bf16.mxu0 0
        %5805 = vmatpush1.bf16.msra.mxu0 %v5760
        %5806 = vmatprep.subr.bf16.mxu0 0
        %5807 = vmatpush1.bf16.msra.mxu0 %v5761
        %5808 = vmatprep.subr.bf16.mxu0 0
        %5809 = vmatpush1.bf16.msra.mxu0 %v5762
        %5810 = vmatprep.subr.bf16.mxu0 0
        %5811 = vmatpush1.bf16.msra.mxu0 %v5763
        %5812 = vmatprep.mubr.bf16.mxu0 %v5644
        %5813 = vmatmul.mubr.bf16.gmra.mrb[0].mxu0 %v5643
        %v5814 = vpop.f32.mrb[0].mxu0
        %v5815 = vadd.f32 %v5682, %v5814
        %v5816 = vpop.f32.mrb[0].mxu0
        %v5817 = vpop.f32.mrb[0].mxu0
        %v5818 = vadd.f32 %v5682, %v5817
        %v5819 = vpop.f32.mrb[0].mxu0
        %5820 = vdwg.mxu0
        %v5821 = vadd.f32 %v5485, %v5815
        %v5822 = vadd.f32 %v5486, %v5818
        %v5823 = vld [vmem:[%s13] sm:$0x1]
        %v5824 = vld [vmem:[%s14] sm:$0x1]
        %5825 = vadd.xlane.f32.xlu0 %v5821
        %v5826 = vpop.xlane.xlu0 %5825
        %5827 = vadd.xlane.f32.xlu0 %v5822
        %v5828 = vpop.xlane.xlu0 %5827
        %v5829 = vmul.f32 %v5826, %v2782
        %v5830 = vmul.f32 %v5828, %v2782
        %v5831 = vmul.f32 %v5821, %v5821
        %v5832 = vmul.f32 %v5822, %v5822
        %5833 = vadd.xlane.f32.xlu0 %v5831
        %v5834 = vpop.xlane.xlu0 %5833
        %5835 = vadd.xlane.f32.xlu0 %v5832
        %v5836 = vpop.xlane.xlu0 %5835
        %v5837 = vmul.f32 %v5834, %v2782
        %v5838 = vmul.f32 %v5836, %v2782
        %v5839 = vmul.f32 %v5829, %v5829
        %v5840 = vmul.f32 %v5830, %v5830
        %v5841 = vsub.f32 %v5837, %v5839
        %v5842 = vsub.f32 %v5838, %v5840
        %v5843 = vmax.f32 %v5841, 0.0
        %v5844 = vmax.f32 %v5842, 0.0
        %v5845 = vsub.f32 %v5821, %v5829
        %v5846 = vsub.f32 %v5822, %v5830
        %v5847 = vadd.f32 %v5843, 1e-05
        %v5848 = vadd.f32 %v5844, 1e-05
        %v5849 = vrsqrt.pop %v5847
        %v5850 = vrsqrt.pop %v5848
        %v5851 = vmul.f32 %v5845, %v5849
        %v5852 = vmul.f32 %v5846, %v5850
        %v5854 = vlaneseq
        %v5855 = vshrl.u32 %v5854, 7
        %v5856 = vsub.s32 0, %v5855
        %v5857 = vrot.slane %v5823, %v5856
        %v5859 = vmul.f32 %v5851, %v5857
        %v5860 = vmul.f32 %v5852, %v5857
        %v5862 = vlaneseq
        %v5863 = vshrl.u32 %v5862, 7
        %v5864 = vsub.s32 0, %v5863
        %v5865 = vrot.slane %v5824, %v5864
        %v5867 = vadd.f32 %v5859, %v5865
        %v5868 = vadd.f32 %v5860, %v5865
        %5869 = vst [vmem:[%s838] sm:$0xff] %v5867
        %5870 = vst [vmem:[%s838 + $0x8] sm:$0xff] %v5868
        %s5871 = sand.u32 %s472, 1
        %s5872 = scalar_lea.sflag [#allocation4], %s5871
        %s5873 = sand.u32 %s472, 1
        %s5874 = smul.addr %s5873, 16
        %s5875 = scalar_lea.vmem [#allocation20], %s5874
        // Predicated region
        $region141: #{tpu_custom_call.1} parent=95 // pred_check
          %p5876 = pneg %p482
        $region142: #{tpu_custom_call.1} parent=95 // pred_check_branch
          %5878 = sbr.rel (%p5876) target = $region144
        $region143: #{tpu_custom_call.1} parent=95 // pred_region
          %s5880 = ssub.s32 256, 256
          %5881 = vsyncadd %s5872, %s5880
          %s5882 = smul.addr %s45, 2
          %s5883 = smul.addr %s5882, 128
          %s5884 = scalar_lea.hbm %s19, %s5883
          %s5885 = sshll.u32 %s5875, 4
          %s5886 = int_to_ptr.vmem [resolvable:$true] %s5885
          %5891 = dma.vmem_to_hbm [thread:$0]  %s5886, 256, %s5884, %s5872, 128, 128, 8
        $region144: #{tpu_custom_call.1} parent=95 // pred_fallthru
          _
      $region96: #{tpu_custom_call.1} parent=5 // pred_fallthru
        _
      %p5892 = scmp.le.s32.totalorder 2, %s40
      // Predicated region
      $region145: #{tpu_custom_call.1} parent=5 // pred_check
        %p5893 = pneg %p5892
      $region146: #{tpu_custom_call.1} parent=5 // pred_check_branch
        %5895 = sbr.rel (%p5893) target = $region148
      $region147: #{tpu_custom_call.1} parent=5 // pred_region
        %s5896 = ssub.s32 %s40, 2
        // Predicated region
        $region149: #{tpu_custom_call.1} parent=147 // pred_check
          %p5897 = pneg %p488
        $region150: #{tpu_custom_call.1} parent=147 // pred_check_branch
          %5899 = sbr.rel (%p5897) target = $region152
        $region151: #{tpu_custom_call.1} parent=147 // pred_region
          %s5900 = sand.u32 %s473, 1
          %s5901 = scalar_lea.sflag [#allocation4], %s5900
          %s5902 = sand.u32 %s473, 1
          %s5903 = smul.addr %s5902, 16
          %s5904 = scalar_lea.vmem [#allocation20], %s5903
          %5905 = dma.done %s5901, 256
        $region152: #{tpu_custom_call.1} parent=147 // pred_fallthru
          _
      $region148: #{tpu_custom_call.1} parent=5 // pred_fallthru
        _
    $region6: #{tpu_custom_call.1} parent=1 // loop_footer
      %s44 = sadd.s32 1, %s40
    $region7: #{tpu_custom_call.1} parent=1 // loop_footer_branch
      %39 = sbr.rel target = $region3
    $region8: #{tpu_custom_call.1} parent=1 // loop_exit
      _
    %5906 = vsyncpa [#allocation3], 1
    %s5907 = scalar_lea.sflag [#allocation3], 1
    %5908 = vsyncpa %s5907, 1
    %5909 = vsyncpa [#allocation6], 1
    %s5910 = scalar_lea.sflag [#allocation6], 1
    %5911 = vsyncpa %s5910, 1
    %5912 = vsyncpa [#allocation9], 1
    %s5913 = scalar_lea.sflag [#allocation9], 1
    %5914 = vsyncpa %s5913, 1
    %5915 = vsyncpa [#allocation12], 1
    %5916 = vsyncpa [#allocation15], 1
    %5917 = vsyncpa [#allocation18], 1
    %5918 = vsyncpa [#allocation4], 1
    %s5919 = scalar_lea.sflag [#allocation4], 1
    %5920 = vsyncpa %s5919, 1

</llo_original>
